<compile_context>
chip_gen: v6e
topology: v6e:2x2x1
jax: 0.10.0
libtpu: 0.0.40
codegen_flags: <defaults>
</compile_context>

<pallas_src>
import functools

import jax
import jax.numpy as jnp
import numpy as np
from jax.experimental import pallas as pl
from jax.experimental.pallas import tpu as pltpu


def _round_up(x, m):
    return (x + m - 1) // m * m


# ---------------------------------------------------------------------------
# Pallas kernel: one grid step == one batch element
# ---------------------------------------------------------------------------
def _decoder_layer_kernel(
    # scalar prefetch (SMEM)
    dec_len_ref, enc_len_ref,
    # tensor inputs
    dec_ref, enc_ref,                              # (1,Tq,D), (1,Tk,D) bf16
    w_qkv_sa_ref, wo_sa_ref,                       # self-attn weights  (bf16)
    wq_ea_ref, w_kv_ea_ref, wo_ea_ref,             # enc-attn weights   (bf16)
    w1_ref, w2_ref,                                # FFN (1x1 conv) wts (bf16)
    vec_ref,                                       # (16, L) f32 biases + LN
    # outputs: out_ref [, sattn_ref, eattn_ref]
    *out_refs,
    num_heads, dim_key, dim_value):
    H, dk, dv = num_heads, dim_key, dim_value
    Hdk, Hdv = H * dk, H * dv
    Tq = dec_ref.shape[1]
    Tk = enc_ref.shape[1]
    D = dec_ref.shape[2]
    Dh = w1_ref.shape[1]                           # already lane-padded

    out_ref = out_refs[0]
    write_attn = len(out_refs) == 3

    b = pl.program_id(0)
    dec_len = dec_len_ref[b]
    enc_len = enc_len_ref[b]

    # ---- bias / LayerNorm block: one row per vector, full-lane row reads ---
    vecs = vec_ref[...]                            # (16, L) f32
    sa_bq, sa_bk, sa_bv = vecs[0, :Hdk], vecs[1, :Hdk], vecs[2, :Hdv]
    sa_bo, sa_g, sa_be = vecs[3, :D], vecs[4, :D], vecs[5, :D]
    ea_bq, ea_bk, ea_bv = vecs[6, :Hdk], vecs[7, :Hdk], vecs[8, :Hdv]
    ea_bo, ea_g, ea_be = vecs[9, :D], vecs[10, :D], vecs[11, :D]
    ff_b1, ff_b2 = vecs[12, :Dh], vecs[13, :D]
    ff_g, ff_be = vecs[14, :D], vecs[15, :D]

    x_bf = dec_ref[0]                              # (Tq, D) bf16
    enc_bf = enc_ref[0]                            # (Tk, D) bf16
    x_f32 = x_bf.astype(jnp.float32)

    # ---- masks built in-kernel from lengths (no O(T^2) HBM mask traffic) ---
    # NEG is large-finite (not -inf) so fully-masked rows never produce NaN.
    NEG = -1e30
    q_pos = jax.lax.broadcasted_iota(jnp.int32, (Tq, 1), 0)
    npm = (q_pos < dec_len).astype(jnp.float32)                    # (Tq, 1)
    row = jax.lax.broadcasted_iota(jnp.int32, (Tq, Tq), 0)
    col = jax.lax.broadcasted_iota(jnp.int32, (Tq, Tq), 1)
    self_neg = jnp.where((col <= row) & (col < dec_len), 0.0, NEG)  # (Tq,Tq)
    ecol = jax.lax.broadcasted_iota(jnp.int32, (Tq, Tk), 1)
    enc_neg = jnp.where(ecol < enc_len, 0.0, NEG)                   # (Tq,Tk)

    def layer_norm(y, gamma, beta, eps=1e-5):      # f32 statistics
        mean = jnp.mean(y, axis=-1, keepdims=True)
        var = jnp.mean(jnp.square(y - mean), axis=-1, keepdims=True)
        return (y - mean) * jax.lax.rsqrt(var + eps) * gamma + beta

    def split_heads(p, d):
        # (T, H*d) f32 -> (H, T, d) bf16: one reshape + one transpose.
        return jnp.transpose(p.reshape(p.shape[0], H, d),
                             (1, 0, 2)).astype(jnp.bfloat16)

    def attend(q, k, v, mask_neg, wo_ref, bo, residual, gamma, beta):
        """Head-batched attention + single fused out-proj + add&norm."""
        tq = q.shape[0]
        q3, k3, v3 = split_heads(q, dk), split_heads(k, dk), split_heads(v, dv)
        scores = jnp.einsum('hqd,hkd->hqk', q3, k3,
                            preferred_element_type=jnp.float32)
        scores = scores + mask_neg                 # (Tq,Tk) broadcasts over h
        m = jnp.max(scores, axis=-1, keepdims=True)
        e = jnp.exp(scores - m)                                     # EUP
        attn = e * pl.reciprocal(jnp.sum(e, axis=-1, keepdims=True),
                                 approx=True)                       # EUP recip
        ctx = jnp.einsum('hqk,hkd->hqd', attn.astype(jnp.bfloat16), v3,
                         preferred_element_type=jnp.float32)        # (H,Tq,dv)
        # merge heads -> ONE (Tq, H*dv) @ (H*dv, D) output projection.
        ctx2 = jnp.transpose(ctx, (1, 0, 2)).reshape(tq, Hdv).astype(jnp.bfloat16)
        out = jnp.dot(ctx2, wo_ref[...],
                      preferred_element_type=jnp.float32) + bo
        return layer_norm(out + residual, gamma, beta), attn

    # ---------------- self attention ----------------
    qkv = jnp.dot(x_bf, w_qkv_sa_ref[...], preferred_element_type=jnp.float32)
    q = qkv[:, :Hdk] + sa_bq        # 1/sqrt(dk) already folded into Wq / bq
    k = qkv[:, Hdk:2 * Hdk] + sa_bk
    v = qkv[:, 2 * Hdk:2 * Hdk + Hdv] + sa_bv
    out1, sattn = attend(q, k, v, self_neg, wo_sa_ref, sa_bo,
                         x_f32, sa_g, sa_be)
    out1 = out1 * npm

    # ---------------- encoder-decoder attention ----------------
    q = jnp.dot(out1.astype(jnp.bfloat16), wq_ea_ref[...],
                preferred_element_type=jnp.float32) + ea_bq
    kv = jnp.dot(enc_bf, w_kv_ea_ref[...], preferred_element_type=jnp.float32)
    k = kv[:, :Hdk] + ea_bk
    v = kv[:, Hdk:Hdk + Hdv] + ea_bv
    out2, eattn = attend(q, k, v, enc_neg, wo_ea_ref, ea_bo,
                         out1, ea_g, ea_be)
    out2 = out2 * npm

    # ---------------- position-wise FFN (1x1 convs == linear) ---------------
    hid = jnp.maximum(
        jnp.dot(out2.astype(jnp.bfloat16), w1_ref[...],
                preferred_element_type=jnp.float32) + ff_b1, 0.0)
    ffn = jnp.dot(hid.astype(jnp.bfloat16), w2_ref[...],
                  preferred_element_type=jnp.float32) + ff_b2
    ffn = layer_norm(ffn + out2, ff_g, ff_be) * npm

    out_ref[0] = ffn.astype(out_ref.dtype)
    if write_attn:
        # final (H, B, Tq, Tk) layout produced directly via out BlockSpec;
        # bf16 halves the dominant O(H*B*T^2) HBM writeback.
        out_refs[1][...] = jnp.expand_dims(sattn, 1).astype(out_refs[1].dtype)
        out_refs[2][...] = jnp.expand_dims(eattn, 1).astype(out_refs[2].dtype)


# ---------------------------------------------------------------------------
# wrapper
# ---------------------------------------------------------------------------
def _vmem_limit_bytes():
    cap = 128 * 1024 * 1024
    try:
        cap = int(getattr(pltpu.get_tpu_info(), "vmem_capacity_bytes", cap))
    except Exception:  # fall back if the query is unsupported on this runtime
        pass
    # ~75% of physical VMEM (v7x ~48 MiB, v5e/v6e 96 MiB) leaves compiler room.
    return int(min(cap * 3 // 4, 96 * 1024 * 1024))


def decoder_layer(decoder_input, encoder_output, dec_lens, enc_lens, params,
                  *, num_heads, dim_key, dim_value, return_attn=True):
    """DecoderLayer forward.

    dec_lens / enc_lens: (B,) int32 valid (non-pad) lengths per batch element.
    The module's masks (causal + key-padding self-attn mask, encoder key
    padding mask, multiplicative non-pad mask) are generated in-kernel from
    these lengths.
    """
    # TODO(synk): arbitrary (non length-derived) attention-mask tensors are not
    # supported by this port; they would require shipping O(B*T^2) masks.
    B, Tq, D = decoder_input.shape
    _, Tk, _ = encoder_output.shape
    H, dk, dv = num_heads, dim_key, dim_value
    Hdk, Hdv = H * dk, H * dv

    (sa_wq, sa_bq, sa_wk, sa_bk, sa_wv, sa_bv, sa_wo, sa_bo, sa_g, sa_be,
     ea_wq, ea_bq, ea_wk, ea_bk, ea_wv, ea_bv, ea_wo, ea_bo, ea_g, ea_be,
     ff_w1, ff_b1, ff_w2, ff_b2, ff_g, ff_be) = params

    inv_t = 1.0 / float(np.power(dk, 0.5))   # fold temperature into Q proj
    bf = jnp.bfloat16

    # lane-pad the FFN hidden dim (zero padding is inert: relu(0)=0, 0-rows of
    # w2 contribute nothing).
    Dh = ff_w1.shape[1]
    Dh_pad = _round_up(Dh, 128)
    if Dh_pad != Dh:
        ff_w1 = jnp.pad(ff_w1, ((0, 0), (0, Dh_pad - Dh)))
        ff_b1 = jnp.pad(ff_b1, ((0, 0), (0, Dh_pad - Dh)))
        ff_w2 = jnp.pad(ff_w2, ((0, Dh_pad - Dh), (0, 0)))

    w_qkv_sa = jnp.concatenate([sa_wq * inv_t, sa_wk, sa_wv], axis=1).astype(bf)
    wo_sa = sa_wo.astype(bf)                       # (H*dv, D) single out-proj
    wq_ea = (ea_wq * inv_t).astype(bf)
    w_kv_ea = jnp.concatenate([ea_wk, ea_wv], axis=1).astype(bf)
    wo_ea = ea_wo.astype(bf)
    w1 = ff_w1.astype(bf)
    w2 = ff_w2.astype(bf)

    # 16 small bias / LayerNorm vectors as one (16, L) f32 block: one row per
    # vector, each zero-padded to L lanes (rows read from lane offset 0 only).
    L = _round_up(max(Hdk, Hdv, D, Dh_pad), 128)
    rows = [sa_bq * inv_t, sa_bk, sa_bv, sa_bo, sa_g, sa_be,
            ea_bq * inv_t, ea_bk, ea_bv, ea_bo, ea_g, ea_be,
            ff_b1, ff_b2, ff_g, ff_be]
    vec = jnp.concatenate(
        [jnp.pad(r.reshape(1, -1).astype(jnp.float32),
                 ((0, 0), (0, L - r.shape[-1]))) for r in rows], axis=0)

    dec_bf = decoder_input.astype(bf)
    enc_bf = encoder_output.astype(bf)

    def _wspec(shape):
        # grid-invariant weight: constant index_map + single-buffered (no point
        # double-buffering a block that never changes across grid steps).
        nd = len(shape)
        return pl.BlockSpec(shape, lambda b, dl, el, _nd=nd: (0,) * _nd,
                            pipeline_mode=pl.Buffered(buffer_count=1))

    in_specs = (
        pl.BlockSpec((1, Tq, D), lambda b, dl, el: (b, 0, 0)),
        pl.BlockSpec((1, Tk, D), lambda b, dl, el: (b, 0, 0)),
        _wspec(w_qkv_sa.shape), _wspec(wo_sa.shape),
        _wspec(wq_ea.shape), _wspec(w_kv_ea.shape), _wspec(wo_ea.shape),
        _wspec(w1.shape), _wspec(w2.shape), _wspec(vec.shape),
    )

    out_specs = [pl.BlockSpec((1, Tq, D), lambda b, dl, el: (b, 0, 0))]
    out_shape = [jax.ShapeDtypeStruct((B, Tq, D), jnp.float32)]
    if return_attn:
        out_specs += [
            pl.BlockSpec((H, 1, Tq, Tq), lambda b, dl, el: (0, b, 0, 0)),
            pl.BlockSpec((H, 1, Tq, Tk), lambda b, dl, el: (0, b, 0, 0))]
        out_shape += [jax.ShapeDtypeStruct((H, B, Tq, Tq), jnp.bfloat16),
                      jax.ShapeDtypeStruct((H, B, Tq, Tk), jnp.bfloat16)]

    grid_spec = pltpu.PrefetchScalarGridSpec(
        num_scalar_prefetch=2,
        grid=(B,),
        in_specs=in_specs,
        out_specs=tuple(out_specs),
    )

    kernel = functools.partial(_decoder_layer_kernel, num_heads=H,
                               dim_key=dk, dim_value=dv)

    # advisory cost hint for XLA scheduling around the custom call
    flops = 2 * B * (
        Tq * D * (2 * Hdk + Hdv)                  # self-attn fused QKV proj
        + H * Tq * Tq * (dk + dv)                 # self-attn scores + ctx
        + Tq * Hdv * D                            # self-attn out proj
        + Tq * D * Hdk + Tk * D * (Hdk + Hdv)     # enc-attn Q / KV proj
        + H * Tq * Tk * (dk + dv)                 # enc-attn scores + ctx
        + Tq * Hdv * D                            # enc-attn out proj
        + 2 * Tq * D * Dh_pad)                    # FFN
    transcendentals = B * H * Tq * (Tq + Tk)
    bytes_accessed = int(
        dec_bf.size * 2 + enc_bf.size * 2 + vec.size * 4
        + 2 * (w_qkv_sa.size + wo_sa.size + wq_ea.size + w_kv_ea.size
               + wo_ea.size + w1.size + w2.size)
        + B * Tq * D * 4
        + (2 * (H * B * Tq * Tq + H * B * Tq * Tk) if return_attn else 0))

    res = pl.pallas_call(
        kernel,
        grid_spec=grid_spec,
        out_shape=tuple(out_shape),
        compiler_params=pltpu.CompilerParams(
            dimension_semantics=("parallel",),      # batch steps are independent
            vmem_limit_bytes=_vmem_limit_bytes()),
        cost_estimate=pl.CostEstimate(flops=flops,
                                      transcendentals=transcendentals,
                                      bytes_accessed=bytes_accessed),
    )(dec_lens, enc_lens, dec_bf, enc_bf,
      w_qkv_sa, wo_sa, wq_ea, w_kv_ea, wo_ea, w1, w2, vec)

    if return_attn:
        out, sattn, eattn = res
        # free reshape (no transpose) to PyTorch's (H*B, Tq, Tk) head-major view
        return out, sattn.reshape(H * B, Tq, Tq), eattn.reshape(H * B, Tq, Tk)
    (out,) = res
    return out


# ---------------------------------------------------------------------------
# deterministic parameter construction (shapes follow the nn.Module __init__)
# ---------------------------------------------------------------------------
def _mha_params(keys, D, H, dk, dv):
    std_qk = float(np.sqrt(2.0 / (D + dk)))
    std_v = float(np.sqrt(2.0 / (D + dv)))
    std_o = float(np.sqrt(2.0 / (H * dv + D)))  # xavier_normal_
    wq = std_qk * jax.random.normal(keys[0], (D, H * dk), jnp.float32)
    bq = 0.01 * jax.random.normal(keys[1], (1, H * dk), jnp.float32)
    wk = std_qk * jax.random.normal(keys[2], (D, H * dk), jnp.float32)
    bk = 0.01 * jax.random.normal(keys[3], (1, H * dk), jnp.float32)
    wv = std_v * jax.random.normal(keys[4], (D, H * dv), jnp.float32)
    bv = 0.01 * jax.random.normal(keys[5], (1, H * dv), jnp.float32)
    wo = std_o * jax.random.normal(keys[6], (H * dv, D), jnp.float32)
    bo = 0.01 * jax.random.normal(keys[7], (1, D), jnp.float32)
    gamma = jnp.ones((1, D), jnp.float32)   # LayerNorm weight
    beta = jnp.zeros((1, D), jnp.float32)   # LayerNorm bias
    return (wq, bq, wk, bk, wv, bv, wo, bo, gamma, beta)


def _ffn_params(keys, D, Dh):
    # conv_1: Conv1d(D, Dh, 1) -> weight equivalent (D, Dh); conv_2: (Dh, D)
    w1 = (1.0 / np.sqrt(D)) * jax.random.normal(keys[0], (D, Dh), jnp.float32)
    b1 = 0.01 * jax.random.normal(keys[1], (1, Dh), jnp.float32)
    w2 = (1.0 / np.sqrt(Dh)) * jax.random.normal(keys[2], (Dh, D), jnp.float32)
    b2 = 0.01 * jax.random.normal(keys[3], (1, D), jnp.float32)
    gamma = jnp.ones((1, D), jnp.float32)
    beta = jnp.zeros((1, D), jnp.float32)
    return (w1, b1, w2, b2, gamma, beta)


if __name__ == "__main__":
    # small demo shapes consistent with the module's forward.
    # NOTE: real deployments should use lane-aligned dims (multiples of 128).
    B, Tq, Tk = 2, 8, 16
    D, Dh, H, dk, dv = 32, 64, 2, 16, 16

    key = jax.random.PRNGKey(0)
    k_in, k_enc, k_p1, k_p2, k_p3 = jax.random.split(key, 5)

    decoder_input = jax.random.normal(k_in, (B, Tq, D), jnp.float32)
    encoder_output = jax.random.normal(k_enc, (B, Tk, D), jnp.float32)

    # valid lengths: last two decoder positions are padding (== the demo's
    # non_pad_mask); all encoder positions valid (no dec-enc masking).
    dec_lens = jnp.full((B,), Tq - 2, dtype=jnp.int32)
    enc_lens = jnp.full((B,), Tk, dtype=jnp.int32)

    sa_params = _mha_params(jax.random.split(k_p1, 8), D, H, dk, dv)
    ea_params = _mha_params(jax.random.split(k_p2, 8), D, H, dk, dv)
    ff_params = _ffn_params(jax.random.split(k_p3, 4), D, Dh)
    params = sa_params + ea_params + ff_params

    out, self_attn, enc_attn = decoder_layer(
        decoder_input, encoder_output, dec_lens, enc_lens, params,
        num_heads=H, dim_key=dk, dim_value=dv)
    jax.block_until_ready((out, self_attn, enc_attn))
    assert out.shape == (B, Tq, D)
    assert self_attn.shape == (H * B, Tq, Tq)
    assert enc_attn.shape == (H * B, Tq, Tk)
    assert bool(jnp.all(jnp.isfinite(out)))

    # fast path: skip the O(H*B*T^2) attention-map writeback entirely
    out_only = decoder_layer(
        decoder_input, encoder_output, dec_lens, enc_lens, params,
        num_heads=H, dim_key=dk, dim_value=dv, return_attn=False)
    jax.block_until_ready(out_only)
    assert out_only.shape == (B, Tq, D)
    assert bool(jnp.allclose(out, out_only, atol=1e-3, rtol=1e-3))

    print("KERNEL_OK")
</pallas_src>

<mosaic_0001>
module attributes {stable_mosaic.version = 11 : i64} {
  func.func @_decoder_layer_kernel(%arg0: i32, %arg1: memref<2xi32, #tpu.memory_space<smem>>, %arg2: memref<2xi32, #tpu.memory_space<smem>>, %arg3: memref<1x8x32xbf16, #tpu.memory_space<vmem>>, %arg4: memref<1x16x32xbf16, #tpu.memory_space<vmem>>, %arg5: memref<32x96xbf16, #tpu.memory_space<vmem>>, %arg6: memref<32x32xbf16, #tpu.memory_space<vmem>>, %arg7: memref<32x32xbf16, #tpu.memory_space<vmem>>, %arg8: memref<32x64xbf16, #tpu.memory_space<vmem>>, %arg9: memref<32x32xbf16, #tpu.memory_space<vmem>>, %arg10: memref<32x128xbf16, #tpu.memory_space<vmem>>, %arg11: memref<128x32xbf16, #tpu.memory_space<vmem>>, %arg12: memref<16x128xf32, #tpu.memory_space<vmem>>, %arg13: memref<1x8x32xf32, #tpu.memory_space<vmem>>, %arg14: memref<2x1x8x8xbf16, #tpu.memory_space<vmem>>, %arg15: memref<2x1x8x16xbf16, #tpu.memory_space<vmem>>) attributes {dimension_semantics = [#tpu.dimension_semantics<parallel>], iteration_bounds = array<i64: 2>, scalar_prefetch = 2 : i64, scratch_operands = 0 : i64, tpu.core_type = #tpu.core_type<tc>, window_params = [{transform_indices = @transform_0, window_bounds = array<i64: 1, 8, 32>}, {transform_indices = @transform_1, window_bounds = array<i64: 1, 16, 32>}, {pipeline_mode = #tpu.pipeline_mode<synchronous>, transform_indices = @transform_2, window_bounds = array<i64: 32, 96>}, {pipeline_mode = #tpu.pipeline_mode<synchronous>, transform_indices = @transform_3, window_bounds = array<i64: 32, 32>}, {pipeline_mode = #tpu.pipeline_mode<synchronous>, transform_indices = @transform_4, window_bounds = array<i64: 32, 32>}, {pipeline_mode = #tpu.pipeline_mode<synchronous>, transform_indices = @transform_5, window_bounds = array<i64: 32, 64>}, {pipeline_mode = #tpu.pipeline_mode<synchronous>, transform_indices = @transform_6, window_bounds = array<i64: 32, 32>}, {pipeline_mode = #tpu.pipeline_mode<synchronous>, transform_indices = @transform_7, window_bounds = array<i64: 32, 128>}, {pipeline_mode = #tpu.pipeline_mode<synchronous>, transform_indices = @transform_8, window_bounds = array<i64: 128, 32>}, {pipeline_mode = #tpu.pipeline_mode<synchronous>, transform_indices = @transform_9, window_bounds = array<i64: 16, 128>}, {transform_indices = @transform_10, window_bounds = array<i64: 1, 8, 32>}, {transform_indices = @transform_11, window_bounds = array<i64: 2, 1, 8, 8>}, {transform_indices = @transform_12, window_bounds = array<i64: 2, 1, 8, 16>}]} {
    %0 = arith.index_cast %arg0 : i32 to index
    %1 = memref.load %arg1[%0] : memref<2xi32, #tpu.memory_space<smem>>
    %2 = arith.index_cast %arg0 : i32 to index
    %3 = memref.load %arg2[%2] : memref<2xi32, #tpu.memory_space<smem>>
    %c0 = arith.constant 0 : index
    %c0_0 = arith.constant 0 : index
    %4 = vector.load %arg12[%c0, %c0_0] : memref<16x128xf32, #tpu.memory_space<vmem>>, vector<16x128xf32>
    %5 = vector.extract_strided_slice %4 {offsets = [0, 0], sizes = [1, 32], strides = [1, 1]} : vector<16x128xf32> to vector<1x32xf32>
    %6 = vector.shape_cast %5 : vector<1x32xf32> to vector<32xf32>
    %7 = vector.extract_strided_slice %4 {offsets = [1, 0], sizes = [1, 32], strides = [1, 1]} : vector<16x128xf32> to vector<1x32xf32>
    %8 = vector.shape_cast %7 : vector<1x32xf32> to vector<32xf32>
    %9 = vector.extract_strided_slice %4 {offsets = [2, 0], sizes = [1, 32], strides = [1, 1]} : vector<16x128xf32> to vector<1x32xf32>
    %10 = vector.shape_cast %9 : vector<1x32xf32> to vector<32xf32>
    %11 = vector.extract_strided_slice %4 {offsets = [3, 0], sizes = [1, 32], strides = [1, 1]} : vector<16x128xf32> to vector<1x32xf32>
    %12 = vector.shape_cast %11 : vector<1x32xf32> to vector<32xf32>
    %13 = vector.extract_strided_slice %4 {offsets = [4, 0], sizes = [1, 32], strides = [1, 1]} : vector<16x128xf32> to vector<1x32xf32>
    %14 = vector.shape_cast %13 : vector<1x32xf32> to vector<32xf32>
    %15 = vector.extract_strided_slice %4 {offsets = [5, 0], sizes = [1, 32], strides = [1, 1]} : vector<16x128xf32> to vector<1x32xf32>
    %16 = vector.shape_cast %15 : vector<1x32xf32> to vector<32xf32>
    %17 = vector.extract_strided_slice %4 {offsets = [6, 0], sizes = [1, 32], strides = [1, 1]} : vector<16x128xf32> to vector<1x32xf32>
    %18 = vector.shape_cast %17 : vector<1x32xf32> to vector<32xf32>
    %19 = vector.extract_strided_slice %4 {offsets = [7, 0], sizes = [1, 32], strides = [1, 1]} : vector<16x128xf32> to vector<1x32xf32>
    %20 = vector.shape_cast %19 : vector<1x32xf32> to vector<32xf32>
    %21 = vector.extract_strided_slice %4 {offsets = [8, 0], sizes = [1, 32], strides = [1, 1]} : vector<16x128xf32> to vector<1x32xf32>
    %22 = vector.shape_cast %21 : vector<1x32xf32> to vector<32xf32>
    %23 = vector.extract_strided_slice %4 {offsets = [9, 0], sizes = [1, 32], strides = [1, 1]} : vector<16x128xf32> to vector<1x32xf32>
    %24 = vector.shape_cast %23 : vector<1x32xf32> to vector<32xf32>
    %25 = vector.extract_strided_slice %4 {offsets = [10, 0], sizes = [1, 32], strides = [1, 1]} : vector<16x128xf32> to vector<1x32xf32>
    %26 = vector.shape_cast %25 : vector<1x32xf32> to vector<32xf32>
    %27 = vector.extract_strided_slice %4 {offsets = [11, 0], sizes = [1, 32], strides = [1, 1]} : vector<16x128xf32> to vector<1x32xf32>
    %28 = vector.shape_cast %27 : vector<1x32xf32> to vector<32xf32>
    %29 = vector.extract_strided_slice %4 {offsets = [12, 0], sizes = [1, 128], strides = [1, 1]} : vector<16x128xf32> to vector<1x128xf32>
    %30 = vector.shape_cast %29 : vector<1x128xf32> to vector<128xf32>
    %31 = vector.extract_strided_slice %4 {offsets = [13, 0], sizes = [1, 32], strides = [1, 1]} : vector<16x128xf32> to vector<1x32xf32>
    %32 = vector.shape_cast %31 : vector<1x32xf32> to vector<32xf32>
    %33 = vector.extract_strided_slice %4 {offsets = [14, 0], sizes = [1, 32], strides = [1, 1]} : vector<16x128xf32> to vector<1x32xf32>
    %34 = vector.shape_cast %33 : vector<1x32xf32> to vector<32xf32>
    %35 = vector.extract_strided_slice %4 {offsets = [15, 0], sizes = [1, 32], strides = [1, 1]} : vector<16x128xf32> to vector<1x32xf32>
    %36 = vector.shape_cast %35 : vector<1x32xf32> to vector<32xf32>
    %c0_1 = arith.constant 0 : index
    %c0_2 = arith.constant 0 : index
    %c0_3 = arith.constant 0 : index
    %37 = vector.load %arg3[%c0_1, %c0_2, %c0_3] : memref<1x8x32xbf16, #tpu.memory_space<vmem>>, vector<1x8x32xbf16>
    %38 = vector.shape_cast %37 : vector<1x8x32xbf16> to vector<8x32xbf16>
    %c0_4 = arith.constant 0 : index
    %c0_5 = arith.constant 0 : index
    %c0_6 = arith.constant 0 : index
    %39 = vector.load %arg4[%c0_4, %c0_5, %c0_6] : memref<1x16x32xbf16, #tpu.memory_space<vmem>>, vector<1x16x32xbf16>
    %40 = vector.shape_cast %39 : vector<1x16x32xbf16> to vector<16x32xbf16>
    %41 = arith.extf %38 : vector<8x32xbf16> to vector<8x32xf32>
    %42 = tpu.iota {dimensions = array<i32: 0>} : vector<8x1xi32>
    %43 = vector.broadcast %1 : i32 to vector<8x1xi32>
    %44 = arith.cmpi slt, %42, %43 : vector<8x1xi32>
    %45 = arith.extui %44 : vector<8x1xi1> to vector<8x1xi32>
    %46 = arith.sitofp %45 : vector<8x1xi32> to vector<8x1xf32>
    %47 = tpu.iota {dimensions = array<i32: 0>} : vector<8x8xi32>
    %48 = tpu.iota {dimensions = array<i32: 1>} : vector<8x8xi32>
    %49 = arith.cmpi sle, %48, %47 : vector<8x8xi32>
    %50 = vector.broadcast %1 : i32 to vector<8x8xi32>
    %51 = arith.cmpi slt, %48, %50 : vector<8x8xi32>
    %52 = arith.andi %49, %51 : vector<8x8xi1>
    %cst = arith.constant 0.000000e+00 : f32
    %cst_7 = arith.constant -1.000000e+30 : f32
    %53 = vector.broadcast %cst : f32 to vector<8x8xf32>
    %54 = vector.broadcast %cst_7 : f32 to vector<8x8xf32>
    %55 = arith.select %52, %53, %54 : vector<8x8xi1>, vector<8x8xf32>
    %56 = tpu.iota {dimensions = array<i32: 1>} : vector<8x16xi32>
    %57 = vector.broadcast %3 : i32 to vector<8x16xi32>
    %58 = arith.cmpi slt, %56, %57 : vector<8x16xi32>
    %cst_8 = arith.constant 0.000000e+00 : f32
    %cst_9 = arith.constant -1.000000e+30 : f32
    %59 = vector.broadcast %cst_8 : f32 to vector<8x16xf32>
    %60 = vector.broadcast %cst_9 : f32 to vector<8x16xf32>
    %61 = arith.select %58, %59, %60 : vector<8x16xi1>, vector<8x16xf32>
    %c0_10 = arith.constant 0 : index
    %c0_11 = arith.constant 0 : index
    %62 = vector.load %arg5[%c0_10, %c0_11] : memref<32x96xbf16, #tpu.memory_space<vmem>>, vector<32x96xbf16>
    %cst_12 = arith.constant dense<0.000000e+00> : vector<8x96xf32>
    %63 = tpu.matmul %38, %62, %cst_12 {dimension_numbers = #tpu.dot_dimension_numbers<[1], [0], [0], [1], [0, 0, 1, 1], [], []>} : vector<8x32xbf16>, vector<32x96xbf16>, vector<8x96xf32> -> vector<8x96xf32>
    %64 = vector.extract_strided_slice %63 {offsets = [0, 0], sizes = [8, 32], strides = [1, 1]} : vector<8x96xf32> to vector<8x32xf32>
    %65 = vector.shape_cast %6 : vector<32xf32> to vector<1x32xf32>
    %66 = vector.broadcast %65 : vector<1x32xf32> to vector<8x32xf32>
    %67 = arith.addf %64, %66 : vector<8x32xf32>
    %68 = vector.extract_strided_slice %63 {offsets = [0, 32], sizes = [8, 32], strides = [1, 1]} : vector<8x96xf32> to vector<8x32xf32>
    %69 = vector.shape_cast %8 : vector<32xf32> to vector<1x32xf32>
    %70 = vector.broadcast %69 : vector<1x32xf32> to vector<8x32xf32>
    %71 = arith.addf %68, %70 : vector<8x32xf32>
    %72 = vector.extract_strided_slice %63 {offsets = [0, 64], sizes = [8, 32], strides = [1, 1]} : vector<8x96xf32> to vector<8x32xf32>
    %73 = vector.shape_cast %10 : vector<32xf32> to vector<1x32xf32>
    %74 = vector.broadcast %73 : vector<1x32xf32> to vector<8x32xf32>
    %75 = arith.addf %72, %74 : vector<8x32xf32>
    %76 = vector.shape_cast %67 : vector<8x32xf32> to vector<8x2x16xf32>
    %77 = tpu.transpose %76, [1, 0, 2] : vector<8x2x16xf32> -> vector<2x8x16xf32>
    %78 = arith.truncf %77 : vector<2x8x16xf32> to vector<2x8x16xbf16>
    %79 = vector.shape_cast %71 : vector<8x32xf32> to vector<8x2x16xf32>
    %80 = tpu.transpose %79, [1, 0, 2] : vector<8x2x16xf32> -> vector<2x8x16xf32>
    %81 = arith.truncf %80 : vector<2x8x16xf32> to vector<2x8x16xbf16>
    %82 = vector.shape_cast %75 : vector<8x32xf32> to vector<8x2x16xf32>
    %83 = tpu.transpose %82, [1, 0, 2] : vector<8x2x16xf32> -> vector<2x8x16xf32>
    %84 = arith.truncf %83 : vector<2x8x16xf32> to vector<2x8x16xbf16>
    "tpu.trace_start"() <{level = 10 : i32, message = "hqd,hkd->hqk"}> : () -> ()
    %cst_13 = arith.constant dense<0.000000e+00> : vector<2x8x8xf32>
    %85 = tpu.matmul %78, %81, %cst_13 {dimension_numbers = #tpu.dot_dimension_numbers<[2], [2], [1], [1], [0, 0, 0, 1, 1, 1], [0], [0]>} : vector<2x8x16xbf16>, vector<2x8x16xbf16>, vector<2x8x8xf32> -> vector<2x8x8xf32>
    "tpu.trace_stop"() : () -> ()
    %86 = vector.shape_cast %55 : vector<8x8xf32> to vector<1x8x8xf32>
    %87 = vector.broadcast %86 : vector<1x8x8xf32> to vector<2x8x8xf32>
    %88 = arith.addf %85, %87 : vector<2x8x8xf32>
    %cst_14 = arith.constant dense<0xFF800000> : vector<2x8xf32>
    %89 = vector.multi_reduction <maximumf>, %88, %cst_14 [2] : vector<2x8x8xf32> to vector<2x8xf32>
    %90 = vector.shape_cast %89 : vector<2x8xf32> to vector<2x8x1xf32>
    %91 = vector.broadcast %90 : vector<2x8x1xf32> to vector<2x8x8xf32>
    %92 = arith.subf %88, %91 : vector<2x8x8xf32>
    %93 = math.exp %92 : vector<2x8x8xf32>
    %cst_15 = arith.constant dense<0.000000e+00> : vector<2x8xf32>
    %94 = vector.multi_reduction <add>, %93, %cst_15 [2] : vector<2x8x8xf32> to vector<2x8xf32>
    %95 = vector.shape_cast %94 : vector<2x8xf32> to vector<2x8x1xf32>
    %96 = tpu.reciprocal %95 {approx = true} : vector<2x8x1xf32> -> vector<2x8x1xf32>
    %97 = vector.broadcast %96 : vector<2x8x1xf32> to vector<2x8x8xf32>
    %98 = arith.mulf %93, %97 : vector<2x8x8xf32>
    %99 = arith.truncf %98 : vector<2x8x8xf32> to vector<2x8x8xbf16>
    "tpu.trace_start"() <{level = 10 : i32, message = "hqk,hkd->hqd"}> : () -> ()
    %cst_16 = arith.constant dense<0.000000e+00> : vector<2x8x16xf32>
    %100 = tpu.matmul %99, %84, %cst_16 {dimension_numbers = #tpu.dot_dimension_numbers<[2], [1], [1], [2], [0, 0, 0, 1, 1, 2], [0], [0]>} : vector<2x8x8xbf16>, vector<2x8x16xbf16>, vector<2x8x16xf32> -> vector<2x8x16xf32>
    "tpu.trace_stop"() : () -> ()
    %101 = tpu.transpose %100, [1, 0, 2] : vector<2x8x16xf32> -> vector<8x2x16xf32>
    %102 = vector.shape_cast %101 : vector<8x2x16xf32> to vector<8x32xf32>
    %103 = arith.truncf %102 : vector<8x32xf32> to vector<8x32xbf16>
    %c0_17 = arith.constant 0 : index
    %c0_18 = arith.constant 0 : index
    %104 = vector.load %arg6[%c0_17, %c0_18] : memref<32x32xbf16, #tpu.memory_space<vmem>>, vector<32x32xbf16>
    %cst_19 = arith.constant dense<0.000000e+00> : vector<8x32xf32>
    %105 = tpu.matmul %103, %104, %cst_19 {dimension_numbers = #tpu.dot_dimension_numbers<[1], [0], [0], [1], [0, 0, 1, 1], [], []>} : vector<8x32xbf16>, vector<32x32xbf16>, vector<8x32xf32> -> vector<8x32xf32>
    %106 = vector.shape_cast %12 : vector<32xf32> to vector<1x32xf32>
    %107 = vector.broadcast %106 : vector<1x32xf32> to vector<8x32xf32>
    %108 = arith.addf %105, %107 : vector<8x32xf32>
    %109 = arith.addf %108, %41 : vector<8x32xf32>
    %cst_20 = arith.constant dense<0.000000e+00> : vector<8xf32>
    %110 = vector.multi_reduction <add>, %109, %cst_20 [1] : vector<8x32xf32> to vector<8xf32>
    %111 = vector.shape_cast %110 : vector<8xf32> to vector<8x1xf32>
    %cst_21 = arith.constant 3.200000e+01 : f32
    %112 = vector.broadcast %cst_21 : f32 to vector<8x1xf32>
    %113 = arith.divf %111, %112 : vector<8x1xf32>
    %114 = vector.broadcast %113 : vector<8x1xf32> to vector<8x32xf32>
    %115 = arith.subf %109, %114 : vector<8x32xf32>
    %116 = arith.mulf %115, %115 : vector<8x32xf32>
    %cst_22 = arith.constant dense<0.000000e+00> : vector<8xf32>
    %117 = vector.multi_reduction <add>, %116, %cst_22 [1] : vector<8x32xf32> to vector<8xf32>
    %118 = vector.shape_cast %117 : vector<8xf32> to vector<8x1xf32>
    %cst_23 = arith.constant 3.200000e+01 : f32
    %119 = vector.broadcast %cst_23 : f32 to vector<8x1xf32>
    %120 = arith.divf %118, %119 : vector<8x1xf32>
    %121 = vector.broadcast %113 : vector<8x1xf32> to vector<8x32xf32>
    %122 = arith.subf %109, %121 : vector<8x32xf32>
    %cst_24 = arith.constant 9.99999974E-6 : f32
    %123 = vector.broadcast %cst_24 : f32 to vector<8x1xf32>
    %124 = arith.addf %120, %123 : vector<8x1xf32>
    %125 = math.rsqrt %124 : vector<8x1xf32>
    %126 = vector.broadcast %125 : vector<8x1xf32> to vector<8x32xf32>
    %127 = arith.mulf %122, %126 : vector<8x32xf32>
    %128 = vector.shape_cast %14 : vector<32xf32> to vector<1x32xf32>
    %129 = vector.broadcast %128 : vector<1x32xf32> to vector<8x32xf32>
    %130 = arith.mulf %127, %129 : vector<8x32xf32>
    %131 = vector.shape_cast %16 : vector<32xf32> to vector<1x32xf32>
    %132 = vector.broadcast %131 : vector<1x32xf32> to vector<8x32xf32>
    %133 = arith.addf %130, %132 : vector<8x32xf32>
    %134 = vector.broadcast %46 : vector<8x1xf32> to vector<8x32xf32>
    %135 = arith.mulf %133, %134 : vector<8x32xf32>
    %136 = arith.truncf %135 : vector<8x32xf32> to vector<8x32xbf16>
    %c0_25 = arith.constant 0 : index
    %c0_26 = arith.constant 0 : index
    %137 = vector.load %arg7[%c0_25, %c0_26] : memref<32x32xbf16, #tpu.memory_space<vmem>>, vector<32x32xbf16>
    %cst_27 = arith.constant dense<0.000000e+00> : vector<8x32xf32>
    %138 = tpu.matmul %136, %137, %cst_27 {dimension_numbers = #tpu.dot_dimension_numbers<[1], [0], [0], [1], [0, 0, 1, 1], [], []>} : vector<8x32xbf16>, vector<32x32xbf16>, vector<8x32xf32> -> vector<8x32xf32>
    %139 = vector.shape_cast %18 : vector<32xf32> to vector<1x32xf32>
    %140 = vector.broadcast %139 : vector<1x32xf32> to vector<8x32xf32>
    %141 = arith.addf %138, %140 : vector<8x32xf32>
    %c0_28 = arith.constant 0 : index
    %c0_29 = arith.constant 0 : index
    %142 = vector.load %arg8[%c0_28, %c0_29] : memref<32x64xbf16, #tpu.memory_space<vmem>>, vector<32x64xbf16>
    %cst_30 = arith.constant dense<0.000000e+00> : vector<16x64xf32>
    %143 = tpu.matmul %40, %142, %cst_30 {dimension_numbers = #tpu.dot_dimension_numbers<[1], [0], [0], [1], [0, 0, 1, 1], [], []>} : vector<16x32xbf16>, vector<32x64xbf16>, vector<16x64xf32> -> vector<16x64xf32>
    %144 = vector.extract_strided_slice %143 {offsets = [0, 0], sizes = [16, 32], strides = [1, 1]} : vector<16x64xf32> to vector<16x32xf32>
    %145 = vector.shape_cast %20 : vector<32xf32> to vector<1x32xf32>
    %146 = vector.broadcast %145 : vector<1x32xf32> to vector<16x32xf32>
    %147 = arith.addf %144, %146 : vector<16x32xf32>
    %148 = vector.extract_strided_slice %143 {offsets = [0, 32], sizes = [16, 32], strides = [1, 1]} : vector<16x64xf32> to vector<16x32xf32>
    %149 = vector.shape_cast %22 : vector<32xf32> to vector<1x32xf32>
    %150 = vector.broadcast %149 : vector<1x32xf32> to vector<16x32xf32>
    %151 = arith.addf %148, %150 : vector<16x32xf32>
    %152 = vector.shape_cast %141 : vector<8x32xf32> to vector<8x2x16xf32>
    %153 = tpu.transpose %152, [1, 0, 2] : vector<8x2x16xf32> -> vector<2x8x16xf32>
    %154 = arith.truncf %153 : vector<2x8x16xf32> to vector<2x8x16xbf16>
    %155 = vector.shape_cast %147 : vector<16x32xf32> to vector<16x2x16xf32>
    %156 = tpu.transpose %155, [1, 0, 2] : vector<16x2x16xf32> -> vector<2x16x16xf32>
    %157 = arith.truncf %156 : vector<2x16x16xf32> to vector<2x16x16xbf16>
    %158 = vector.shape_cast %151 : vector<16x32xf32> to vector<16x2x16xf32>
    %159 = tpu.transpose %158, [1, 0, 2] : vector<16x2x16xf32> -> vector<2x16x16xf32>
    %160 = arith.truncf %159 : vector<2x16x16xf32> to vector<2x16x16xbf16>
    "tpu.trace_start"() <{level = 10 : i32, message = "hqd,hkd->hqk"}> : () -> ()
    %cst_31 = arith.constant dense<0.000000e+00> : vector<2x8x16xf32>
    %161 = tpu.matmul %154, %157, %cst_31 {dimension_numbers = #tpu.dot_dimension_numbers<[2], [2], [1], [1], [0, 0, 0, 1, 1, 1], [0], [0]>} : vector<2x8x16xbf16>, vector<2x16x16xbf16>, vector<2x8x16xf32> -> vector<2x8x16xf32>
    "tpu.trace_stop"() : () -> ()
    %162 = vector.shape_cast %61 : vector<8x16xf32> to vector<1x8x16xf32>
    %163 = vector.broadcast %162 : vector<1x8x16xf32> to vector<2x8x16xf32>
    %164 = arith.addf %161, %163 : vector<2x8x16xf32>
    %cst_32 = arith.constant dense<0xFF800000> : vector<2x8xf32>
    %165 = vector.multi_reduction <maximumf>, %164, %cst_32 [2] : vector<2x8x16xf32> to vector<2x8xf32>
    %166 = vector.shape_cast %165 : vector<2x8xf32> to vector<2x8x1xf32>
    %167 = vector.broadcast %166 : vector<2x8x1xf32> to vector<2x8x16xf32>
    %168 = arith.subf %164, %167 : vector<2x8x16xf32>
    %169 = math.exp %168 : vector<2x8x16xf32>
    %cst_33 = arith.constant dense<0.000000e+00> : vector<2x8xf32>
    %170 = vector.multi_reduction <add>, %169, %cst_33 [2] : vector<2x8x16xf32> to vector<2x8xf32>
    %171 = vector.shape_cast %170 : vector<2x8xf32> to vector<2x8x1xf32>
    %172 = tpu.reciprocal %171 {approx = true} : vector<2x8x1xf32> -> vector<2x8x1xf32>
    %173 = vector.broadcast %172 : vector<2x8x1xf32> to vector<2x8x16xf32>
    %174 = arith.mulf %169, %173 : vector<2x8x16xf32>
    %175 = arith.truncf %174 : vector<2x8x16xf32> to vector<2x8x16xbf16>
    "tpu.trace_start"() <{level = 10 : i32, message = "hqk,hkd->hqd"}> : () -> ()
    %cst_34 = arith.constant dense<0.000000e+00> : vector<2x8x16xf32>
    %176 = tpu.matmul %175, %160, %cst_34 {dimension_numbers = #tpu.dot_dimension_numbers<[2], [1], [1], [2], [0, 0, 0, 1, 1, 2], [0], [0]>} : vector<2x8x16xbf16>, vector<2x16x16xbf16>, vector<2x8x16xf32> -> vector<2x8x16xf32>
    "tpu.trace_stop"() : () -> ()
    %177 = tpu.transpose %176, [1, 0, 2] : vector<2x8x16xf32> -> vector<8x2x16xf32>
    %178 = vector.shape_cast %177 : vector<8x2x16xf32> to vector<8x32xf32>
    %179 = arith.truncf %178 : vector<8x32xf32> to vector<8x32xbf16>
    %c0_35 = arith.constant 0 : index
    %c0_36 = arith.constant 0 : index
    %180 = vector.load %arg9[%c0_35, %c0_36] : memref<32x32xbf16, #tpu.memory_space<vmem>>, vector<32x32xbf16>
    %cst_37 = arith.constant dense<0.000000e+00> : vector<8x32xf32>
    %181 = tpu.matmul %179, %180, %cst_37 {dimension_numbers = #tpu.dot_dimension_numbers<[1], [0], [0], [1], [0, 0, 1, 1], [], []>} : vector<8x32xbf16>, vector<32x32xbf16>, vector<8x32xf32> -> vector<8x32xf32>
    %182 = vector.shape_cast %24 : vector<32xf32> to vector<1x32xf32>
    %183 = vector.broadcast %182 : vector<1x32xf32> to vector<8x32xf32>
    %184 = arith.addf %181, %183 : vector<8x32xf32>
    %185 = arith.addf %184, %135 : vector<8x32xf32>
    %cst_38 = arith.constant dense<0.000000e+00> : vector<8xf32>
    %186 = vector.multi_reduction <add>, %185, %cst_38 [1] : vector<8x32xf32> to vector<8xf32>
    %187 = vector.shape_cast %186 : vector<8xf32> to vector<8x1xf32>
    %cst_39 = arith.constant 3.200000e+01 : f32
    %188 = vector.broadcast %cst_39 : f32 to vector<8x1xf32>
    %189 = arith.divf %187, %188 : vector<8x1xf32>
    %190 = vector.broadcast %189 : vector<8x1xf32> to vector<8x32xf32>
    %191 = arith.subf %185, %190 : vector<8x32xf32>
    %192 = arith.mulf %191, %191 : vector<8x32xf32>
    %cst_40 = arith.constant dense<0.000000e+00> : vector<8xf32>
    %193 = vector.multi_reduction <add>, %192, %cst_40 [1] : vector<8x32xf32> to vector<8xf32>
    %194 = vector.shape_cast %193 : vector<8xf32> to vector<8x1xf32>
    %cst_41 = arith.constant 3.200000e+01 : f32
    %195 = vector.broadcast %cst_41 : f32 to vector<8x1xf32>
    %196 = arith.divf %194, %195 : vector<8x1xf32>
    %197 = vector.broadcast %189 : vector<8x1xf32> to vector<8x32xf32>
    %198 = arith.subf %185, %197 : vector<8x32xf32>
    %cst_42 = arith.constant 9.99999974E-6 : f32
    %199 = vector.broadcast %cst_42 : f32 to vector<8x1xf32>
    %200 = arith.addf %196, %199 : vector<8x1xf32>
    %201 = math.rsqrt %200 : vector<8x1xf32>
    %202 = vector.broadcast %201 : vector<8x1xf32> to vector<8x32xf32>
    %203 = arith.mulf %198, %202 : vector<8x32xf32>
    %204 = vector.shape_cast %26 : vector<32xf32> to vector<1x32xf32>
    %205 = vector.broadcast %204 : vector<1x32xf32> to vector<8x32xf32>
    %206 = arith.mulf %203, %205 : vector<8x32xf32>
    %207 = vector.shape_cast %28 : vector<32xf32> to vector<1x32xf32>
    %208 = vector.broadcast %207 : vector<1x32xf32> to vector<8x32xf32>
    %209 = arith.addf %206, %208 : vector<8x32xf32>
    %210 = vector.broadcast %46 : vector<8x1xf32> to vector<8x32xf32>
    %211 = arith.mulf %209, %210 : vector<8x32xf32>
    %212 = arith.truncf %211 : vector<8x32xf32> to vector<8x32xbf16>
    %c0_43 = arith.constant 0 : index
    %c0_44 = arith.constant 0 : index
    %213 = vector.load %arg10[%c0_43, %c0_44] : memref<32x128xbf16, #tpu.memory_space<vmem>>, vector<32x128xbf16>
    %cst_45 = arith.constant dense<0.000000e+00> : vector<8x128xf32>
    %214 = tpu.matmul %212, %213, %cst_45 {dimension_numbers = #tpu.dot_dimension_numbers<[1], [0], [0], [1], [0, 0, 1, 1], [], []>} : vector<8x32xbf16>, vector<32x128xbf16>, vector<8x128xf32> -> vector<8x128xf32>
    %215 = vector.shape_cast %30 : vector<128xf32> to vector<1x128xf32>
    %216 = vector.broadcast %215 : vector<1x128xf32> to vector<8x128xf32>
    %217 = arith.addf %214, %216 : vector<8x128xf32>
    %cst_46 = arith.constant 0.000000e+00 : f32
    %218 = vector.broadcast %cst_46 : f32 to vector<8x128xf32>
    %219 = arith.maximumf %217, %218 : vector<8x128xf32>
    %220 = arith.truncf %219 : vector<8x128xf32> to vector<8x128xbf16>
    %c0_47 = arith.constant 0 : index
    %c0_48 = arith.constant 0 : index
    %221 = vector.load %arg11[%c0_47, %c0_48] : memref<128x32xbf16, #tpu.memory_space<vmem>>, vector<128x32xbf16>
    %cst_49 = arith.constant dense<0.000000e+00> : vector<8x32xf32>
    %222 = tpu.matmul %220, %221, %cst_49 {dimension_numbers = #tpu.dot_dimension_numbers<[1], [0], [0], [1], [0, 0, 1, 1], [], []>} : vector<8x128xbf16>, vector<128x32xbf16>, vector<8x32xf32> -> vector<8x32xf32>
    %223 = vector.shape_cast %32 : vector<32xf32> to vector<1x32xf32>
    %224 = vector.broadcast %223 : vector<1x32xf32> to vector<8x32xf32>
    %225 = arith.addf %222, %224 : vector<8x32xf32>
    %226 = arith.addf %225, %211 : vector<8x32xf32>
    %cst_50 = arith.constant dense<0.000000e+00> : vector<8xf32>
    %227 = vector.multi_reduction <add>, %226, %cst_50 [1] : vector<8x32xf32> to vector<8xf32>
    %228 = vector.shape_cast %227 : vector<8xf32> to vector<8x1xf32>
    %cst_51 = arith.constant 3.200000e+01 : f32
    %229 = vector.broadcast %cst_51 : f32 to vector<8x1xf32>
    %230 = arith.divf %228, %229 : vector<8x1xf32>
    %231 = vector.broadcast %230 : vector<8x1xf32> to vector<8x32xf32>
    %232 = arith.subf %226, %231 : vector<8x32xf32>
    %233 = arith.mulf %232, %232 : vector<8x32xf32>
    %cst_52 = arith.constant dense<0.000000e+00> : vector<8xf32>
    %234 = vector.multi_reduction <add>, %233, %cst_52 [1] : vector<8x32xf32> to vector<8xf32>
    %235 = vector.shape_cast %234 : vector<8xf32> to vector<8x1xf32>
    %cst_53 = arith.constant 3.200000e+01 : f32
    %236 = vector.broadcast %cst_53 : f32 to vector<8x1xf32>
    %237 = arith.divf %235, %236 : vector<8x1xf32>
    %238 = vector.broadcast %230 : vector<8x1xf32> to vector<8x32xf32>
    %239 = arith.subf %226, %238 : vector<8x32xf32>
    %cst_54 = arith.constant 9.99999974E-6 : f32
    %240 = vector.broadcast %cst_54 : f32 to vector<8x1xf32>
    %241 = arith.addf %237, %240 : vector<8x1xf32>
    %242 = math.rsqrt %241 : vector<8x1xf32>
    %243 = vector.broadcast %242 : vector<8x1xf32> to vector<8x32xf32>
    %244 = arith.mulf %239, %243 : vector<8x32xf32>
    %245 = vector.shape_cast %34 : vector<32xf32> to vector<1x32xf32>
    %246 = vector.broadcast %245 : vector<1x32xf32> to vector<8x32xf32>
    %247 = arith.mulf %244, %246 : vector<8x32xf32>
    %248 = vector.shape_cast %36 : vector<32xf32> to vector<1x32xf32>
    %249 = vector.broadcast %248 : vector<1x32xf32> to vector<8x32xf32>
    %250 = arith.addf %247, %249 : vector<8x32xf32>
    %251 = vector.broadcast %46 : vector<8x1xf32> to vector<8x32xf32>
    %252 = arith.mulf %250, %251 : vector<8x32xf32>
    %c0_55 = arith.constant 0 : index
    %c0_56 = arith.constant 0 : index
    %c0_57 = arith.constant 0 : index
    %253 = vector.load %arg13[%c0_55, %c0_56, %c0_57] : memref<1x8x32xf32, #tpu.memory_space<vmem>>, vector<1x8x32xf32>
    %254 = vector.shape_cast %253 : vector<1x8x32xf32> to vector<8x32xf32>
    %255 = vector.shape_cast %252 : vector<8x32xf32> to vector<1x8x32xf32>
    tpu.vector_store %arg13[%c0_55, %c0_56, %c0_57], %255 {strides = array<i32>} : memref<1x8x32xf32, #tpu.memory_space<vmem>>, vector<1x8x32xf32>,
    %256 = vector.shape_cast %98 : vector<2x8x8xf32> to vector<2x1x8x8xf32>
    %257 = arith.truncf %256 : vector<2x1x8x8xf32> to vector<2x1x8x8xbf16>
    %c0_58 = arith.constant 0 : index
    %c0_59 = arith.constant 0 : index
    %c0_60 = arith.constant 0 : index
    %c0_61 = arith.constant 0 : index
    %258 = vector.load %arg14[%c0_58, %c0_59, %c0_60, %c0_61] : memref<2x1x8x8xbf16, #tpu.memory_space<vmem>>, vector<2x1x8x8xbf16>
    tpu.vector_store %arg14[%c0_58, %c0_59, %c0_60, %c0_61], %257 {strides = array<i32>} : memref<2x1x8x8xbf16, #tpu.memory_space<vmem>>, vector<2x1x8x8xbf16>,
    %259 = vector.shape_cast %174 : vector<2x8x16xf32> to vector<2x1x8x16xf32>
    %260 = arith.truncf %259 : vector<2x1x8x16xf32> to vector<2x1x8x16xbf16>
    %c0_62 = arith.constant 0 : index
    %c0_63 = arith.constant 0 : index
    %c0_64 = arith.constant 0 : index
    %c0_65 = arith.constant 0 : index
    %261 = vector.load %arg15[%c0_62, %c0_63, %c0_64, %c0_65] : memref<2x1x8x16xbf16, #tpu.memory_space<vmem>>, vector<2x1x8x16xbf16>
    tpu.vector_store %arg15[%c0_62, %c0_63, %c0_64, %c0_65], %260 {strides = array<i32>} : memref<2x1x8x16xbf16, #tpu.memory_space<vmem>>, vector<2x1x8x16xbf16>,
    return
  }
  func.func @transform_0(%arg0: i32, %arg1: memref<2xi32, #tpu.memory_space<smem>>, %arg2: memref<2xi32, #tpu.memory_space<smem>>) -> (i32, i32, i32) {
    %c0_i32 = arith.constant 0 : i32
    %c0_i32_0 = arith.constant 0 : i32
    %c0_i32_1 = arith.constant 0 : i32
    return %arg0, %c0_i32, %c0_i32_0 : i32, i32, i32
  }
  func.func @transform_1(%arg0: i32, %arg1: memref<2xi32, #tpu.memory_space<smem>>, %arg2: memref<2xi32, #tpu.memory_space<smem>>) -> (i32, i32, i32) {
    %c0_i32 = arith.constant 0 : i32
    %c0_i32_0 = arith.constant 0 : i32
    %c0_i32_1 = arith.constant 0 : i32
    return %arg0, %c0_i32, %c0_i32_0 : i32, i32, i32
  }
  func.func @transform_2(%arg0: i32, %arg1: memref<2xi32, #tpu.memory_space<smem>>, %arg2: memref<2xi32, #tpu.memory_space<smem>>) -> (i32, i32) {
    %c0_i32 = arith.constant 0 : i32
    %c0_i32_0 = arith.constant 0 : i32
    %c0_i32_1 = arith.constant 0 : i32
    return %c0_i32, %c0_i32_0 : i32, i32
  }
  func.func @transform_3(%arg0: i32, %arg1: memref<2xi32, #tpu.memory_space<smem>>, %arg2: memref<2xi32, #tpu.memory_space<smem>>) -> (i32, i32) {
    %c0_i32 = arith.constant 0 : i32
    %c0_i32_0 = arith.constant 0 : i32
    %c0_i32_1 = arith.constant 0 : i32
    return %c0_i32, %c0_i32_0 : i32, i32
  }
  func.func @transform_4(%arg0: i32, %arg1: memref<2xi32, #tpu.memory_space<smem>>, %arg2: memref<2xi32, #tpu.memory_space<smem>>) -> (i32, i32) {
    %c0_i32 = arith.constant 0 : i32
    %c0_i32_0 = arith.constant 0 : i32
    %c0_i32_1 = arith.constant 0 : i32
    return %c0_i32, %c0_i32_0 : i32, i32
  }
  func.func @transform_5(%arg0: i32, %arg1: memref<2xi32, #tpu.memory_space<smem>>, %arg2: memref<2xi32, #tpu.memory_space<smem>>) -> (i32, i32) {
    %c0_i32 = arith.constant 0 : i32
    %c0_i32_0 = arith.constant 0 : i32
    %c0_i32_1 = arith.constant 0 : i32
    return %c0_i32, %c0_i32_0 : i32, i32
  }
  func.func @transform_6(%arg0: i32, %arg1: memref<2xi32, #tpu.memory_space<smem>>, %arg2: memref<2xi32, #tpu.memory_space<smem>>) -> (i32, i32) {
    %c0_i32 = arith.constant 0 : i32
    %c0_i32_0 = arith.constant 0 : i32
    %c0_i32_1 = arith.constant 0 : i32
    return %c0_i32, %c0_i32_0 : i32, i32
  }
  func.func @transform_7(%arg0: i32, %arg1: memref<2xi32, #tpu.memory_space<smem>>, %arg2: memref<2xi32, #tpu.memory_space<smem>>) -> (i32, i32) {
    %c0_i32 = arith.constant 0 : i32
    %c0_i32_0 = arith.constant 0 : i32
    %c0_i32_1 = arith.constant 0 : i32
    return %c0_i32, %c0_i32_0 : i32, i32
  }
  func.func @transform_8(%arg0: i32, %arg1: memref<2xi32, #tpu.memory_space<smem>>, %arg2: memref<2xi32, #tpu.memory_space<smem>>) -> (i32, i32) {
    %c0_i32 = arith.constant 0 : i32
    %c0_i32_0 = arith.constant 0 : i32
    %c0_i32_1 = arith.constant 0 : i32
    return %c0_i32, %c0_i32_0 : i32, i32
  }
  func.func @transform_9(%arg0: i32, %arg1: memref<2xi32, #tpu.memory_space<smem>>, %arg2: memref<2xi32, #tpu.memory_space<smem>>) -> (i32, i32) {
    %c0_i32 = arith.constant 0 : i32
    %c0_i32_0 = arith.constant 0 : i32
    %c0_i32_1 = arith.constant 0 : i32
    return %c0_i32, %c0_i32_0 : i32, i32
  }
  func.func @transform_10(%arg0: i32, %arg1: memref<2xi32, #tpu.memory_space<smem>>, %arg2: memref<2xi32, #tpu.memory_space<smem>>) -> (i32, i32, i32) {
    %c0_i32 = arith.constant 0 : i32
    %c0_i32_0 = arith.constant 0 : i32
    %c0_i32_1 = arith.constant 0 : i32
    return %arg0, %c0_i32, %c0_i32_0 : i32, i32, i32
  }
  func.func @transform_11(%arg0: i32, %arg1: memref<2xi32, #tpu.memory_space<smem>>, %arg2: memref<2xi32, #tpu.memory_space<smem>>) -> (i32, i32, i32, i32) {
    %c0_i32 = arith.constant 0 : i32
    %c0_i32_0 = arith.constant 0 : i32
    %c0_i32_1 = arith.constant 0 : i32
    %c0_i32_2 = arith.constant 0 : i32
    return %c0_i32, %arg0, %c0_i32_0, %c0_i32_1 : i32, i32, i32, i32
  }
  func.func @transform_12(%arg0: i32, %arg1: memref<2xi32, #tpu.memory_space<smem>>, %arg2: memref<2xi32, #tpu.memory_space<smem>>) -> (i32, i32, i32, i32) {
    %c0_i32 = arith.constant 0 : i32
    %c0_i32_0 = arith.constant 0 : i32
    %c0_i32_1 = arith.constant 0 : i32
    %c0_i32_2 = arith.constant 0 : i32
    return %c0_i32, %arg0, %c0_i32_0, %c0_i32_1 : i32, i32, i32, i32
  }
}

</mosaic_0001>

<llo_original>
// kernel: tpu_custom_call.1
$region0: #{tpu_custom_call.1}
  #allocation0 [shape = 'u32[]', space=smem, size = 0x4, offset = 0x4, fixed_abs, tag = 'smem constant byte address 0x4 - core index']
  #allocation1 [shape = 'u32[144,128]{1,0:T(1,128)}', space=vmem, size = 0x12000, scoped, tag = 'internal scratch']
  #allocation2 [shape = 's32[1]{0}', space=sflag, size = 0x4, scoped, tag = 'scoped memory for tpu_custom_call.1']
  #allocation3 [shape = 'u8[512]{0}', space=smem, size = 0x200, scoped, tag = 'prefetched SMEM operand 0']
  #allocation4 [shape = 'u8[512]{0}', space=smem, size = 0x200, scoped, tag = 'prefetched SMEM operand 1']
  %s0 = inlined_call_operand.hbm [shape: s32[2], index: 0, kind: input, shape index: {}]
  %s1 = inlined_call_operand.vmem [shape: s32[2], index: 1, kind: input, shape index: {}]
  %s2 = inlined_call_operand.hbm [shape: bf16[2,8,32], index: 2, kind: input, shape index: {}]
  %s3 = inlined_call_operand.vmem [shape: bf16[2,16,32], index: 3, kind: input, shape index: {}]
  %s4 = inlined_call_operand.vmem [shape: bf16[32,96], index: 4, kind: input, shape index: {}]
  %s5 = inlined_call_operand.vmem [shape: bf16[32,32], index: 5, kind: input, shape index: {}]
  %s6 = inlined_call_operand.vmem [shape: bf16[32,32], index: 6, kind: input, shape index: {}]
  %s7 = inlined_call_operand.vmem [shape: bf16[32,64], index: 7, kind: input, shape index: {}]
  %s8 = inlined_call_operand.hbm [shape: bf16[32,32], index: 8, kind: input, shape index: {}]
  %s9 = inlined_call_operand.hbm [shape: bf16[32,128], index: 9, kind: input, shape index: {}]
  %s10 = inlined_call_operand.vmem [shape: bf16[128,32], index: 10, kind: input, shape index: {}]
  %s11 = inlined_call_operand.hbm [shape: f32[16,128], index: 11, kind: input, shape index: {}]
  %s12 = inlined_call_operand.hbm [shape: f32[2,8,32], index: 12, kind: output, shape index: {0}]
  %s13 = inlined_call_operand.hbm [shape: bf16[2,2,8,8], index: 13, kind: output, shape index: {1}]
  %s14 = inlined_call_operand.hbm [shape: bf16[2,2,8,16], index: 14, kind: output, shape index: {2}]
  %15 = xla_tuple %s12, %s13, %s14
  %s16 = sld [smem:[#allocation0]]
  $region105: #{tpu_custom_call.1} parent=0
    _
  %s18 = ssub.s32 1, %s16
  %s19 = scalar_select 0, %s18, %s16
  %21 = dma.hbm_to_smem %s0, 16, [#allocation3], [#allocation2]
  %s22 = sshll.u32 %s1, 4
  %s23 = int_to_ptr.vmem [resolvable:$true] %s22
  %25 = dma.vmem_to_smem %s23, 16, [#allocation4], [#allocation2]
  %26 = dma.done [#allocation2], 32
  %27 = sfence
  $region1: #{tpu_custom_call.1} parent=0
    #allocation5 [shape = 'u8[4096]{0}', space=vmem, size = 0x1000, scoped, tag = 'input window, operand 2']
    #allocation6 [shape = 's32[2]{0}', space=sflag, size = 0x8, scoped, tag = 'scoped memory for tpu_custom_call.1']
    #allocation7 [shape = 's32[2]{0}', space=sflag, size = 0x8, scoped, tag = 'scoped memory for tpu_custom_call.1']
    #allocation8 [shape = 'u8[8192]{0}', space=vmem, size = 0x2000, scoped, tag = 'input window, operand 8, single buffered']
    #allocation9 [shape = 's32[1]{0}', space=sflag, size = 0x4, scoped, tag = 'scoped memory for tpu_custom_call.1']
    #allocation10 [shape = 'u8[8192]{0}', space=vmem, size = 0x2000, scoped, tag = 'input window, operand 9, single buffered']
    #allocation11 [shape = 'u8[8192]{0}', space=vmem, size = 0x2000, scoped, tag = 'input window, operand 11, single buffered']
    #allocation12 [shape = 's32[1]{0}', space=sflag, size = 0x4, scoped, tag = 'scoped memory for tpu_custom_call.1']
    #allocation13 [shape = 'u8[8192]{0}', space=vmem, size = 0x2000, scoped, tag = 'output window, operand 0']
    #allocation14 [shape = 'u8[8192]{0}', space=vmem, size = 0x2000, scoped, tag = 'output window, operand 1']
    #allocation15 [shape = 's32[2]{0}', space=sflag, size = 0x8, scoped, tag = 'scoped memory for tpu_custom_call.1']
    #allocation16 [shape = 'u8[8192]{0}', space=vmem, size = 0x2000, scoped, tag = 'output window, operand 2']
    %28 = vsyncpa [#allocation6], 0
    %s29 = scalar_lea.sflag [#allocation6], 1
    %30 = vsyncpa %s29, 0
    %31 = vsyncpa [#allocation9], 0
    %32 = vsyncpa [#allocation12], 0
    %33 = vsyncpa [#allocation7], 0
    %s34 = scalar_lea.sflag [#allocation7], 1
    %35 = vsyncpa %s34, 0
    %36 = vsyncpa [#allocation15], 0
    %s37 = scalar_lea.sflag [#allocation15], 1
    %38 = vsyncpa %s37, 0
    loop: start=0, step=1, limit=4
    $region2: #{tpu_custom_call.1} parent=1 // loop_pre_header
      _
    $region3: #{tpu_custom_call.1} parent=1 // loop_header
      %s40 = sphi 0, %s44
      %p41 = scmp.ge.s32.totalorder %s40, 4
      %s50 = sphi 0, %s52
      %s53 = sphi 0, %s50
      %s54 = sphi 0, %s53
      %s70 = sphi 0, %s54
      %s76 = sphi 0, %s78
      %s79 = sphi 0, %s76
      %s80 = sphi 0, %s79
      %s96 = sphi 0, %s80
      %s100 = sphi 0, %s100
      %s102 = sphi 0, %s100
      %s103 = sphi 0, %s102
      %s117 = sphi 0, %s103
      %s121 = sphi 0, %s121
      %s123 = sphi 0, %s121
      %s124 = sphi 0, %s123
      %s138 = sphi 0, %s124
      %s142 = sphi 0, %s142
      %s144 = sphi 0, %s142
      %s145 = sphi 0, %s144
      %s159 = sphi 0, %s145
      %s163 = sphi 0, %s163
      %s165 = sphi 0, %s163
      %s166 = sphi 0, %s165
      %s180 = sphi 0, %s166
      %s184 = sphi 0, %s184
      %s186 = sphi 0, %s184
      %s187 = sphi 0, %s186
      %s201 = sphi 0, %s187
      %s205 = sphi 0, %s205
      %s207 = sphi 0, %s205
      %s208 = sphi 0, %s207
      %s222 = sphi 0, %s208
      %s226 = sphi 0, %s226
      %s228 = sphi 0, %s226
      %s229 = sphi 0, %s228
      %s243 = sphi 0, %s229
      %s247 = sphi 0, %s247
      %s249 = sphi 0, %s247
      %s250 = sphi 0, %s249
      %s264 = sphi 0, %s250
      %s270 = sphi 0, %s272
      %s273 = sphi 0, %s270
      %s274 = sphi 0, %s273
      %s290 = sphi 0, %s274
      %s296 = sphi 0, %s298
      %s299 = sphi 0, %s296
      %s300 = sphi 0, %s299
      %s316 = sphi 0, %s300
      %s322 = sphi 0, %s324
      %s325 = sphi 0, %s322
      %s326 = sphi 0, %s325
      %s342 = sphi 0, %s326
    $region4: #{tpu_custom_call.1} parent=1 // loop_header_branch
      %43 = sbr.rel (%p41) target = $region8
    $region5: #{tpu_custom_call.1} parent=1 // loop_body
      %s45 = ssub.s32 %s40, 1
      %s46 = ssub.s32 %s40, 2
      %s47 = sadd.s32 %s40, 1
      %s48 = ssub.s32 %s40, %s47
      %p49 = scmp.eq.s32.totalorder %s48, 0
      %s51 = sadd.s32 %s50, 1
      %s52 = scalar_select %p49, %s50, %s51
      %p55 = pneg %p49
      %p56 = scmp.eq.s32.totalorder %s40, 1
      %p57 = por %p55, %p56
      %p58 = scmp.ne.s32.totalorder %s50, %s53
      %p59 = scmp.eq.s32.totalorder %s40, 0
      %p60 = por %p58, %p59
      %p61 = scmp.ne.s32.totalorder %s50, %s53
      %p62 = scmp.eq.s32.totalorder %s45, 1
      %p63 = por %p61, %p62
      %p64 = scmp.ne.s32.totalorder %s53, %s54
      %p65 = scmp.eq.s32.totalorder %s45, 0
      %p66 = por %p64, %p65
      %p67 = scmp.ne.s32.totalorder %s53, %s54
      %p68 = scmp.eq.s32.totalorder %s46, 1
      %p69 = por %p67, %p68
      %p71 = scmp.ne.s32.totalorder %s54, %s70
      %p72 = scmp.eq.s32.totalorder %s46, 0
      %p73 = por %p71, %p72
      %s74 = ssub.s32 %s40, %s47
      %p75 = scmp.eq.s32.totalorder %s74, 0
      %s77 = sadd.s32 %s76, 1
      %s78 = scalar_select %p75, %s76, %s77
      %p81 = pneg %p75
      %p82 = scmp.eq.s32.totalorder %s40, 1
      %p83 = por %p81, %p82
      %p84 = scmp.ne.s32.totalorder %s76, %s79
      %p85 = scmp.eq.s32.totalorder %s40, 0
      %p86 = por %p84, %p85
      %p87 = scmp.ne.s32.totalorder %s76, %s79
      %p88 = scmp.eq.s32.totalorder %s45, 1
      %p89 = por %p87, %p88
      %p90 = scmp.ne.s32.totalorder %s79, %s80
      %p91 = scmp.eq.s32.totalorder %s45, 0
      %p92 = por %p90, %p91
      %p93 = scmp.ne.s32.totalorder %s79, %s80
      %p94 = scmp.eq.s32.totalorder %s46, 1
      %p95 = por %p93, %p94
      %p97 = scmp.ne.s32.totalorder %s80, %s96
      %p98 = scmp.eq.s32.totalorder %s46, 0
      %p99 = por %p97, %p98
      %s101 = sadd.s32 %s100, 1
      %p104 = scmp.eq.s32.totalorder %s40, 1
      %p105 = scmp.ne.s32.totalorder %s100, %s102
      %p106 = scmp.eq.s32.totalorder %s40, 0
      %p107 = por %p105, %p106
      %p108 = scmp.ne.s32.totalorder %s100, %s102
      %p109 = scmp.eq.s32.totalorder %s45, 1
      %p110 = por %p108, %p109
      %p111 = scmp.ne.s32.totalorder %s102, %s103
      %p112 = scmp.eq.s32.totalorder %s45, 0
      %p113 = por %p111, %p112
      %p114 = scmp.ne.s32.totalorder %s102, %s103
      %p115 = scmp.eq.s32.totalorder %s46, 1
      %p116 = por %p114, %p115
      %p118 = scmp.ne.s32.totalorder %s103, %s117
      %p119 = scmp.eq.s32.totalorder %s46, 0
      %p120 = por %p118, %p119
      %s122 = sadd.s32 %s121, 1
      %p125 = scmp.eq.s32.totalorder %s40, 1
      %p126 = scmp.ne.s32.totalorder %s121, %s123
      %p127 = scmp.eq.s32.totalorder %s40, 0
      %p128 = por %p126, %p127
      %p129 = scmp.ne.s32.totalorder %s121, %s123
      %p130 = scmp.eq.s32.totalorder %s45, 1
      %p131 = por %p129, %p130
      %p132 = scmp.ne.s32.totalorder %s123, %s124
      %p133 = scmp.eq.s32.totalorder %s45, 0
      %p134 = por %p132, %p133
      %p135 = scmp.ne.s32.totalorder %s123, %s124
      %p136 = scmp.eq.s32.totalorder %s46, 1
      %p137 = por %p135, %p136
      %p139 = scmp.ne.s32.totalorder %s124, %s138
      %p140 = scmp.eq.s32.totalorder %s46, 0
      %p141 = por %p139, %p140
      %s143 = sadd.s32 %s142, 1
      %p146 = scmp.eq.s32.totalorder %s40, 1
      %p147 = scmp.ne.s32.totalorder %s142, %s144
      %p148 = scmp.eq.s32.totalorder %s40, 0
      %p149 = por %p147, %p148
      %p150 = scmp.ne.s32.totalorder %s142, %s144
      %p151 = scmp.eq.s32.totalorder %s45, 1
      %p152 = por %p150, %p151
      %p153 = scmp.ne.s32.totalorder %s144, %s145
      %p154 = scmp.eq.s32.totalorder %s45, 0
      %p155 = por %p153, %p154
      %p156 = scmp.ne.s32.totalorder %s144, %s145
      %p157 = scmp.eq.s32.totalorder %s46, 1
      %p158 = por %p156, %p157
      %p160 = scmp.ne.s32.totalorder %s145, %s159
      %p161 = scmp.eq.s32.totalorder %s46, 0
      %p162 = por %p160, %p161
      %s164 = sadd.s32 %s163, 1
      %p167 = scmp.eq.s32.totalorder %s40, 1
      %p168 = scmp.ne.s32.totalorder %s163, %s165
      %p169 = scmp.eq.s32.totalorder %s40, 0
      %p170 = por %p168, %p169
      %p171 = scmp.ne.s32.totalorder %s163, %s165
      %p172 = scmp.eq.s32.totalorder %s45, 1
      %p173 = por %p171, %p172
      %p174 = scmp.ne.s32.totalorder %s165, %s166
      %p175 = scmp.eq.s32.totalorder %s45, 0
      %p176 = por %p174, %p175
      %p177 = scmp.ne.s32.totalorder %s165, %s166
      %p178 = scmp.eq.s32.totalorder %s46, 1
      %p179 = por %p177, %p178
      %p181 = scmp.ne.s32.totalorder %s166, %s180
      %p182 = scmp.eq.s32.totalorder %s46, 0
      %p183 = por %p181, %p182
      %s185 = sadd.s32 %s184, 1
      %p188 = scmp.eq.s32.totalorder %s40, 1
      %p189 = scmp.ne.s32.totalorder %s184, %s186
      %p190 = scmp.eq.s32.totalorder %s40, 0
      %p191 = por %p189, %p190
      %p192 = scmp.ne.s32.totalorder %s184, %s186
      %p193 = scmp.eq.s32.totalorder %s45, 1
      %p194 = por %p192, %p193
      %p195 = scmp.ne.s32.totalorder %s186, %s187
      %p196 = scmp.eq.s32.totalorder %s45, 0
      %p197 = por %p195, %p196
      %p198 = scmp.ne.s32.totalorder %s186, %s187
      %p199 = scmp.eq.s32.totalorder %s46, 1
      %p200 = por %p198, %p199
      %p202 = scmp.ne.s32.totalorder %s187, %s201
      %p203 = scmp.eq.s32.totalorder %s46, 0
      %p204 = por %p202, %p203
      %s206 = sadd.s32 %s205, 1
      %p209 = scmp.eq.s32.totalorder %s40, 1
      %p210 = scmp.ne.s32.totalorder %s205, %s207
      %p211 = scmp.eq.s32.totalorder %s40, 0
      %p212 = por %p210, %p211
      %p213 = scmp.ne.s32.totalorder %s205, %s207
      %p214 = scmp.eq.s32.totalorder %s45, 1
      %p215 = por %p213, %p214
      %p216 = scmp.ne.s32.totalorder %s207, %s208
      %p217 = scmp.eq.s32.totalorder %s45, 0
      %p218 = por %p216, %p217
      %p219 = scmp.ne.s32.totalorder %s207, %s208
      %p220 = scmp.eq.s32.totalorder %s46, 1
      %p221 = por %p219, %p220
      %p223 = scmp.ne.s32.totalorder %s208, %s222
      %p224 = scmp.eq.s32.totalorder %s46, 0
      %p225 = por %p223, %p224
      %s227 = sadd.s32 %s226, 1
      %p230 = scmp.eq.s32.totalorder %s40, 1
      %p231 = scmp.ne.s32.totalorder %s226, %s228
      %p232 = scmp.eq.s32.totalorder %s40, 0
      %p233 = por %p231, %p232
      %p234 = scmp.ne.s32.totalorder %s226, %s228
      %p235 = scmp.eq.s32.totalorder %s45, 1
      %p236 = por %p234, %p235
      %p237 = scmp.ne.s32.totalorder %s228, %s229
      %p238 = scmp.eq.s32.totalorder %s45, 0
      %p239 = por %p237, %p238
      %p240 = scmp.ne.s32.totalorder %s228, %s229
      %p241 = scmp.eq.s32.totalorder %s46, 1
      %p242 = por %p240, %p241
      %p244 = scmp.ne.s32.totalorder %s229, %s243
      %p245 = scmp.eq.s32.totalorder %s46, 0
      %p246 = por %p244, %p245
      %s248 = sadd.s32 %s247, 1
      %p251 = scmp.eq.s32.totalorder %s40, 1
      %p252 = scmp.ne.s32.totalorder %s247, %s249
      %p253 = scmp.eq.s32.totalorder %s40, 0
      %p254 = por %p252, %p253
      %p255 = scmp.ne.s32.totalorder %s247, %s249
      %p256 = scmp.eq.s32.totalorder %s45, 1
      %p257 = por %p255, %p256
      %p258 = scmp.ne.s32.totalorder %s249, %s250
      %p259 = scmp.eq.s32.totalorder %s45, 0
      %p260 = por %p258, %p259
      %p261 = scmp.ne.s32.totalorder %s249, %s250
      %p262 = scmp.eq.s32.totalorder %s46, 1
      %p263 = por %p261, %p262
      %p265 = scmp.ne.s32.totalorder %s250, %s264
      %p266 = scmp.eq.s32.totalorder %s46, 0
      %p267 = por %p265, %p266
      %s268 = ssub.s32 %s40, %s47
      %p269 = scmp.eq.s32.totalorder %s268, 0
      %s271 = sadd.s32 %s270, 1
      %s272 = scalar_select %p269, %s270, %s271
      %p275 = pneg %p269
      %p276 = scmp.eq.s32.totalorder %s40, 1
      %p277 = por %p275, %p276
      %p278 = scmp.ne.s32.totalorder %s270, %s273
      %p279 = scmp.eq.s32.totalorder %s40, 0
      %p280 = por %p278, %p279
      %p281 = scmp.ne.s32.totalorder %s270, %s273
      %p282 = scmp.eq.s32.totalorder %s45, 1
      %p283 = por %p281, %p282
      %p284 = scmp.ne.s32.totalorder %s273, %s274
      %p285 = scmp.eq.s32.totalorder %s45, 0
      %p286 = por %p284, %p285
      %p287 = scmp.ne.s32.totalorder %s273, %s274
      %p288 = scmp.eq.s32.totalorder %s46, 1
      %p289 = por %p287, %p288
      %p291 = scmp.ne.s32.totalorder %s274, %s290
      %p292 = scmp.eq.s32.totalorder %s46, 0
      %p293 = por %p291, %p292
      %s294 = ssub.s32 %s40, %s47
      %p295 = scmp.eq.s32.totalorder %s294, 0
      %s297 = sadd.s32 %s296, 1
      %s298 = scalar_select %p295, %s296, %s297
      %p301 = pneg %p295
      %p302 = scmp.eq.s32.totalorder %s40, 1
      %p303 = por %p301, %p302
      %p304 = scmp.ne.s32.totalorder %s296, %s299
      %p305 = scmp.eq.s32.totalorder %s40, 0
      %p306 = por %p304, %p305
      %p307 = scmp.ne.s32.totalorder %s296, %s299
      %p308 = scmp.eq.s32.totalorder %s45, 1
      %p309 = por %p307, %p308
      %p310 = scmp.ne.s32.totalorder %s299, %s300
      %p311 = scmp.eq.s32.totalorder %s45, 0
      %p312 = por %p310, %p311
      %p313 = scmp.ne.s32.totalorder %s299, %s300
      %p314 = scmp.eq.s32.totalorder %s46, 1
      %p315 = por %p313, %p314
      %p317 = scmp.ne.s32.totalorder %s300, %s316
      %p318 = scmp.eq.s32.totalorder %s46, 0
      %p319 = por %p317, %p318
      %s320 = ssub.s32 %s40, %s47
      %p321 = scmp.eq.s32.totalorder %s320, 0
      %s323 = sadd.s32 %s322, 1
      %s324 = scalar_select %p321, %s322, %s323
      %p327 = pneg %p321
      %p328 = scmp.eq.s32.totalorder %s40, 1
      %p329 = por %p327, %p328
      %p330 = scmp.ne.s32.totalorder %s322, %s325
      %p331 = scmp.eq.s32.totalorder %s40, 0
      %p332 = por %p330, %p331
      %p333 = scmp.ne.s32.totalorder %s322, %s325
      %p334 = scmp.eq.s32.totalorder %s45, 1
      %p335 = por %p333, %p334
      %p336 = scmp.ne.s32.totalorder %s325, %s326
      %p337 = scmp.eq.s32.totalorder %s45, 0
      %p338 = por %p336, %p337
      %p339 = scmp.ne.s32.totalorder %s325, %s326
      %p340 = scmp.eq.s32.totalorder %s46, 1
      %p341 = por %p339, %p340
      %p343 = scmp.ne.s32.totalorder %s326, %s342
      %p344 = scmp.eq.s32.totalorder %s46, 0
      %p345 = por %p343, %p344
      %p346 = scmp.le.s32.totalorder 1, %s40
      %p347 = scmp.lt.s32.totalorder %s40, 3
      %p348 = pnand %p346, %p347
      %p349 = pneg %p348
      // Predicated region
      $region9: #{tpu_custom_call.1} parent=5 // pred_check
        _
      $region10: #{tpu_custom_call.1} parent=5 // pred_check_branch
        %351 = sbr.rel (%p348) target = $region12
      $region11: #{tpu_custom_call.1} parent=5 // pred_region
        %s352 = ssub.s32 %s40, 1
        // Predicated region
        $region13: #{tpu_custom_call.1} parent=11 // pred_check
          %p353 = pneg %p113
        $region14: #{tpu_custom_call.1} parent=11 // pred_check_branch
          %355 = sbr.rel (%p353) target = $region16
        $region15: #{tpu_custom_call.1} parent=11 // pred_region
          _
        $region16: #{tpu_custom_call.1} parent=11 // pred_fallthru
          _
        // Predicated region
        $region17: #{tpu_custom_call.1} parent=11 // pred_check
          %p356 = pneg %p134
        $region18: #{tpu_custom_call.1} parent=11 // pred_check_branch
          %358 = sbr.rel (%p356) target = $region20
        $region19: #{tpu_custom_call.1} parent=11 // pred_region
          _
        $region20: #{tpu_custom_call.1} parent=11 // pred_fallthru
          _
        // Predicated region
        $region21: #{tpu_custom_call.1} parent=11 // pred_check
          %p359 = pneg %p155
        $region22: #{tpu_custom_call.1} parent=11 // pred_check_branch
          %361 = sbr.rel (%p359) target = $region24
        $region23: #{tpu_custom_call.1} parent=11 // pred_region
          _
        $region24: #{tpu_custom_call.1} parent=11 // pred_fallthru
          _
        // Predicated region
        $region25: #{tpu_custom_call.1} parent=11 // pred_check
          %p362 = pneg %p176
        $region26: #{tpu_custom_call.1} parent=11 // pred_check_branch
          %364 = sbr.rel (%p362) target = $region28
        $region27: #{tpu_custom_call.1} parent=11 // pred_region
          _
        $region28: #{tpu_custom_call.1} parent=11 // pred_fallthru
          _
        // Predicated region
        $region29: #{tpu_custom_call.1} parent=11 // pred_check
          %p365 = pneg %p197
        $region30: #{tpu_custom_call.1} parent=11 // pred_check_branch
          %367 = sbr.rel (%p365) target = $region32
        $region31: #{tpu_custom_call.1} parent=11 // pred_region
          %s369 = ssub.s32 256, 256
          %370 = vsyncadd [#allocation9], %s369
          %s371 = sshll.u32 [#allocation8], 4
          %s372 = int_to_ptr.vmem [resolvable:$true] %s371
          %377 = dma.hbm_to_vmem [thread:$0]  %s8, 256, %s372, [#allocation9], 64, 64, 4
        $region32: #{tpu_custom_call.1} parent=11 // pred_fallthru
          _
        // Predicated region
        $region33: #{tpu_custom_call.1} parent=11 // pred_check
          %p378 = pneg %p218
        $region34: #{tpu_custom_call.1} parent=11 // pred_check_branch
          %380 = sbr.rel (%p378) target = $region36
        $region35: #{tpu_custom_call.1} parent=11 // pred_region
          %s382 = ssub.s32 256, 256
          %383 = vsyncadd [#allocation9], %s382
          %s384 = sshll.u32 [#allocation10], 4
          %s385 = int_to_ptr.vmem [resolvable:$true] %s384
          %390 = dma.hbm_to_vmem [thread:$0]  %s9, 256, %s385, [#allocation9], 64, 64, 4
        $region36: #{tpu_custom_call.1} parent=11 // pred_fallthru
          _
        // Predicated region
        $region37: #{tpu_custom_call.1} parent=11 // pred_check
          %p391 = pneg %p239
        $region38: #{tpu_custom_call.1} parent=11 // pred_check_branch
          %393 = sbr.rel (%p391) target = $region40
        $region39: #{tpu_custom_call.1} parent=11 // pred_region
          _
        $region40: #{tpu_custom_call.1} parent=11 // pred_fallthru
          _
        // Predicated region
        $region41: #{tpu_custom_call.1} parent=11 // pred_check
          %p394 = pneg %p260
        $region42: #{tpu_custom_call.1} parent=11 // pred_check_branch
          %396 = sbr.rel (%p394) target = $region44
        $region43: #{tpu_custom_call.1} parent=11 // pred_region
          %s398 = ssub.s32 256, 256
          %399 = vsyncadd [#allocation12], %s398
          %s400 = sshll.u32 [#allocation11], 4
          %s401 = int_to_ptr.vmem [resolvable:$true] %s400
          %406 = dma.hbm_to_vmem [thread:$0]  %s11, 256, %s401, [#allocation12], 128, 128, 8
        $region44: #{tpu_custom_call.1} parent=11 // pred_fallthru
          _
      $region12: #{tpu_custom_call.1} parent=5 // pred_fallthru
        _
      %p407 = scmp.lt.s32.totalorder %s40, 2
      // Predicated region
      $region45: #{tpu_custom_call.1} parent=5 // pred_check
        %p408 = pneg %p407
      $region46: #{tpu_custom_call.1} parent=5 // pred_check_branch
        %410 = sbr.rel (%p408) target = $region48
      $region47: #{tpu_custom_call.1} parent=5 // pred_region
        // Predicated region
        $region49: #{tpu_custom_call.1} parent=47 // pred_check
          %p411 = pneg %p60
        $region50: #{tpu_custom_call.1} parent=47 // pred_check_branch
          %413 = sbr.rel (%p411) target = $region52
        $region51: #{tpu_custom_call.1} parent=47 // pred_region
          %s414 = sand.u32 %s50, 1
          %s415 = scalar_lea.sflag [#allocation6], %s414
          %s416 = sand.u32 %s50, 1
          %s417 = smul.addr %s416, 4
          %s418 = scalar_lea.vmem [#allocation5], %s417
          %s420 = ssub.s32 64, 64
          %421 = vsyncadd %s415, %s420
          %s422 = smul.addr %s40, 64
          %s423 = scalar_lea.hbm %s2, %s422
          %s425 = sshll.u32 %s418, 4
          %s426 = int_to_ptr.vmem [resolvable:$true] %s425
          %428 = dma.hbm_to_vmem [thread:$0]  %s423, 64, %s426, %s415
        $region52: #{tpu_custom_call.1} parent=47 // pred_fallthru
          _
        // Predicated region
        $region53: #{tpu_custom_call.1} parent=47 // pred_check
          %p429 = pneg %p86
        $region54: #{tpu_custom_call.1} parent=47 // pred_check_branch
          %431 = sbr.rel (%p429) target = $region56
        $region55: #{tpu_custom_call.1} parent=47 // pred_region
          %p432 = scmp.lt.s32.totalorder %s40, 1
          %s433 = scalar_select %p432, %s40, 1
          %s434 = smul.addr %s433, 2
          %s435 = smul.addr %s434, 4
          %s436 = scalar_lea.vmem %s3, %s435
        $region56: #{tpu_custom_call.1} parent=47 // pred_fallthru
          _
      $region48: #{tpu_custom_call.1} parent=5 // pred_fallthru
        _
      %p437 = scmp.le.s32.totalorder 1, %s40
      %p438 = scmp.lt.s32.totalorder %s40, 3
      %p439 = pnand %p437, %p438
      %p440 = pneg %p439
      // Predicated region
      $region57: #{tpu_custom_call.1} parent=5 // pred_check
        _
      $region58: #{tpu_custom_call.1} parent=5 // pred_check_branch
        %442 = sbr.rel (%p439) target = $region60
      $region59: #{tpu_custom_call.1} parent=5 // pred_region
        %s443 = ssub.s32 %s40, 1
        %s444 = sand.u32 %s53, 1
        %s445 = scalar_lea.sflag [#allocation6], %s444
        %s446 = sand.u32 %s53, 1
        %s447 = smul.addr %s446, 4
        %s448 = scalar_lea.vmem [#allocation5], %s447
        // Predicated region
        $region61: #{tpu_custom_call.1} parent=59 // pred_check
          %p449 = pneg %p66
        $region62: #{tpu_custom_call.1} parent=59 // pred_check_branch
          %451 = sbr.rel (%p449) target = $region64
        $region63: #{tpu_custom_call.1} parent=59 // pred_region
          %452 = dma.done %s445, 64
        $region64: #{tpu_custom_call.1} parent=59 // pred_fallthru
          _
        // Predicated region
        $region65: #{tpu_custom_call.1} parent=59 // pred_check
          %p453 = pneg %p197
        $region66: #{tpu_custom_call.1} parent=59 // pred_check_branch
          %455 = sbr.rel (%p453) target = $region68
        $region67: #{tpu_custom_call.1} parent=59 // pred_region
          %456 = dma.done [#allocation9], 256
        $region68: #{tpu_custom_call.1} parent=59 // pred_fallthru
          _
        // Predicated region
        $region69: #{tpu_custom_call.1} parent=59 // pred_check
          %p457 = pneg %p218
        $region70: #{tpu_custom_call.1} parent=59 // pred_check_branch
          %459 = sbr.rel (%p457) target = $region72
        $region71: #{tpu_custom_call.1} parent=59 // pred_region
          %460 = dma.done [#allocation9], 256
        $region72: #{tpu_custom_call.1} parent=59 // pred_fallthru
          _
        // Predicated region
        $region73: #{tpu_custom_call.1} parent=59 // pred_check
          %p461 = pneg %p260
        $region74: #{tpu_custom_call.1} parent=59 // pred_check_branch
          %463 = sbr.rel (%p461) target = $region76
        $region75: #{tpu_custom_call.1} parent=59 // pred_region
          %464 = dma.done [#allocation12], 256
        $region76: #{tpu_custom_call.1} parent=59 // pred_fallthru
          _
        %s465 = sand.u32 %s53, 1
        %s466 = scalar_lea.sflag [#allocation6], %s465
        %s467 = sand.u32 %s53, 1
        %s468 = smul.addr %s467, 4
        %s469 = scalar_lea.vmem [#allocation5], %s468
        %p470 = pneg %p66
        %p471 = pneg %p63
        %p472 = scmp.lt.s32.totalorder %s45, 1
        %s473 = scalar_select %p472, %s45, 1
        %s474 = smul.addr %s473, 2
        %s475 = smul.addr %s474, 4
        %s476 = scalar_lea.vmem %s3, %s475
        %p477 = pneg %p92
        %p478 = pneg %p89
        %p479 = pneg %p113
        %p480 = pneg %p110
        %p481 = pneg %p134
        %p482 = pneg %p131
        %p483 = pneg %p155
        %p484 = pneg %p152
        %p485 = pneg %p176
        %p486 = pneg %p173
        %p487 = pneg %p197
        %p488 = pneg %p194
        %p489 = pneg %p218
        %p490 = pneg %p215
        %p491 = pneg %p239
        %p492 = pneg %p236
        %p493 = pneg %p260
        %p494 = pneg %p257
        %p495 = pneg %p286
        %p496 = pneg %p283
        %s497 = sand.u32 %s273, 1
        %s498 = scalar_lea.sflag [#allocation7], %s497
        %s499 = sand.u32 %s273, 1
        %s500 = smul.addr %s499, 8
        %s501 = scalar_lea.vmem [#allocation13], %s500
        %p502 = pneg %p312
        %p503 = pneg %p309
        %s504 = sand.u32 %s45, 1
        %s505 = scalar_lea.sflag [#allocation15], %s504
        %s506 = sand.u32 %s299, 1
        %s507 = smul.addr %s506, 8
        %s508 = scalar_lea.vmem [#allocation14], %s507
        %p509 = pneg %p338
        %p510 = pneg %p335
        %s511 = sand.u32 %s45, 1
        %s512 = scalar_lea.sflag [#allocation15], %s511
        %s513 = sand.u32 %s325, 1
        %s514 = smul.addr %s513, 8
        %s515 = scalar_lea.vmem [#allocation16], %s514
        %p516 = scmp.lt.s32.totalorder %s45, 1
        %s517 = scalar_select %p516, %s45, 1
        %s518 = smul.addr %s517, 2
        %s519 = smul.addr %s518, 4
        %s520 = scalar_lea.vmem %s3, %s519
        %s522 = sld [smem:[#allocation3 + %s45]]
        %s523 = sld [smem:[#allocation4 + %s45]]
        %v524 = vld [vmem:[#allocation11] sm:$0xff]
        %v525 = vld [vmem:[#allocation11 + $0x8] sm:$0xff]
        %v526 = vld [vmem:[%s448] sm:$0xf]
        %v527 = vld [vmem:[%s520] sm:$0xf]
        %v528 = vld [vmem:[%s520 + $0x4] sm:$0xf]
        %v529 = vunpack.c.l.bf16 %v526
        %v530 = vlaneseq
        %v531 = vshrl.u32 %v530, 7
        %v532 = vstv %s522
        %vm533 = vcmp.lt.s32.totalorder %v531, %v532
        %v534 = vsel %vm533, 1, 0
        %v535 = vcvt.s32.f32 %v534
        %v536 = vlaneseq
        %v537 = vand.u32 %v536, 127
        %vm538 = vcmp.le.s32.totalorder %v537, %v531
        %vm539 = vcmp.lt.s32.totalorder %v537, %v532
        %vm540 = vmand %vm538, %vm539
        %v541 = vsel %vm540, 0.0, -1e+30
        %v542 = vstv %s523
        %vm543 = vcmp.lt.s32.totalorder %v537, %v542
        %v544 = vsel %vm543, 0.0, -1e+30
        %v545 = vld [vmem:[%s4] sm:$0xf]
        %v546 = vld [vmem:[%s4 + $0x4] sm:$0xf]
        %v547 = vld [vmem:[%s4 + $0x8] sm:$0xf]
        %v548 = vld [vmem:[%s4 + $0xc] sm:$0xf]
        %v553 = vunpack.c.l.b16 %v545
        %v554 = vunpack.c.l.b16 %v546
        %v555 = vunpack.c.l.b16 %v547
        %v556 = vunpack.c.l.b16 %v548
        %v557 = vpack.c.b16 %v554, %v553
        %v558 = vpack.c.b16 %v556, %v555
        %vm561 = vcmask 261120
        %v563 = vsel %vm561, %v526, 0
        %565 = vmatprep.subr.bf16.mxu0 0
        %566 = vmatpush1.bf16.msra.mxu0 0
        %567 = vmatprep.subr.bf16.mxu0 0
        %568 = vmatpush1.bf16.msra.mxu0 0
        %569 = vmatprep.subr.bf16.mxu0 0
        %570 = vmatpush1.bf16.msra.mxu0 0
        %571 = vmatprep.subr.bf16.mxu0 0
        %572 = vmatpush1.bf16.msra.mxu0 0
        %573 = vmatprep.subr.bf16.mxu0 0
        %574 = vmatpush1.bf16.msra.mxu0 0
        %575 = vmatprep.subr.bf16.mxu0 0
        %576 = vmatpush1.bf16.msra.mxu0 0
        %577 = vmatprep.subr.bf16.mxu0 0
        %578 = vmatpush1.bf16.msra.mxu0 %v558
        %579 = vmatprep.subr.bf16.mxu0 0
        %580 = vmatpush1.bf16.msra.mxu0 %v557
        %581 = vmatprep.subr.bf16.mxu0 0
        %582 = vmatpush2.bf16.msra.mxu0 0
        %583 = vmatprep.subr.bf16.mxu0 0
        %584 = vmatpush2.bf16.msra.mxu0 0
        %585 = vmatprep.subr.bf16.mxu0 0
        %586 = vmatpush2.bf16.msra.mxu0 0
        %587 = vmatprep.subr.bf16.mxu0 0
        %588 = vmatpush2.bf16.msra.mxu0 0
        %589 = vmatprep.subr.bf16.mxu0 0
        %590 = vmatpush2.bf16.msra.mxu0 0
        %591 = vmatprep.subr.bf16.mxu0 0
        %592 = vmatpush2.bf16.msra.mxu0 0
        %593 = vmatprep.subr.bf16.mxu0 0
        %594 = vmatpush2.bf16.msra.mxu0 0
        %595 = vmatprep.subr.bf16.mxu0 0
        %596 = vmatpush2.bf16.msra.mxu0 0
        %597 = vmatprep.mubr.bf16.mxu0 0
        %598 = vmatmul.mubr.bf16.gmra.mxu0 %v563
        %v599 = vpop.f32.mrf.mxu0
        %v600 = vadd.f32 0.0, %v599
        %v601 = vpop.f32.mrf.mxu0
        %v602 = vpop.f32.mrf.mxu0
        %v603 = vpop.f32.mrf.mxu0
        %604 = vdwg.mxu0
        %v605 = vlaneseq
        %v606 = vshrl.u32 %v605, 7
        %v607 = vsub.s32 0, %v606
        %v608 = vrot.slane %v524, %v607
        %v609 = vadd.f32 %v600, %v608
        %v610 = vlaneseq
        %v611 = vshrl.u32 %v610, 7
        %v612 = vsub.s32 1, %v611
        %v613 = vrot.slane %v524, %v612
        %615 = vrot.lane.b32.xlu0 %v613, 32
        %v616 = vpop.permute.xlu0 %615
        %v618 = vadd.f32 %v600, %v616
        %v619 = vlaneseq
        %v620 = vshrl.u32 %v619, 7
        %v621 = vsub.s32 2, %v620
        %v622 = vrot.slane %v524, %v621
        %624 = vrot.lane.b32.xlu0 %v622, 64
        %v625 = vpop.permute.xlu0 %624
        %v627 = vadd.f32 %v600, %v625
        %629 = vrot.lane.b32.xlu0 %v609, 112
        %v630 = vpop.permute.xlu0 %629
        %v632 = vcombine.high %v609, 0.0
        %v634 = vunpack.c.l.s4 1983009808
        %v635 = vunpack.c.0.s8 %v634
        %v636 = vlaneseq
        %v637 = vshrl.u32 %v636, 7
        %v638 = vsub.s32 %v635, %v637
        %v639 = vrot.slane %v609, %v638
        %v641 = vunpack.c.l.s4 1983009808
        %v642 = vunpack.c.0.s8 %v641
        %v643 = vlaneseq
        %v644 = vshrl.u32 %v643, 7
        %v645 = vsub.s32 %v642, %v644
        %v646 = vrot.slane %v632, %v645
        %v647 = vcombine.high %v630, 0.0
        %v649 = vunpack.c.l.s4 1983009808
        %v650 = vunpack.c.0.s8 %v649
        %v651 = vlaneseq
        %v652 = vshrl.u32 %v651, 7
        %v653 = vsub.s32 %v650, %v652
        %v654 = vrot.slane %v630, %v653
        %v656 = vunpack.c.l.s4 1983009808
        %v657 = vunpack.c.0.s8 %v656
        %v658 = vlaneseq
        %v659 = vshrl.u32 %v658, 7
        %v660 = vsub.s32 %v657, %v659
        %v661 = vrot.slane %v647, %v660
        %v662 = vcombine.low %v639, %v654
        %v663 = vcombine.high %v639, %v654
        %v665 = vunpack.c.l.s4 1934713408
        %v666 = vunpack.c.0.s8 %v665
        %v667 = vlaneseq
        %v668 = vshrl.u32 %v667, 7
        %v669 = vsub.s32 %v666, %v668
        %v670 = vrot.slane %v662, %v669
        %v672 = vunpack.c.l.s4 1934713408
        %v673 = vunpack.c.0.s8 %v672
        %v674 = vlaneseq
        %v675 = vshrl.u32 %v674, 7
        %v676 = vsub.s32 %v673, %v675
        %v677 = vrot.slane %v663, %v676
        %v678 = vcombine.low %v646, %v661
        %v679 = vcombine.high %v646, %v661
        %v681 = vunpack.c.l.s4 1934713408
        %v682 = vunpack.c.0.s8 %v681
        %v683 = vlaneseq
        %v684 = vshrl.u32 %v683, 7
        %v685 = vsub.s32 %v682, %v684
        %v686 = vrot.slane %v678, %v685
        %v688 = vunpack.c.l.s4 1934713408
        %v689 = vunpack.c.0.s8 %v688
        %v690 = vlaneseq
        %v691 = vshrl.u32 %v690, 7
        %v692 = vsub.s32 %v689, %v691
        %v693 = vrot.slane %v679, %v692
        %v694 = vcombine.high %v670, 0.0
        %v695 = vcombine.high %v677, 0.0
        %v696 = vcombine.high %v686, 0.0
        %v697 = vcombine.high %v693, 0.0
        %v698 = vcombine.low %v670, %v677
        %v700 = vunpack.c.l.s4 1983009808
        %v701 = vunpack.c.0.s8 %v700
        %v702 = vlaneseq
        %v703 = vshrl.u32 %v702, 7
        %v704 = vsub.s32 %v701, %v703
        %v705 = vrot.slane %v698, %v704
        %v706 = vcombine.low %v694, %v695
        %v708 = vunpack.c.l.s4 1983009808
        %v709 = vunpack.c.0.s8 %v708
        %v710 = vlaneseq
        %v711 = vshrl.u32 %v710, 7
        %v712 = vsub.s32 %v709, %v711
        %v713 = vrot.slane %v706, %v712
        %v714 = vcombine.low %v686, %v693
        %v716 = vunpack.c.l.s4 1983009808
        %v717 = vunpack.c.0.s8 %v716
        %v718 = vlaneseq
        %v719 = vshrl.u32 %v718, 7
        %v720 = vsub.s32 %v717, %v719
        %v721 = vrot.slane %v714, %v720
        %v722 = vcombine.low %v696, %v697
        %v724 = vunpack.c.l.s4 1983009808
        %v725 = vunpack.c.0.s8 %v724
        %v726 = vlaneseq
        %v727 = vshrl.u32 %v726, 7
        %v728 = vsub.s32 %v725, %v727
        %v729 = vrot.slane %v722, %v728
        %v730 = vcombine.low %v705, %v713
        %v732 = vunpack.c.l.s4 1934713408
        %v733 = vunpack.c.0.s8 %v732
        %v734 = vlaneseq
        %v735 = vshrl.u32 %v734, 7
        %v736 = vsub.s32 %v733, %v735
        %v737 = vrot.slane %v730, %v736
        %v738 = vcombine.low %v721, %v729
        %v740 = vunpack.c.l.s4 1934713408
        %v741 = vunpack.c.0.s8 %v740
        %v742 = vlaneseq
        %v743 = vshrl.u32 %v742, 7
        %v744 = vsub.s32 %v741, %v743
        %v745 = vrot.slane %v738, %v744
        %v746 = vcombine.low %v737, %v745
        %v747 = vcombine.high %v737, %v745
        %v748 = vpack.c.bf16 %v746, %v746
        %v749 = vpack.c.bf16 %v747, %v747
        %751 = vrot.lane.b32.xlu0 %v618, 112
        %v752 = vpop.permute.xlu0 %751
        %753 = vrot.lane.b32.xlu0 %v618, 96
        %v754 = vpop.permute.xlu0 %753
        %755 = vrot.lane.b32.xlu0 %v752, 96
        %v756 = vpop.permute.xlu0 %755
        %v759 = vcombine.high %v754, 0.0
        %v761 = vunpack.c.l.s4 1983009808
        %v762 = vunpack.c.0.s8 %v761
        %v763 = vlaneseq
        %v764 = vshrl.u32 %v763, 7
        %v765 = vsub.s32 %v762, %v764
        %v766 = vrot.slane %v754, %v765
        %v768 = vunpack.c.l.s4 1983009808
        %v769 = vunpack.c.0.s8 %v768
        %v770 = vlaneseq
        %v771 = vshrl.u32 %v770, 7
        %v772 = vsub.s32 %v769, %v771
        %v773 = vrot.slane %v759, %v772
        %v774 = vcombine.high %v756, 0.0
        %v776 = vunpack.c.l.s4 1983009808
        %v777 = vunpack.c.0.s8 %v776
        %v778 = vlaneseq
        %v779 = vshrl.u32 %v778, 7
        %v780 = vsub.s32 %v777, %v779
        %v781 = vrot.slane %v756, %v780
        %v783 = vunpack.c.l.s4 1983009808
        %v784 = vunpack.c.0.s8 %v783
        %v785 = vlaneseq
        %v786 = vshrl.u32 %v785, 7
        %v787 = vsub.s32 %v784, %v786
        %v788 = vrot.slane %v774, %v787
        %v789 = vcombine.low %v766, %v781
        %v790 = vcombine.high %v766, %v781
        %v792 = vunpack.c.l.s4 1934713408
        %v793 = vunpack.c.0.s8 %v792
        %v794 = vlaneseq
        %v795 = vshrl.u32 %v794, 7
        %v796 = vsub.s32 %v793, %v795
        %v797 = vrot.slane %v789, %v796
        %v799 = vunpack.c.l.s4 1934713408
        %v800 = vunpack.c.0.s8 %v799
        %v801 = vlaneseq
        %v802 = vshrl.u32 %v801, 7
        %v803 = vsub.s32 %v800, %v802
        %v804 = vrot.slane %v790, %v803
        %v805 = vcombine.low %v773, %v788
        %v806 = vcombine.high %v773, %v788
        %v808 = vunpack.c.l.s4 1934713408
        %v809 = vunpack.c.0.s8 %v808
        %v810 = vlaneseq
        %v811 = vshrl.u32 %v810, 7
        %v812 = vsub.s32 %v809, %v811
        %v813 = vrot.slane %v805, %v812
        %v815 = vunpack.c.l.s4 1934713408
        %v816 = vunpack.c.0.s8 %v815
        %v817 = vlaneseq
        %v818 = vshrl.u32 %v817, 7
        %v819 = vsub.s32 %v816, %v818
        %v820 = vrot.slane %v806, %v819
        %v821 = vcombine.high %v797, 0.0
        %v822 = vcombine.high %v804, 0.0
        %v823 = vcombine.high %v813, 0.0
        %v824 = vcombine.high %v820, 0.0
        %v825 = vcombine.low %v797, %v804
        %v827 = vunpack.c.l.s4 1983009808
        %v828 = vunpack.c.0.s8 %v827
        %v829 = vlaneseq
        %v830 = vshrl.u32 %v829, 7
        %v831 = vsub.s32 %v828, %v830
        %v832 = vrot.slane %v825, %v831
        %v833 = vcombine.low %v821, %v822
        %v835 = vunpack.c.l.s4 1983009808
        %v836 = vunpack.c.0.s8 %v835
        %v837 = vlaneseq
        %v838 = vshrl.u32 %v837, 7
        %v839 = vsub.s32 %v836, %v838
        %v840 = vrot.slane %v833, %v839
        %v841 = vcombine.low %v813, %v820
        %v843 = vunpack.c.l.s4 1983009808
        %v844 = vunpack.c.0.s8 %v843
        %v845 = vlaneseq
        %v846 = vshrl.u32 %v845, 7
        %v847 = vsub.s32 %v844, %v846
        %v848 = vrot.slane %v841, %v847
        %v849 = vcombine.low %v823, %v824
        %v851 = vunpack.c.l.s4 1983009808
        %v852 = vunpack.c.0.s8 %v851
        %v853 = vlaneseq
        %v854 = vshrl.u32 %v853, 7
        %v855 = vsub.s32 %v852, %v854
        %v856 = vrot.slane %v849, %v855
        %v857 = vcombine.low %v832, %v840
        %v859 = vunpack.c.l.s4 1934713408
        %v860 = vunpack.c.0.s8 %v859
        %v861 = vlaneseq
        %v862 = vshrl.u32 %v861, 7
        %v863 = vsub.s32 %v860, %v862
        %v864 = vrot.slane %v857, %v863
        %v865 = vcombine.low %v848, %v856
        %v867 = vunpack.c.l.s4 1934713408
        %v868 = vunpack.c.0.s8 %v867
        %v869 = vlaneseq
        %v870 = vshrl.u32 %v869, 7
        %v871 = vsub.s32 %v868, %v870
        %v872 = vrot.slane %v865, %v871
        %v873 = vcombine.low %v864, %v872
        %v874 = vcombine.high %v864, %v872
        %v875 = vpack.c.bf16 %v873, %v873
        %v876 = vpack.c.bf16 %v874, %v874
        %878 = vrot.lane.b32.xlu0 %v627, 112
        %v879 = vpop.permute.xlu0 %878
        %880 = vrot.lane.b32.xlu0 %v627, 64
        %v881 = vpop.permute.xlu0 %880
        %882 = vrot.lane.b32.xlu0 %v879, 64
        %v883 = vpop.permute.xlu0 %882
        %v886 = vcombine.high %v881, 0.0
        %v888 = vunpack.c.l.s4 1983009808
        %v889 = vunpack.c.0.s8 %v888
        %v890 = vlaneseq
        %v891 = vshrl.u32 %v890, 7
        %v892 = vsub.s32 %v889, %v891
        %v893 = vrot.slane %v881, %v892
        %v895 = vunpack.c.l.s4 1983009808
        %v896 = vunpack.c.0.s8 %v895
        %v897 = vlaneseq
        %v898 = vshrl.u32 %v897, 7
        %v899 = vsub.s32 %v896, %v898
        %v900 = vrot.slane %v886, %v899
        %v901 = vcombine.high %v883, 0.0
        %v903 = vunpack.c.l.s4 1983009808
        %v904 = vunpack.c.0.s8 %v903
        %v905 = vlaneseq
        %v906 = vshrl.u32 %v905, 7
        %v907 = vsub.s32 %v904, %v906
        %v908 = vrot.slane %v883, %v907
        %v910 = vunpack.c.l.s4 1983009808
        %v911 = vunpack.c.0.s8 %v910
        %v912 = vlaneseq
        %v913 = vshrl.u32 %v912, 7
        %v914 = vsub.s32 %v911, %v913
        %v915 = vrot.slane %v901, %v914
        %v916 = vcombine.low %v893, %v908
        %v917 = vcombine.high %v893, %v908
        %v919 = vunpack.c.l.s4 1934713408
        %v920 = vunpack.c.0.s8 %v919
        %v921 = vlaneseq
        %v922 = vshrl.u32 %v921, 7
        %v923 = vsub.s32 %v920, %v922
        %v924 = vrot.slane %v916, %v923
        %v926 = vunpack.c.l.s4 1934713408
        %v927 = vunpack.c.0.s8 %v926
        %v928 = vlaneseq
        %v929 = vshrl.u32 %v928, 7
        %v930 = vsub.s32 %v927, %v929
        %v931 = vrot.slane %v917, %v930
        %v932 = vcombine.low %v900, %v915
        %v933 = vcombine.high %v900, %v915
        %v935 = vunpack.c.l.s4 1934713408
        %v936 = vunpack.c.0.s8 %v935
        %v937 = vlaneseq
        %v938 = vshrl.u32 %v937, 7
        %v939 = vsub.s32 %v936, %v938
        %v940 = vrot.slane %v932, %v939
        %v942 = vunpack.c.l.s4 1934713408
        %v943 = vunpack.c.0.s8 %v942
        %v944 = vlaneseq
        %v945 = vshrl.u32 %v944, 7
        %v946 = vsub.s32 %v943, %v945
        %v947 = vrot.slane %v933, %v946
        %v948 = vcombine.high %v924, 0.0
        %v949 = vcombine.high %v931, 0.0
        %v950 = vcombine.high %v940, 0.0
        %v951 = vcombine.high %v947, 0.0
        %v952 = vcombine.low %v924, %v931
        %v954 = vunpack.c.l.s4 1983009808
        %v955 = vunpack.c.0.s8 %v954
        %v956 = vlaneseq
        %v957 = vshrl.u32 %v956, 7
        %v958 = vsub.s32 %v955, %v957
        %v959 = vrot.slane %v952, %v958
        %v960 = vcombine.low %v948, %v949
        %v962 = vunpack.c.l.s4 1983009808
        %v963 = vunpack.c.0.s8 %v962
        %v964 = vlaneseq
        %v965 = vshrl.u32 %v964, 7
        %v966 = vsub.s32 %v963, %v965
        %v967 = vrot.slane %v960, %v966
        %v968 = vcombine.low %v940, %v947
        %v970 = vunpack.c.l.s4 1983009808
        %v971 = vunpack.c.0.s8 %v970
        %v972 = vlaneseq
        %v973 = vshrl.u32 %v972, 7
        %v974 = vsub.s32 %v971, %v973
        %v975 = vrot.slane %v968, %v974
        %v976 = vcombine.low %v950, %v951
        %v978 = vunpack.c.l.s4 1983009808
        %v979 = vunpack.c.0.s8 %v978
        %v980 = vlaneseq
        %v981 = vshrl.u32 %v980, 7
        %v982 = vsub.s32 %v979, %v981
        %v983 = vrot.slane %v976, %v982
        %v984 = vcombine.low %v959, %v967
        %v986 = vunpack.c.l.s4 1934713408
        %v987 = vunpack.c.0.s8 %v986
        %v988 = vlaneseq
        %v989 = vshrl.u32 %v988, 7
        %v990 = vsub.s32 %v987, %v989
        %v991 = vrot.slane %v984, %v990
        %v992 = vcombine.low %v975, %v983
        %v994 = vunpack.c.l.s4 1934713408
        %v995 = vunpack.c.0.s8 %v994
        %v996 = vlaneseq
        %v997 = vshrl.u32 %v996, 7
        %v998 = vsub.s32 %v995, %v997
        %v999 = vrot.slane %v992, %v998
        %v1000 = vcombine.low %v991, %v999
        %v1001 = vcombine.high %v991, %v999
        %v1002 = vpack.c.bf16 %v1000, %v1000
        %v1003 = vpack.c.bf16 %v1001, %v1001
        %vm1004 = vcmask 130048
        %v1006 = vsel %vm1004, %v748, 0
        %v1009 = vsel %vm1004, %v875, 0
        %1011 = vmatprep.subr.bf16.mxu0 0
        %1012 = vmatpush1.bf16.xpose.msra.mxu0 0
        %1013 = vmatprep.subr.bf16.mxu0 0
        %1014 = vmatpush1.bf16.xpose.msra.mxu0 0
        %1015 = vmatprep.subr.bf16.mxu0 0
        %1016 = vmatpush1.bf16.xpose.msra.mxu0 0
        %1017 = vmatprep.subr.bf16.mxu0 0
        %1018 = vmatpush1.bf16.xpose.msra.mxu0 0
        %1019 = vmatprep.subr.bf16.mxu0 0
        %1020 = vmatpush1.bf16.xpose.msra.mxu0 0
        %1021 = vmatprep.subr.bf16.mxu0 0
        %1022 = vmatpush1.bf16.xpose.msra.mxu0 0
        %1023 = vmatprep.subr.bf16.mxu0 0
        %1024 = vmatpush1.bf16.xpose.msra.mxu0 0
        %1025 = vmatprep.subr.bf16.mxu0 0
        %1026 = vmatpush1.bf16.xpose.msra.mxu0 %v1009
        %1027 = vmatprep.subr.bf16.mxu0 0
        %1028 = vmatpush2.bf16.xpose.msra.mxu0 0
        %1029 = vmatprep.subr.bf16.mxu0 0
        %1030 = vmatpush2.bf16.xpose.msra.mxu0 0
        %1031 = vmatprep.subr.bf16.mxu0 0
        %1032 = vmatpush2.bf16.xpose.msra.mxu0 0
        %1033 = vmatprep.subr.bf16.mxu0 0
        %1034 = vmatpush2.bf16.xpose.msra.mxu0 0
        %1035 = vmatprep.subr.bf16.mxu0 0
        %1036 = vmatpush2.bf16.xpose.msra.mxu0 0
        %1037 = vmatprep.subr.bf16.mxu0 0
        %1038 = vmatpush2.bf16.xpose.msra.mxu0 0
        %1039 = vmatprep.subr.bf16.mxu0 0
        %1040 = vmatpush2.bf16.xpose.msra.mxu0 0
        %1041 = vmatprep.subr.bf16.mxu0 0
        %1042 = vmatpush2.bf16.xpose.msra.mxu0 0
        %1043 = vmatprep.mubr.bf16.mxu0 0
        %1044 = vmatmul.mubr.bf16.gmra.mxu0 %v1006
        %v1045 = vpop.f32.mrf.mxu0
        %v1046 = vadd.f32 %v541, %v1045
        %v1047 = vpop.f32.mrf.mxu0
        %v1048 = vpop.f32.mrf.mxu0
        %v1049 = vpop.f32.mrf.mxu0
        %1050 = vdwg.mxu0
        %v1052 = vsel %vm1004, %v749, 0
        %v1055 = vsel %vm1004, %v876, 0
        %1057 = vmatprep.subr.bf16.mxu0 0
        %1058 = vmatpush1.bf16.xpose.msra.mxu0 0
        %1059 = vmatprep.subr.bf16.mxu0 0
        %1060 = vmatpush1.bf16.xpose.msra.mxu0 0
        %1061 = vmatprep.subr.bf16.mxu0 0
        %1062 = vmatpush1.bf16.xpose.msra.mxu0 0
        %1063 = vmatprep.subr.bf16.mxu0 0
        %1064 = vmatpush1.bf16.xpose.msra.mxu0 0
        %1065 = vmatprep.subr.bf16.mxu0 0
        %1066 = vmatpush1.bf16.xpose.msra.mxu0 0
        %1067 = vmatprep.subr.bf16.mxu0 0
        %1068 = vmatpush1.bf16.xpose.msra.mxu0 0
        %1069 = vmatprep.subr.bf16.mxu0 0
        %1070 = vmatpush1.bf16.xpose.msra.mxu0 0
        %1071 = vmatprep.subr.bf16.mxu0 0
        %1072 = vmatpush1.bf16.xpose.msra.mxu0 %v1055
        %1073 = vmatprep.subr.bf16.mxu0 0
        %1074 = vmatpush2.bf16.xpose.msra.mxu0 0
        %1075 = vmatprep.subr.bf16.mxu0 0
        %1076 = vmatpush2.bf16.xpose.msra.mxu0 0
        %1077 = vmatprep.subr.bf16.mxu0 0
        %1078 = vmatpush2.bf16.xpose.msra.mxu0 0
        %1079 = vmatprep.subr.bf16.mxu0 0
        %1080 = vmatpush2.bf16.xpose.msra.mxu0 0
        %1081 = vmatprep.subr.bf16.mxu0 0
        %1082 = vmatpush2.bf16.xpose.msra.mxu0 0
        %1083 = vmatprep.subr.bf16.mxu0 0
        %1084 = vmatpush2.bf16.xpose.msra.mxu0 0
        %1085 = vmatprep.subr.bf16.mxu0 0
        %1086 = vmatpush2.bf16.xpose.msra.mxu0 0
        %1087 = vmatprep.subr.bf16.mxu0 0
        %1088 = vmatpush2.bf16.xpose.msra.mxu0 0
        %1089 = vmatprep.mubr.bf16.mxu0 0
        %1090 = vmatmul.mubr.bf16.gmra.mxu0 %v1052
        %v1091 = vpop.f32.mrf.mxu0
        %v1092 = vadd.f32 %v541, %v1091
        %v1093 = vpop.f32.mrf.mxu0
        %v1094 = vpop.f32.mrf.mxu0
        %v1095 = vpop.f32.mrf.mxu0
        %1096 = vdwg.mxu0
        %vm1097 = vcmask 64512
        %v1098 = vsel %vm1097, %v1046, -inf
        %1099 = vmax.xlane.f32.xlu0 %v1098
        %v1100 = vpop.xlane.xlu0 %1099
        %v1101 = vsel %vm1097, %v1092, -inf
        %1102 = vmax.xlane.f32.xlu0 %v1101
        %v1103 = vpop.xlane.xlu0 %1102
        %v1104 = vsub.f32 %v1046, %v1100
        %v1105 = vsub.f32 %v1092, %v1103
        %v1106 = vmul.f32 %v1104, 1.442695
        %v1107 = vpow.pop %v1106
        %v1108 = vmul.f32 %v1105, 1.442695
        %v1109 = vpow.pop %v1108
        %v1110 = vsel %vm1097, %v1107, 0.0
        %1111 = vadd.xlane.f32.xlu0 %v1110
        %v1112 = vpop.xlane.xlu0 %1111
        %v1113 = vsel %vm1097, %v1109, 0.0
        %1114 = vadd.xlane.f32.xlu0 %v1113
        %v1115 = vpop.xlane.xlu0 %1114
        %v1116 = vrcp.pop %v1112
        %v1117 = vrcp.pop %v1115
        %v1118 = vmul.f32 %v1107, %v1116
        %v1119 = vmul.f32 %v1109, %v1117
        %v1120 = vpack.c.bf16 %v1118, %v1118
        %v1121 = vpack.c.bf16 %v1119, %v1119
        %v1123 = vsel %vm1097, %v1120, 0
        %vm1125 = vcmask 1043456
        %v1127 = vsel %vm1125, %v1002, 0
        %1129 = vmatprep.subr.bf16.mxu0 0
        %1130 = vmatpush1.bf16.msra.mxu0 0
        %1131 = vmatprep.subr.bf16.mxu0 0
        %1132 = vmatpush1.bf16.msra.mxu0 0
        %1133 = vmatprep.subr.bf16.mxu0 0
        %1134 = vmatpush1.bf16.msra.mxu0 0
        %1135 = vmatprep.subr.bf16.mxu0 0
        %1136 = vmatpush1.bf16.msra.mxu0 0
        %1137 = vmatprep.subr.bf16.mxu0 0
        %1138 = vmatpush1.bf16.msra.mxu0 0
        %1139 = vmatprep.subr.bf16.mxu0 0
        %1140 = vmatpush1.bf16.msra.mxu0 0
        %1141 = vmatprep.subr.bf16.mxu0 0
        %1142 = vmatpush1.bf16.msra.mxu0 0
        %1143 = vmatprep.subr.bf16.mxu0 0
        %1144 = vmatpush1.bf16.msra.mxu0 %v1127
        %1145 = vmatprep.subr.bf16.mxu0 0
        %1146 = vmatpush2.bf16.msra.mxu0 0
        %1147 = vmatprep.subr.bf16.mxu0 0
        %1148 = vmatpush2.bf16.msra.mxu0 0
        %1149 = vmatprep.subr.bf16.mxu0 0
        %1150 = vmatpush2.bf16.msra.mxu0 0
        %1151 = vmatprep.subr.bf16.mxu0 0
        %1152 = vmatpush2.bf16.msra.mxu0 0
        %1153 = vmatprep.subr.bf16.mxu0 0
        %1154 = vmatpush2.bf16.msra.mxu0 0
        %1155 = vmatprep.subr.bf16.mxu0 0
        %1156 = vmatpush2.bf16.msra.mxu0 0
        %1157 = vmatprep.subr.bf16.mxu0 0
        %1158 = vmatpush2.bf16.msra.mxu0 0
        %1159 = vmatprep.subr.bf16.mxu0 0
        %1160 = vmatpush2.bf16.msra.mxu0 0
        %1161 = vmatprep.mubr.bf16.mxu0 0
        %1162 = vmatmul.mubr.bf16.gmra.mxu0 %v1123
        %v1163 = vpop.f32.mrf.mxu0
        %v1164 = vadd.f32 0.0, %v1163
        %v1165 = vpop.f32.mrf.mxu0
        %v1166 = vpop.f32.mrf.mxu0
        %v1167 = vpop.f32.mrf.mxu0
        %1168 = vdwg.mxu0
        %v1170 = vsel %vm1097, %v1121, 0
        %v1173 = vsel %vm1125, %v1003, 0
        %1175 = vmatprep.subr.bf16.mxu0 0
        %1176 = vmatpush1.bf16.msra.mxu0 0
        %1177 = vmatprep.subr.bf16.mxu0 0
        %1178 = vmatpush1.bf16.msra.mxu0 0
        %1179 = vmatprep.subr.bf16.mxu0 0
        %1180 = vmatpush1.bf16.msra.mxu0 0
        %1181 = vmatprep.subr.bf16.mxu0 0
        %1182 = vmatpush1.bf16.msra.mxu0 0
        %1183 = vmatprep.subr.bf16.mxu0 0
        %1184 = vmatpush1.bf16.msra.mxu0 0
        %1185 = vmatprep.subr.bf16.mxu0 0
        %1186 = vmatpush1.bf16.msra.mxu0 0
        %1187 = vmatprep.subr.bf16.mxu0 0
        %1188 = vmatpush1.bf16.msra.mxu0 0
        %1189 = vmatprep.subr.bf16.mxu0 0
        %1190 = vmatpush1.bf16.msra.mxu0 %v1173
        %1191 = vmatprep.subr.bf16.mxu0 0
        %1192 = vmatpush2.bf16.msra.mxu0 0
        %1193 = vmatprep.subr.bf16.mxu0 0
        %1194 = vmatpush2.bf16.msra.mxu0 0
        %1195 = vmatprep.subr.bf16.mxu0 0
        %1196 = vmatpush2.bf16.msra.mxu0 0
        %1197 = vmatprep.subr.bf16.mxu0 0
        %1198 = vmatpush2.bf16.msra.mxu0 0
        %1199 = vmatprep.subr.bf16.mxu0 0
        %1200 = vmatpush2.bf16.msra.mxu0 0
        %1201 = vmatprep.subr.bf16.mxu0 0
        %1202 = vmatpush2.bf16.msra.mxu0 0
        %1203 = vmatprep.subr.bf16.mxu0 0
        %1204 = vmatpush2.bf16.msra.mxu0 0
        %1205 = vmatprep.subr.bf16.mxu0 0
        %1206 = vmatpush2.bf16.msra.mxu0 0
        %1207 = vmatprep.mubr.bf16.mxu0 0
        %1208 = vmatmul.mubr.bf16.gmra.mxu0 %v1170
        %v1209 = vpop.f32.mrf.mxu0
        %v1210 = vadd.f32 0.0, %v1209
        %v1211 = vpop.f32.mrf.mxu0
        %v1212 = vpop.f32.mrf.mxu0
        %v1213 = vpop.f32.mrf.mxu0
        %1214 = vdwg.mxu0
        %v1215 = vcombine.high %v1164, 0.0
        %v1217 = vunpack.c.l.s4 1983009808
        %v1218 = vunpack.c.0.s8 %v1217
        %v1219 = vlaneseq
        %v1220 = vshrl.u32 %v1219, 7
        %v1221 = vsub.s32 %v1218, %v1220
        %v1222 = vrot.slane %v1164, %v1221
        %v1224 = vunpack.c.l.s4 1983009808
        %v1225 = vunpack.c.0.s8 %v1224
        %v1226 = vlaneseq
        %v1227 = vshrl.u32 %v1226, 7
        %v1228 = vsub.s32 %v1225, %v1227
        %v1229 = vrot.slane %v1215, %v1228
        %v1230 = vcombine.high %v1210, 0.0
        %v1232 = vunpack.c.l.s4 1983009808
        %v1233 = vunpack.c.0.s8 %v1232
        %v1234 = vlaneseq
        %v1235 = vshrl.u32 %v1234, 7
        %v1236 = vsub.s32 %v1233, %v1235
        %v1237 = vrot.slane %v1210, %v1236
        %v1239 = vunpack.c.l.s4 1983009808
        %v1240 = vunpack.c.0.s8 %v1239
        %v1241 = vlaneseq
        %v1242 = vshrl.u32 %v1241, 7
        %v1243 = vsub.s32 %v1240, %v1242
        %v1244 = vrot.slane %v1230, %v1243
        %v1245 = vcombine.low %v1222, %v1237
        %v1246 = vcombine.high %v1222, %v1237
        %v1248 = vunpack.c.l.s4 1934713408
        %v1249 = vunpack.c.0.s8 %v1248
        %v1250 = vlaneseq
        %v1251 = vshrl.u32 %v1250, 7
        %v1252 = vsub.s32 %v1249, %v1251
        %v1253 = vrot.slane %v1245, %v1252
        %v1255 = vunpack.c.l.s4 1934713408
        %v1256 = vunpack.c.0.s8 %v1255
        %v1257 = vlaneseq
        %v1258 = vshrl.u32 %v1257, 7
        %v1259 = vsub.s32 %v1256, %v1258
        %v1260 = vrot.slane %v1246, %v1259
        %v1261 = vcombine.low %v1229, %v1244
        %v1262 = vcombine.high %v1229, %v1244
        %v1264 = vunpack.c.l.s4 1934713408
        %v1265 = vunpack.c.0.s8 %v1264
        %v1266 = vlaneseq
        %v1267 = vshrl.u32 %v1266, 7
        %v1268 = vsub.s32 %v1265, %v1267
        %v1269 = vrot.slane %v1261, %v1268
        %v1271 = vunpack.c.l.s4 1934713408
        %v1272 = vunpack.c.0.s8 %v1271
        %v1273 = vlaneseq
        %v1274 = vshrl.u32 %v1273, 7
        %v1275 = vsub.s32 %v1272, %v1274
        %v1276 = vrot.slane %v1262, %v1275
        %v1277 = vcombine.high %v1253, 0.0
        %v1278 = vcombine.high %v1260, 0.0
        %v1279 = vcombine.high %v1269, 0.0
        %v1280 = vcombine.high %v1276, 0.0
        %v1281 = vcombine.low %v1253, %v1260
        %v1283 = vunpack.c.l.s4 1983009808
        %v1284 = vunpack.c.0.s8 %v1283
        %v1285 = vlaneseq
        %v1286 = vshrl.u32 %v1285, 7
        %v1287 = vsub.s32 %v1284, %v1286
        %v1288 = vrot.slane %v1281, %v1287
        %v1289 = vcombine.low %v1277, %v1278
        %v1291 = vunpack.c.l.s4 1983009808
        %v1292 = vunpack.c.0.s8 %v1291
        %v1293 = vlaneseq
        %v1294 = vshrl.u32 %v1293, 7
        %v1295 = vsub.s32 %v1292, %v1294
        %v1296 = vrot.slane %v1289, %v1295
        %v1297 = vcombine.low %v1269, %v1276
        %v1299 = vunpack.c.l.s4 1983009808
        %v1300 = vunpack.c.0.s8 %v1299
        %v1301 = vlaneseq
        %v1302 = vshrl.u32 %v1301, 7
        %v1303 = vsub.s32 %v1300, %v1302
        %v1304 = vrot.slane %v1297, %v1303
        %v1305 = vcombine.low %v1279, %v1280
        %v1307 = vunpack.c.l.s4 1983009808
        %v1308 = vunpack.c.0.s8 %v1307
        %v1309 = vlaneseq
        %v1310 = vshrl.u32 %v1309, 7
        %v1311 = vsub.s32 %v1308, %v1310
        %v1312 = vrot.slane %v1305, %v1311
        %v1313 = vcombine.low %v1288, %v1296
        %v1315 = vunpack.c.l.s4 1934713408
        %v1316 = vunpack.c.0.s8 %v1315
        %v1317 = vlaneseq
        %v1318 = vshrl.u32 %v1317, 7
        %v1319 = vsub.s32 %v1316, %v1318
        %v1320 = vrot.slane %v1313, %v1319
        %v1321 = vcombine.low %v1304, %v1312
        %v1323 = vunpack.c.l.s4 1934713408
        %v1324 = vunpack.c.0.s8 %v1323
        %v1325 = vlaneseq
        %v1326 = vshrl.u32 %v1325, 7
        %v1327 = vsub.s32 %v1324, %v1326
        %v1328 = vrot.slane %v1321, %v1327
        %v1329 = vcombine.low %v1320, %v1328
        %v1330 = vcombine.high %v1320, %v1328
        %1332 = vrot.lane.b32.xlu0 %v1330, 16
        %v1333 = vpop.permute.xlu0 %1332
        %v1335 = vsel %vm1004, %v1329, %v1333
        %v1336 = vpack.c.bf16 %v1335, %v1335
        %v1337 = vld [vmem:[%s5] sm:$0xf]
        %v1338 = vld [vmem:[%s5 + $0x4] sm:$0xf]
        %v1339 = vld [vmem:[%s5 + $0x8] sm:$0xf]
        %v1340 = vld [vmem:[%s5 + $0xc] sm:$0xf]
        %v1341 = vlaneseq
        %v1342 = vshrl.u32 %v1341, 7
        %v1343 = vsub.s32 3, %v1342
        %v1344 = vrot.slane %v524, %v1343
        %v1349 = vunpack.c.l.b16 %v1337
        %v1350 = vunpack.c.l.b16 %v1338
        %v1351 = vunpack.c.l.b16 %v1339
        %v1352 = vunpack.c.l.b16 %v1340
        %v1353 = vpack.c.b16 %v1350, %v1349
        %v1354 = vpack.c.b16 %v1352, %v1351
        %v1358 = vsel %vm561, %v1336, 0
        %1360 = vmatprep.subr.bf16.mxu0 0
        %1361 = vmatpush1.bf16.msra.mxu0 0
        %1362 = vmatprep.subr.bf16.mxu0 0
        %1363 = vmatpush1.bf16.msra.mxu0 0
        %1364 = vmatprep.subr.bf16.mxu0 0
        %1365 = vmatpush1.bf16.msra.mxu0 0
        %1366 = vmatprep.subr.bf16.mxu0 0
        %1367 = vmatpush1.bf16.msra.mxu0 0
        %1368 = vmatprep.subr.bf16.mxu0 0
        %1369 = vmatpush1.bf16.msra.mxu0 0
        %1370 = vmatprep.subr.bf16.mxu0 0
        %1371 = vmatpush1.bf16.msra.mxu0 0
        %1372 = vmatprep.subr.bf16.mxu0 0
        %1373 = vmatpush1.bf16.msra.mxu0 %v1354
        %1374 = vmatprep.subr.bf16.mxu0 0
        %1375 = vmatpush1.bf16.msra.mxu0 %v1353
        %1376 = vmatprep.subr.bf16.mxu0 0
        %1377 = vmatpush2.bf16.msra.mxu0 0
        %1378 = vmatprep.subr.bf16.mxu0 0
        %1379 = vmatpush2.bf16.msra.mxu0 0
        %1380 = vmatprep.subr.bf16.mxu0 0
        %1381 = vmatpush2.bf16.msra.mxu0 0
        %1382 = vmatprep.subr.bf16.mxu0 0
        %1383 = vmatpush2.bf16.msra.mxu0 0
        %1384 = vmatprep.subr.bf16.mxu0 0
        %1385 = vmatpush2.bf16.msra.mxu0 0
        %1386 = vmatprep.subr.bf16.mxu0 0
        %1387 = vmatpush2.bf16.msra.mxu0 0
        %1388 = vmatprep.subr.bf16.mxu0 0
        %1389 = vmatpush2.bf16.msra.mxu0 0
        %1390 = vmatprep.subr.bf16.mxu0 0
        %1391 = vmatpush2.bf16.msra.mxu0 0
        %1392 = vmatprep.mubr.bf16.mxu0 0
        %1393 = vmatmul.mubr.bf16.gmra.mxu0 %v1358
        %v1394 = vpop.f32.mrf.mxu0
        %v1395 = vadd.f32 %v1344, %v1394
        %v1396 = vpop.f32.mrf.mxu0
        %v1397 = vpop.f32.mrf.mxu0
        %v1398 = vpop.f32.mrf.mxu0
        %1399 = vdwg.mxu0
        %v1400 = vadd.f32 %v1395, %v529
        %v1401 = vsel %vm561, %v1400, 0.0
        %1402 = vadd.xlane.f32.xlu0 %v1401
        %v1403 = vpop.xlane.xlu0 %1402
        %v1404 = vrcp.pop 32.0
        %v1405 = vmul.f32 %v1403, %v1404
        %v1406 = vsub.f32 %v1400, %v1405
        %v1407 = vmul.f32 %v1406, %v1406
        %v1408 = vsel %vm561, %v1407, 0.0
        %1409 = vadd.xlane.f32.xlu0 %v1408
        %v1410 = vpop.xlane.xlu0 %1409
        %v1411 = vmul.f32 %v1410, %v1404
        %v1412 = vadd.f32 %v1411, 1e-05
        %v1413 = vrsqrt.pop %v1412
        %v1414 = vmul.f32 %v1406, %v1413
        %v1415 = vlaneseq
        %v1416 = vshrl.u32 %v1415, 7
        %v1417 = vsub.s32 4, %v1416
        %v1418 = vrot.slane %v524, %v1417
        %v1419 = vmul.f32 %v1414, %v1418
        %v1420 = vlaneseq
        %v1421 = vshrl.u32 %v1420, 7
        %v1422 = vsub.s32 5, %v1421
        %v1423 = vrot.slane %v524, %v1422
        %v1424 = vadd.f32 %v1419, %v1423
        %v1425 = vmul.f32 %v1424, %v535
        %v1426 = vpack.c.bf16 %v1425, %v1425
        %v1427 = vld [vmem:[%s6] sm:$0xf]
        %v1428 = vld [vmem:[%s6 + $0x4] sm:$0xf]
        %v1429 = vld [vmem:[%s6 + $0x8] sm:$0xf]
        %v1430 = vld [vmem:[%s6 + $0xc] sm:$0xf]
        %v1431 = vlaneseq
        %v1432 = vshrl.u32 %v1431, 7
        %v1433 = vsub.s32 6, %v1432
        %v1434 = vrot.slane %v524, %v1433
        %v1439 = vunpack.c.l.b16 %v1427
        %v1440 = vunpack.c.l.b16 %v1428
        %v1441 = vunpack.c.l.b16 %v1429
        %v1442 = vunpack.c.l.b16 %v1430
        %v1443 = vpack.c.b16 %v1440, %v1439
        %v1444 = vpack.c.b16 %v1442, %v1441
        %v1448 = vsel %vm561, %v1426, 0
        %1450 = vmatprep.subr.bf16.mxu0 0
        %1451 = vmatpush1.bf16.msra.mxu0 0
        %1452 = vmatprep.subr.bf16.mxu0 0
        %1453 = vmatpush1.bf16.msra.mxu0 0
        %1454 = vmatprep.subr.bf16.mxu0 0
        %1455 = vmatpush1.bf16.msra.mxu0 0
        %1456 = vmatprep.subr.bf16.mxu0 0
        %1457 = vmatpush1.bf16.msra.mxu0 0
        %1458 = vmatprep.subr.bf16.mxu0 0
        %1459 = vmatpush1.bf16.msra.mxu0 0
        %1460 = vmatprep.subr.bf16.mxu0 0
        %1461 = vmatpush1.bf16.msra.mxu0 0
        %1462 = vmatprep.subr.bf16.mxu0 0
        %1463 = vmatpush1.bf16.msra.mxu0 %v1444
        %1464 = vmatprep.subr.bf16.mxu0 0
        %1465 = vmatpush1.bf16.msra.mxu0 %v1443
        %1466 = vmatprep.subr.bf16.mxu0 0
        %1467 = vmatpush2.bf16.msra.mxu0 0
        %1468 = vmatprep.subr.bf16.mxu0 0
        %1469 = vmatpush2.bf16.msra.mxu0 0
        %1470 = vmatprep.subr.bf16.mxu0 0
        %1471 = vmatpush2.bf16.msra.mxu0 0
        %1472 = vmatprep.subr.bf16.mxu0 0
        %1473 = vmatpush2.bf16.msra.mxu0 0
        %1474 = vmatprep.subr.bf16.mxu0 0
        %1475 = vmatpush2.bf16.msra.mxu0 0
        %1476 = vmatprep.subr.bf16.mxu0 0
        %1477 = vmatpush2.bf16.msra.mxu0 0
        %1478 = vmatprep.subr.bf16.mxu0 0
        %1479 = vmatpush2.bf16.msra.mxu0 0
        %1480 = vmatprep.subr.bf16.mxu0 0
        %1481 = vmatpush2.bf16.msra.mxu0 0
        %1482 = vmatprep.mubr.bf16.mxu0 0
        %1483 = vmatmul.mubr.bf16.gmra.mxu0 %v1448
        %v1484 = vpop.f32.mrf.mxu0
        %v1485 = vadd.f32 %v1434, %v1484
        %v1486 = vpop.f32.mrf.mxu0
        %v1487 = vpop.f32.mrf.mxu0
        %v1488 = vpop.f32.mrf.mxu0
        %1489 = vdwg.mxu0
        %v1490 = vld [vmem:[%s7] sm:$0xf]
        %v1491 = vld [vmem:[%s7 + $0x4] sm:$0xf]
        %v1492 = vld [vmem:[%s7 + $0x8] sm:$0xf]
        %v1493 = vld [vmem:[%s7 + $0xc] sm:$0xf]
        %v1496 = vunpack.c.l.b16 %v527
        %v1497 = vunpack.c.l.b16 %v528
        %v1498 = vpack.c.b16 %v1497, %v1496
        %v1503 = vunpack.c.l.b16 %v1490
        %v1504 = vunpack.c.l.b16 %v1491
        %v1505 = vunpack.c.l.b16 %v1492
        %v1506 = vunpack.c.l.b16 %v1493
        %v1507 = vpack.c.b16 %v1504, %v1503
        %v1508 = vpack.c.b16 %v1506, %v1505
        %v1512 = vsel %vm561, %v1498, 0
        %1514 = vmatprep.subr.bf16.mxu0 0
        %1515 = vmatpush1.bf16.msra.mxu0 0
        %1516 = vmatprep.subr.bf16.mxu0 0
        %1517 = vmatpush1.bf16.msra.mxu0 0
        %1518 = vmatprep.subr.bf16.mxu0 0
        %1519 = vmatpush1.bf16.msra.mxu0 0
        %1520 = vmatprep.subr.bf16.mxu0 0
        %1521 = vmatpush1.bf16.msra.mxu0 0
        %1522 = vmatprep.subr.bf16.mxu0 0
        %1523 = vmatpush1.bf16.msra.mxu0 0
        %1524 = vmatprep.subr.bf16.mxu0 0
        %1525 = vmatpush1.bf16.msra.mxu0 0
        %1526 = vmatprep.subr.bf16.mxu0 0
        %1527 = vmatpush1.bf16.msra.mxu0 %v1508
        %1528 = vmatprep.subr.bf16.mxu0 0
        %1529 = vmatpush1.bf16.msra.mxu0 %v1507
        %1530 = vmatprep.subr.bf16.mxu0 0
        %1531 = vmatpush2.bf16.msra.mxu0 0
        %1532 = vmatprep.subr.bf16.mxu0 0
        %1533 = vmatpush2.bf16.msra.mxu0 0
        %1534 = vmatprep.subr.bf16.mxu0 0
        %1535 = vmatpush2.bf16.msra.mxu0 0
        %1536 = vmatprep.subr.bf16.mxu0 0
        %1537 = vmatpush2.bf16.msra.mxu0 0
        %1538 = vmatprep.subr.bf16.mxu0 0
        %1539 = vmatpush2.bf16.msra.mxu0 0
        %1540 = vmatprep.subr.bf16.mxu0 0
        %1541 = vmatpush2.bf16.msra.mxu0 0
        %1542 = vmatprep.subr.bf16.mxu0 0
        %1543 = vmatpush2.bf16.msra.mxu0 0
        %1544 = vmatprep.subr.bf16.mxu0 0
        %1545 = vmatpush2.bf16.msra.mxu0 0
        %1546 = vmatprep.mubr.bf16.mxu0 0
        %1547 = vmatmul.mubr.bf16.gmra.mxu0 %v1512
        %v1548 = vpop.f32.mrf.mxu0
        %v1549 = vadd.f32 0.0, %v1548
        %v1550 = vpop.f32.mrf.mxu0
        %v1551 = vpop.f32.mrf.mxu0
        %v1552 = vadd.f32 0.0, %v1551
        %v1553 = vpop.f32.mrf.mxu0
        %1554 = vdwg.mxu0
        %v1555 = vlaneseq
        %v1556 = vshrl.u32 %v1555, 7
        %v1557 = vsub.s32 7, %v1556
        %v1558 = vrot.slane %v524, %v1557
        %v1559 = vadd.f32 %v1549, %v1558
        %v1560 = vadd.f32 %v1552, %v1558
        %v1561 = vlaneseq
        %v1562 = vshrl.u32 %v1561, 7
        %v1563 = vsub.s32 0, %v1562
        %v1564 = vrot.slane %v525, %v1563
        %1566 = vrot.lane.b32.xlu0 %v1564, 32
        %v1567 = vpop.permute.xlu0 %1566
        %v1569 = vadd.f32 %v1549, %v1567
        %v1570 = vadd.f32 %v1552, %v1567
        %1572 = vrot.lane.b32.xlu0 %v1485, 112
        %v1573 = vpop.permute.xlu0 %1572
        %v1575 = vcombine.high %v1485, 0.0
        %v1577 = vunpack.c.l.s4 1983009808
        %v1578 = vunpack.c.0.s8 %v1577
        %v1579 = vlaneseq
        %v1580 = vshrl.u32 %v1579, 7
        %v1581 = vsub.s32 %v1578, %v1580
        %v1582 = vrot.slane %v1485, %v1581
        %v1584 = vunpack.c.l.s4 1983009808
        %v1585 = vunpack.c.0.s8 %v1584
        %v1586 = vlaneseq
        %v1587 = vshrl.u32 %v1586, 7
        %v1588 = vsub.s32 %v1585, %v1587
        %v1589 = vrot.slane %v1575, %v1588
        %v1590 = vcombine.high %v1573, 0.0
        %v1592 = vunpack.c.l.s4 1983009808
        %v1593 = vunpack.c.0.s8 %v1592
        %v1594 = vlaneseq
        %v1595 = vshrl.u32 %v1594, 7
        %v1596 = vsub.s32 %v1593, %v1595
        %v1597 = vrot.slane %v1573, %v1596
        %v1599 = vunpack.c.l.s4 1983009808
        %v1600 = vunpack.c.0.s8 %v1599
        %v1601 = vlaneseq
        %v1602 = vshrl.u32 %v1601, 7
        %v1603 = vsub.s32 %v1600, %v1602
        %v1604 = vrot.slane %v1590, %v1603
        %v1605 = vcombine.low %v1582, %v1597
        %v1606 = vcombine.high %v1582, %v1597
        %v1608 = vunpack.c.l.s4 1934713408
        %v1609 = vunpack.c.0.s8 %v1608
        %v1610 = vlaneseq
        %v1611 = vshrl.u32 %v1610, 7
        %v1612 = vsub.s32 %v1609, %v1611
        %v1613 = vrot.slane %v1605, %v1612
        %v1615 = vunpack.c.l.s4 1934713408
        %v1616 = vunpack.c.0.s8 %v1615
        %v1617 = vlaneseq
        %v1618 = vshrl.u32 %v1617, 7
        %v1619 = vsub.s32 %v1616, %v1618
        %v1620 = vrot.slane %v1606, %v1619
        %v1621 = vcombine.low %v1589, %v1604
        %v1622 = vcombine.high %v1589, %v1604
        %v1624 = vunpack.c.l.s4 1934713408
        %v1625 = vunpack.c.0.s8 %v1624
        %v1626 = vlaneseq
        %v1627 = vshrl.u32 %v1626, 7
        %v1628 = vsub.s32 %v1625, %v1627
        %v1629 = vrot.slane %v1621, %v1628
        %v1631 = vunpack.c.l.s4 1934713408
        %v1632 = vunpack.c.0.s8 %v1631
        %v1633 = vlaneseq
        %v1634 = vshrl.u32 %v1633, 7
        %v1635 = vsub.s32 %v1632, %v1634
        %v1636 = vrot.slane %v1622, %v1635
        %v1637 = vcombine.high %v1613, 0.0
        %v1638 = vcombine.high %v1620, 0.0
        %v1639 = vcombine.high %v1629, 0.0
        %v1640 = vcombine.high %v1636, 0.0
        %v1641 = vcombine.low %v1613, %v1620
        %v1643 = vunpack.c.l.s4 1983009808
        %v1644 = vunpack.c.0.s8 %v1643
        %v1645 = vlaneseq
        %v1646 = vshrl.u32 %v1645, 7
        %v1647 = vsub.s32 %v1644, %v1646
        %v1648 = vrot.slane %v1641, %v1647
        %v1649 = vcombine.low %v1637, %v1638
        %v1651 = vunpack.c.l.s4 1983009808
        %v1652 = vunpack.c.0.s8 %v1651
        %v1653 = vlaneseq
        %v1654 = vshrl.u32 %v1653, 7
        %v1655 = vsub.s32 %v1652, %v1654
        %v1656 = vrot.slane %v1649, %v1655
        %v1657 = vcombine.low %v1629, %v1636
        %v1659 = vunpack.c.l.s4 1983009808
        %v1660 = vunpack.c.0.s8 %v1659
        %v1661 = vlaneseq
        %v1662 = vshrl.u32 %v1661, 7
        %v1663 = vsub.s32 %v1660, %v1662
        %v1664 = vrot.slane %v1657, %v1663
        %v1665 = vcombine.low %v1639, %v1640
        %v1667 = vunpack.c.l.s4 1983009808
        %v1668 = vunpack.c.0.s8 %v1667
        %v1669 = vlaneseq
        %v1670 = vshrl.u32 %v1669, 7
        %v1671 = vsub.s32 %v1668, %v1670
        %v1672 = vrot.slane %v1665, %v1671
        %v1673 = vcombine.low %v1648, %v1656
        %v1675 = vunpack.c.l.s4 1934713408
        %v1676 = vunpack.c.0.s8 %v1675
        %v1677 = vlaneseq
        %v1678 = vshrl.u32 %v1677, 7
        %v1679 = vsub.s32 %v1676, %v1678
        %v1680 = vrot.slane %v1673, %v1679
        %v1681 = vcombine.low %v1664, %v1672
        %v1683 = vunpack.c.l.s4 1934713408
        %v1684 = vunpack.c.0.s8 %v1683
        %v1685 = vlaneseq
        %v1686 = vshrl.u32 %v1685, 7
        %v1687 = vsub.s32 %v1684, %v1686
        %v1688 = vrot.slane %v1681, %v1687
        %v1689 = vcombine.low %v1680, %v1688
        %v1690 = vcombine.high %v1680, %v1688
        %v1691 = vpack.c.bf16 %v1689, %v1689
        %v1692 = vpack.c.bf16 %v1690, %v1690
        %1695 = vrot.lane.b32.xlu0 %v1559, 112
        %v1696 = vpop.permute.xlu0 %1695
        %1697 = vrot.lane.b32.xlu0 %v1560, 112
        %v1698 = vpop.permute.xlu0 %1697
        %v1701 = vcombine.high %v1559, 0.0
        %v1703 = vunpack.c.l.s4 1983009808
        %v1704 = vunpack.c.0.s8 %v1703
        %v1705 = vlaneseq
        %v1706 = vshrl.u32 %v1705, 7
        %v1707 = vsub.s32 %v1704, %v1706
        %v1708 = vrot.slane %v1559, %v1707
        %v1710 = vunpack.c.l.s4 1983009808
        %v1711 = vunpack.c.0.s8 %v1710
        %v1712 = vlaneseq
        %v1713 = vshrl.u32 %v1712, 7
        %v1714 = vsub.s32 %v1711, %v1713
        %v1715 = vrot.slane %v1701, %v1714
        %v1716 = vcombine.high %v1696, 0.0
        %v1718 = vunpack.c.l.s4 1983009808
        %v1719 = vunpack.c.0.s8 %v1718
        %v1720 = vlaneseq
        %v1721 = vshrl.u32 %v1720, 7
        %v1722 = vsub.s32 %v1719, %v1721
        %v1723 = vrot.slane %v1696, %v1722
        %v1725 = vunpack.c.l.s4 1983009808
        %v1726 = vunpack.c.0.s8 %v1725
        %v1727 = vlaneseq
        %v1728 = vshrl.u32 %v1727, 7
        %v1729 = vsub.s32 %v1726, %v1728
        %v1730 = vrot.slane %v1716, %v1729
        %v1731 = vcombine.low %v1708, %v1723
        %v1732 = vcombine.high %v1708, %v1723
        %v1734 = vunpack.c.l.s4 1934713408
        %v1735 = vunpack.c.0.s8 %v1734
        %v1736 = vlaneseq
        %v1737 = vshrl.u32 %v1736, 7
        %v1738 = vsub.s32 %v1735, %v1737
        %v1739 = vrot.slane %v1731, %v1738
        %v1741 = vunpack.c.l.s4 1934713408
        %v1742 = vunpack.c.0.s8 %v1741
        %v1743 = vlaneseq
        %v1744 = vshrl.u32 %v1743, 7
        %v1745 = vsub.s32 %v1742, %v1744
        %v1746 = vrot.slane %v1732, %v1745
        %v1747 = vcombine.low %v1715, %v1730
        %v1748 = vcombine.high %v1715, %v1730
        %v1750 = vunpack.c.l.s4 1934713408
        %v1751 = vunpack.c.0.s8 %v1750
        %v1752 = vlaneseq
        %v1753 = vshrl.u32 %v1752, 7
        %v1754 = vsub.s32 %v1751, %v1753
        %v1755 = vrot.slane %v1747, %v1754
        %v1757 = vunpack.c.l.s4 1934713408
        %v1758 = vunpack.c.0.s8 %v1757
        %v1759 = vlaneseq
        %v1760 = vshrl.u32 %v1759, 7
        %v1761 = vsub.s32 %v1758, %v1760
        %v1762 = vrot.slane %v1748, %v1761
        %v1763 = vcombine.high %v1739, 0.0
        %v1764 = vcombine.high %v1746, 0.0
        %v1765 = vcombine.high %v1755, 0.0
        %v1766 = vcombine.high %v1762, 0.0
        %v1767 = vcombine.high %v1560, 0.0
        %v1769 = vunpack.c.l.s4 1983009808
        %v1770 = vunpack.c.0.s8 %v1769
        %v1771 = vlaneseq
        %v1772 = vshrl.u32 %v1771, 7
        %v1773 = vsub.s32 %v1770, %v1772
        %v1774 = vrot.slane %v1560, %v1773
        %v1776 = vunpack.c.l.s4 1983009808
        %v1777 = vunpack.c.0.s8 %v1776
        %v1778 = vlaneseq
        %v1779 = vshrl.u32 %v1778, 7
        %v1780 = vsub.s32 %v1777, %v1779
        %v1781 = vrot.slane %v1767, %v1780
        %v1782 = vcombine.high %v1698, 0.0
        %v1784 = vunpack.c.l.s4 1983009808
        %v1785 = vunpack.c.0.s8 %v1784
        %v1786 = vlaneseq
        %v1787 = vshrl.u32 %v1786, 7
        %v1788 = vsub.s32 %v1785, %v1787
        %v1789 = vrot.slane %v1698, %v1788
        %v1791 = vunpack.c.l.s4 1983009808
        %v1792 = vunpack.c.0.s8 %v1791
        %v1793 = vlaneseq
        %v1794 = vshrl.u32 %v1793, 7
        %v1795 = vsub.s32 %v1792, %v1794
        %v1796 = vrot.slane %v1782, %v1795
        %v1797 = vcombine.low %v1774, %v1789
        %v1798 = vcombine.high %v1774, %v1789
        %v1800 = vunpack.c.l.s4 1934713408
        %v1801 = vunpack.c.0.s8 %v1800
        %v1802 = vlaneseq
        %v1803 = vshrl.u32 %v1802, 7
        %v1804 = vsub.s32 %v1801, %v1803
        %v1805 = vrot.slane %v1797, %v1804
        %v1807 = vunpack.c.l.s4 1934713408
        %v1808 = vunpack.c.0.s8 %v1807
        %v1809 = vlaneseq
        %v1810 = vshrl.u32 %v1809, 7
        %v1811 = vsub.s32 %v1808, %v1810
        %v1812 = vrot.slane %v1798, %v1811
        %v1813 = vcombine.low %v1781, %v1796
        %v1814 = vcombine.high %v1781, %v1796
        %v1816 = vunpack.c.l.s4 1934713408
        %v1817 = vunpack.c.0.s8 %v1816
        %v1818 = vlaneseq
        %v1819 = vshrl.u32 %v1818, 7
        %v1820 = vsub.s32 %v1817, %v1819
        %v1821 = vrot.slane %v1813, %v1820
        %v1823 = vunpack.c.l.s4 1934713408
        %v1824 = vunpack.c.0.s8 %v1823
        %v1825 = vlaneseq
        %v1826 = vshrl.u32 %v1825, 7
        %v1827 = vsub.s32 %v1824, %v1826
        %v1828 = vrot.slane %v1814, %v1827
        %v1829 = vcombine.high %v1805, 0.0
        %v1830 = vcombine.high %v1812, 0.0
        %v1831 = vcombine.high %v1821, 0.0
        %v1832 = vcombine.high %v1828, 0.0
        %v1833 = vcombine.low %v1739, %v1746
        %v1835 = vunpack.c.l.s4 1983009808
        %v1836 = vunpack.c.0.s8 %v1835
        %v1837 = vlaneseq
        %v1838 = vshrl.u32 %v1837, 7
        %v1839 = vsub.s32 %v1836, %v1838
        %v1840 = vrot.slane %v1833, %v1839
        %v1841 = vcombine.low %v1763, %v1764
        %v1843 = vunpack.c.l.s4 1983009808
        %v1844 = vunpack.c.0.s8 %v1843
        %v1845 = vlaneseq
        %v1846 = vshrl.u32 %v1845, 7
        %v1847 = vsub.s32 %v1844, %v1846
        %v1848 = vrot.slane %v1841, %v1847
        %v1849 = vcombine.low %v1755, %v1762
        %v1851 = vunpack.c.l.s4 1983009808
        %v1852 = vunpack.c.0.s8 %v1851
        %v1853 = vlaneseq
        %v1854 = vshrl.u32 %v1853, 7
        %v1855 = vsub.s32 %v1852, %v1854
        %v1856 = vrot.slane %v1849, %v1855
        %v1857 = vcombine.low %v1765, %v1766
        %v1859 = vunpack.c.l.s4 1983009808
        %v1860 = vunpack.c.0.s8 %v1859
        %v1861 = vlaneseq
        %v1862 = vshrl.u32 %v1861, 7
        %v1863 = vsub.s32 %v1860, %v1862
        %v1864 = vrot.slane %v1857, %v1863
        %v1865 = vcombine.low %v1840, %v1848
        %v1867 = vunpack.c.l.s4 1934713408
        %v1868 = vunpack.c.0.s8 %v1867
        %v1869 = vlaneseq
        %v1870 = vshrl.u32 %v1869, 7
        %v1871 = vsub.s32 %v1868, %v1870
        %v1872 = vrot.slane %v1865, %v1871
        %v1873 = vcombine.low %v1856, %v1864
        %v1875 = vunpack.c.l.s4 1934713408
        %v1876 = vunpack.c.0.s8 %v1875
        %v1877 = vlaneseq
        %v1878 = vshrl.u32 %v1877, 7
        %v1879 = vsub.s32 %v1876, %v1878
        %v1880 = vrot.slane %v1873, %v1879
        %v1881 = vcombine.low %v1872, %v1880
        %v1882 = vcombine.high %v1872, %v1880
        %v1883 = vcombine.low %v1805, %v1812
        %v1885 = vunpack.c.l.s4 1983009808
        %v1886 = vunpack.c.0.s8 %v1885
        %v1887 = vlaneseq
        %v1888 = vshrl.u32 %v1887, 7
        %v1889 = vsub.s32 %v1886, %v1888
        %v1890 = vrot.slane %v1883, %v1889
        %v1891 = vcombine.low %v1829, %v1830
        %v1893 = vunpack.c.l.s4 1983009808
        %v1894 = vunpack.c.0.s8 %v1893
        %v1895 = vlaneseq
        %v1896 = vshrl.u32 %v1895, 7
        %v1897 = vsub.s32 %v1894, %v1896
        %v1898 = vrot.slane %v1891, %v1897
        %v1899 = vcombine.low %v1821, %v1828
        %v1901 = vunpack.c.l.s4 1983009808
        %v1902 = vunpack.c.0.s8 %v1901
        %v1903 = vlaneseq
        %v1904 = vshrl.u32 %v1903, 7
        %v1905 = vsub.s32 %v1902, %v1904
        %v1906 = vrot.slane %v1899, %v1905
        %v1907 = vcombine.low %v1831, %v1832
        %v1909 = vunpack.c.l.s4 1983009808
        %v1910 = vunpack.c.0.s8 %v1909
        %v1911 = vlaneseq
        %v1912 = vshrl.u32 %v1911, 7
        %v1913 = vsub.s32 %v1910, %v1912
        %v1914 = vrot.slane %v1907, %v1913
        %v1915 = vcombine.low %v1890, %v1898
        %v1917 = vunpack.c.l.s4 1934713408
        %v1918 = vunpack.c.0.s8 %v1917
        %v1919 = vlaneseq
        %v1920 = vshrl.u32 %v1919, 7
        %v1921 = vsub.s32 %v1918, %v1920
        %v1922 = vrot.slane %v1915, %v1921
        %v1923 = vcombine.low %v1906, %v1914
        %v1925 = vunpack.c.l.s4 1934713408
        %v1926 = vunpack.c.0.s8 %v1925
        %v1927 = vlaneseq
        %v1928 = vshrl.u32 %v1927, 7
        %v1929 = vsub.s32 %v1926, %v1928
        %v1930 = vrot.slane %v1923, %v1929
        %v1931 = vcombine.low %v1922, %v1930
        %v1932 = vcombine.high %v1922, %v1930
        %v1933 = vpack.c.bf16 %v1931, %v1881
        %v1934 = vpack.c.bf16 %v1932, %v1882
        %1937 = vrot.lane.b32.xlu0 %v1569, 112
        %v1938 = vpop.permute.xlu0 %1937
        %1939 = vrot.lane.b32.xlu0 %v1570, 112
        %v1940 = vpop.permute.xlu0 %1939
        %1941 = vrot.lane.b32.xlu0 %v1569, 96
        %v1942 = vpop.permute.xlu0 %1941
        %1943 = vrot.lane.b32.xlu0 %v1570, 96
        %v1944 = vpop.permute.xlu0 %1943
        %1945 = vrot.lane.b32.xlu0 %v1938, 96
        %v1946 = vpop.permute.xlu0 %1945
        %1947 = vrot.lane.b32.xlu0 %v1940, 96
        %v1948 = vpop.permute.xlu0 %1947
        %v1953 = vcombine.high %v1942, 0.0
        %v1955 = vunpack.c.l.s4 1983009808
        %v1956 = vunpack.c.0.s8 %v1955
        %v1957 = vlaneseq
        %v1958 = vshrl.u32 %v1957, 7
        %v1959 = vsub.s32 %v1956, %v1958
        %v1960 = vrot.slane %v1942, %v1959
        %v1962 = vunpack.c.l.s4 1983009808
        %v1963 = vunpack.c.0.s8 %v1962
        %v1964 = vlaneseq
        %v1965 = vshrl.u32 %v1964, 7
        %v1966 = vsub.s32 %v1963, %v1965
        %v1967 = vrot.slane %v1953, %v1966
        %v1968 = vcombine.high %v1946, 0.0
        %v1970 = vunpack.c.l.s4 1983009808
        %v1971 = vunpack.c.0.s8 %v1970
        %v1972 = vlaneseq
        %v1973 = vshrl.u32 %v1972, 7
        %v1974 = vsub.s32 %v1971, %v1973
        %v1975 = vrot.slane %v1946, %v1974
        %v1977 = vunpack.c.l.s4 1983009808
        %v1978 = vunpack.c.0.s8 %v1977
        %v1979 = vlaneseq
        %v1980 = vshrl.u32 %v1979, 7
        %v1981 = vsub.s32 %v1978, %v1980
        %v1982 = vrot.slane %v1968, %v1981
        %v1983 = vcombine.low %v1960, %v1975
        %v1984 = vcombine.high %v1960, %v1975
        %v1986 = vunpack.c.l.s4 1934713408
        %v1987 = vunpack.c.0.s8 %v1986
        %v1988 = vlaneseq
        %v1989 = vshrl.u32 %v1988, 7
        %v1990 = vsub.s32 %v1987, %v1989
        %v1991 = vrot.slane %v1983, %v1990
        %v1993 = vunpack.c.l.s4 1934713408
        %v1994 = vunpack.c.0.s8 %v1993
        %v1995 = vlaneseq
        %v1996 = vshrl.u32 %v1995, 7
        %v1997 = vsub.s32 %v1994, %v1996
        %v1998 = vrot.slane %v1984, %v1997
        %v1999 = vcombine.low %v1967, %v1982
        %v2000 = vcombine.high %v1967, %v1982
        %v2002 = vunpack.c.l.s4 1934713408
        %v2003 = vunpack.c.0.s8 %v2002
        %v2004 = vlaneseq
        %v2005 = vshrl.u32 %v2004, 7
        %v2006 = vsub.s32 %v2003, %v2005
        %v2007 = vrot.slane %v1999, %v2006
        %v2009 = vunpack.c.l.s4 1934713408
        %v2010 = vunpack.c.0.s8 %v2009
        %v2011 = vlaneseq
        %v2012 = vshrl.u32 %v2011, 7
        %v2013 = vsub.s32 %v2010, %v2012
        %v2014 = vrot.slane %v2000, %v2013
        %v2015 = vcombine.high %v1991, 0.0
        %v2016 = vcombine.high %v1998, 0.0
        %v2017 = vcombine.high %v2007, 0.0
        %v2018 = vcombine.high %v2014, 0.0
        %v2019 = vcombine.high %v1944, 0.0
        %v2021 = vunpack.c.l.s4 1983009808
        %v2022 = vunpack.c.0.s8 %v2021
        %v2023 = vlaneseq
        %v2024 = vshrl.u32 %v2023, 7
        %v2025 = vsub.s32 %v2022, %v2024
        %v2026 = vrot.slane %v1944, %v2025
        %v2028 = vunpack.c.l.s4 1983009808
        %v2029 = vunpack.c.0.s8 %v2028
        %v2030 = vlaneseq
        %v2031 = vshrl.u32 %v2030, 7
        %v2032 = vsub.s32 %v2029, %v2031
        %v2033 = vrot.slane %v2019, %v2032
        %v2034 = vcombine.high %v1948, 0.0
        %v2036 = vunpack.c.l.s4 1983009808
        %v2037 = vunpack.c.0.s8 %v2036
        %v2038 = vlaneseq
        %v2039 = vshrl.u32 %v2038, 7
        %v2040 = vsub.s32 %v2037, %v2039
        %v2041 = vrot.slane %v1948, %v2040
        %v2043 = vunpack.c.l.s4 1983009808
        %v2044 = vunpack.c.0.s8 %v2043
        %v2045 = vlaneseq
        %v2046 = vshrl.u32 %v2045, 7
        %v2047 = vsub.s32 %v2044, %v2046
        %v2048 = vrot.slane %v2034, %v2047
        %v2049 = vcombine.low %v2026, %v2041
        %v2050 = vcombine.high %v2026, %v2041
        %v2052 = vunpack.c.l.s4 1934713408
        %v2053 = vunpack.c.0.s8 %v2052
        %v2054 = vlaneseq
        %v2055 = vshrl.u32 %v2054, 7
        %v2056 = vsub.s32 %v2053, %v2055
        %v2057 = vrot.slane %v2049, %v2056
        %v2059 = vunpack.c.l.s4 1934713408
        %v2060 = vunpack.c.0.s8 %v2059
        %v2061 = vlaneseq
        %v2062 = vshrl.u32 %v2061, 7
        %v2063 = vsub.s32 %v2060, %v2062
        %v2064 = vrot.slane %v2050, %v2063
        %v2065 = vcombine.low %v2033, %v2048
        %v2066 = vcombine.high %v2033, %v2048
        %v2068 = vunpack.c.l.s4 1934713408
        %v2069 = vunpack.c.0.s8 %v2068
        %v2070 = vlaneseq
        %v2071 = vshrl.u32 %v2070, 7
        %v2072 = vsub.s32 %v2069, %v2071
        %v2073 = vrot.slane %v2065, %v2072
        %v2075 = vunpack.c.l.s4 1934713408
        %v2076 = vunpack.c.0.s8 %v2075
        %v2077 = vlaneseq
        %v2078 = vshrl.u32 %v2077, 7
        %v2079 = vsub.s32 %v2076, %v2078
        %v2080 = vrot.slane %v2066, %v2079
        %v2081 = vcombine.high %v2057, 0.0
        %v2082 = vcombine.high %v2064, 0.0
        %v2083 = vcombine.high %v2073, 0.0
        %v2084 = vcombine.high %v2080, 0.0
        %v2085 = vcombine.low %v1991, %v1998
        %v2087 = vunpack.c.l.s4 1983009808
        %v2088 = vunpack.c.0.s8 %v2087
        %v2089 = vlaneseq
        %v2090 = vshrl.u32 %v2089, 7
        %v2091 = vsub.s32 %v2088, %v2090
        %v2092 = vrot.slane %v2085, %v2091
        %v2093 = vcombine.low %v2015, %v2016
        %v2095 = vunpack.c.l.s4 1983009808
        %v2096 = vunpack.c.0.s8 %v2095
        %v2097 = vlaneseq
        %v2098 = vshrl.u32 %v2097, 7
        %v2099 = vsub.s32 %v2096, %v2098
        %v2100 = vrot.slane %v2093, %v2099
        %v2101 = vcombine.low %v2007, %v2014
        %v2103 = vunpack.c.l.s4 1983009808
        %v2104 = vunpack.c.0.s8 %v2103
        %v2105 = vlaneseq
        %v2106 = vshrl.u32 %v2105, 7
        %v2107 = vsub.s32 %v2104, %v2106
        %v2108 = vrot.slane %v2101, %v2107
        %v2109 = vcombine.low %v2017, %v2018
        %v2111 = vunpack.c.l.s4 1983009808
        %v2112 = vunpack.c.0.s8 %v2111
        %v2113 = vlaneseq
        %v2114 = vshrl.u32 %v2113, 7
        %v2115 = vsub.s32 %v2112, %v2114
        %v2116 = vrot.slane %v2109, %v2115
        %v2117 = vcombine.low %v2092, %v2100
        %v2119 = vunpack.c.l.s4 1934713408
        %v2120 = vunpack.c.0.s8 %v2119
        %v2121 = vlaneseq
        %v2122 = vshrl.u32 %v2121, 7
        %v2123 = vsub.s32 %v2120, %v2122
        %v2124 = vrot.slane %v2117, %v2123
        %v2125 = vcombine.low %v2108, %v2116
        %v2127 = vunpack.c.l.s4 1934713408
        %v2128 = vunpack.c.0.s8 %v2127
        %v2129 = vlaneseq
        %v2130 = vshrl.u32 %v2129, 7
        %v2131 = vsub.s32 %v2128, %v2130
        %v2132 = vrot.slane %v2125, %v2131
        %v2133 = vcombine.low %v2124, %v2132
        %v2134 = vcombine.high %v2124, %v2132
        %v2135 = vcombine.low %v2057, %v2064
        %v2137 = vunpack.c.l.s4 1983009808
        %v2138 = vunpack.c.0.s8 %v2137
        %v2139 = vlaneseq
        %v2140 = vshrl.u32 %v2139, 7
        %v2141 = vsub.s32 %v2138, %v2140
        %v2142 = vrot.slane %v2135, %v2141
        %v2143 = vcombine.low %v2081, %v2082
        %v2145 = vunpack.c.l.s4 1983009808
        %v2146 = vunpack.c.0.s8 %v2145
        %v2147 = vlaneseq
        %v2148 = vshrl.u32 %v2147, 7
        %v2149 = vsub.s32 %v2146, %v2148
        %v2150 = vrot.slane %v2143, %v2149
        %v2151 = vcombine.low %v2073, %v2080
        %v2153 = vunpack.c.l.s4 1983009808
        %v2154 = vunpack.c.0.s8 %v2153
        %v2155 = vlaneseq
        %v2156 = vshrl.u32 %v2155, 7
        %v2157 = vsub.s32 %v2154, %v2156
        %v2158 = vrot.slane %v2151, %v2157
        %v2159 = vcombine.low %v2083, %v2084
        %v2161 = vunpack.c.l.s4 1983009808
        %v2162 = vunpack.c.0.s8 %v2161
        %v2163 = vlaneseq
        %v2164 = vshrl.u32 %v2163, 7
        %v2165 = vsub.s32 %v2162, %v2164
        %v2166 = vrot.slane %v2159, %v2165
        %v2167 = vcombine.low %v2142, %v2150
        %v2169 = vunpack.c.l.s4 1934713408
        %v2170 = vunpack.c.0.s8 %v2169
        %v2171 = vlaneseq
        %v2172 = vshrl.u32 %v2171, 7
        %v2173 = vsub.s32 %v2170, %v2172
        %v2174 = vrot.slane %v2167, %v2173
        %v2175 = vcombine.low %v2158, %v2166
        %v2177 = vunpack.c.l.s4 1934713408
        %v2178 = vunpack.c.0.s8 %v2177
        %v2179 = vlaneseq
        %v2180 = vshrl.u32 %v2179, 7
        %v2181 = vsub.s32 %v2178, %v2180
        %v2182 = vrot.slane %v2175, %v2181
        %v2183 = vcombine.low %v2174, %v2182
        %v2184 = vcombine.high %v2174, %v2182
        %v2185 = vpack.c.bf16 %v2183, %v2133
        %v2186 = vpack.c.bf16 %v2184, %v2134
        %v2188 = vsel %vm1004, %v1691, 0
        %v2191 = vsel %vm1004, %v1933, 0
        %2193 = vmatprep.subr.bf16.mxu0 0
        %2194 = vmatpush1.bf16.xpose.msra.mxu0 0
        %2195 = vmatprep.subr.bf16.mxu0 0
        %2196 = vmatpush1.bf16.xpose.msra.mxu0 0
        %2197 = vmatprep.subr.bf16.mxu0 0
        %2198 = vmatpush1.bf16.xpose.msra.mxu0 0
        %2199 = vmatprep.subr.bf16.mxu0 0
        %2200 = vmatpush1.bf16.xpose.msra.mxu0 0
        %2201 = vmatprep.subr.bf16.mxu0 0
        %2202 = vmatpush1.bf16.xpose.msra.mxu0 0
        %2203 = vmatprep.subr.bf16.mxu0 0
        %2204 = vmatpush1.bf16.xpose.msra.mxu0 0
        %2205 = vmatprep.subr.bf16.mxu0 0
        %2206 = vmatpush1.bf16.xpose.msra.mxu0 0
        %2207 = vmatprep.subr.bf16.mxu0 0
        %2208 = vmatpush1.bf16.xpose.msra.mxu0 %v2191
        %2209 = vmatprep.subr.bf16.mxu0 0
        %2210 = vmatpush2.bf16.xpose.msra.mxu0 0
        %2211 = vmatprep.subr.bf16.mxu0 0
        %2212 = vmatpush2.bf16.xpose.msra.mxu0 0
        %2213 = vmatprep.subr.bf16.mxu0 0
        %2214 = vmatpush2.bf16.xpose.msra.mxu0 0
        %2215 = vmatprep.subr.bf16.mxu0 0
        %2216 = vmatpush2.bf16.xpose.msra.mxu0 0
        %2217 = vmatprep.subr.bf16.mxu0 0
        %2218 = vmatpush2.bf16.xpose.msra.mxu0 0
        %2219 = vmatprep.subr.bf16.mxu0 0
        %2220 = vmatpush2.bf16.xpose.msra.mxu0 0
        %2221 = vmatprep.subr.bf16.mxu0 0
        %2222 = vmatpush2.bf16.xpose.msra.mxu0 0
        %2223 = vmatprep.subr.bf16.mxu0 0
        %2224 = vmatpush2.bf16.xpose.msra.mxu0 0
        %2225 = vmatprep.mubr.bf16.mxu0 0
        %2226 = vmatmul.mubr.bf16.gmra.mxu0 %v2188
        %v2227 = vpop.f32.mrf.mxu0
        %v2228 = vadd.f32 %v544, %v2227
        %v2229 = vpop.f32.mrf.mxu0
        %v2230 = vpop.f32.mrf.mxu0
        %v2231 = vpop.f32.mrf.mxu0
        %2232 = vdwg.mxu0
        %v2234 = vsel %vm1004, %v1692, 0
        %v2237 = vsel %vm1004, %v1934, 0
        %2239 = vmatprep.subr.bf16.mxu0 0
        %2240 = vmatpush1.bf16.xpose.msra.mxu0 0
        %2241 = vmatprep.subr.bf16.mxu0 0
        %2242 = vmatpush1.bf16.xpose.msra.mxu0 0
        %2243 = vmatprep.subr.bf16.mxu0 0
        %2244 = vmatpush1.bf16.xpose.msra.mxu0 0
        %2245 = vmatprep.subr.bf16.mxu0 0
        %2246 = vmatpush1.bf16.xpose.msra.mxu0 0
        %2247 = vmatprep.subr.bf16.mxu0 0
        %2248 = vmatpush1.bf16.xpose.msra.mxu0 0
        %2249 = vmatprep.subr.bf16.mxu0 0
        %2250 = vmatpush1.bf16.xpose.msra.mxu0 0
        %2251 = vmatprep.subr.bf16.mxu0 0
        %2252 = vmatpush1.bf16.xpose.msra.mxu0 0
        %2253 = vmatprep.subr.bf16.mxu0 0
        %2254 = vmatpush1.bf16.xpose.msra.mxu0 %v2237
        %2255 = vmatprep.subr.bf16.mxu0 0
        %2256 = vmatpush2.bf16.xpose.msra.mxu0 0
        %2257 = vmatprep.subr.bf16.mxu0 0
        %2258 = vmatpush2.bf16.xpose.msra.mxu0 0
        %2259 = vmatprep.subr.bf16.mxu0 0
        %2260 = vmatpush2.bf16.xpose.msra.mxu0 0
        %2261 = vmatprep.subr.bf16.mxu0 0
        %2262 = vmatpush2.bf16.xpose.msra.mxu0 0
        %2263 = vmatprep.subr.bf16.mxu0 0
        %2264 = vmatpush2.bf16.xpose.msra.mxu0 0
        %2265 = vmatprep.subr.bf16.mxu0 0
        %2266 = vmatpush2.bf16.xpose.msra.mxu0 0
        %2267 = vmatprep.subr.bf16.mxu0 0
        %2268 = vmatpush2.bf16.xpose.msra.mxu0 0
        %2269 = vmatprep.subr.bf16.mxu0 0
        %2270 = vmatpush2.bf16.xpose.msra.mxu0 0
        %2271 = vmatprep.mubr.bf16.mxu0 0
        %2272 = vmatmul.mubr.bf16.gmra.mxu0 %v2234
        %v2273 = vpop.f32.mrf.mxu0
        %v2274 = vadd.f32 %v544, %v2273
        %v2275 = vpop.f32.mrf.mxu0
        %v2276 = vpop.f32.mrf.mxu0
        %v2277 = vpop.f32.mrf.mxu0
        %2278 = vdwg.mxu0
        %v2279 = vsel %vm1004, %v2228, -inf
        %2280 = vmax.xlane.f32.xlu0 %v2279
        %v2281 = vpop.xlane.xlu0 %2280
        %v2282 = vsel %vm1004, %v2274, -inf
        %2283 = vmax.xlane.f32.xlu0 %v2282
        %v2284 = vpop.xlane.xlu0 %2283
        %v2285 = vsub.f32 %v2228, %v2281
        %v2286 = vsub.f32 %v2274, %v2284
        %v2287 = vmul.f32 %v2285, 1.442695
        %v2288 = vpow.pop %v2287
        %v2289 = vmul.f32 %v2286, 1.442695
        %v2290 = vpow.pop %v2289
        %v2291 = vsel %vm1004, %v2288, 0.0
        %2292 = vadd.xlane.f32.xlu0 %v2291
        %v2293 = vpop.xlane.xlu0 %2292
        %v2294 = vsel %vm1004, %v2290, 0.0
        %2295 = vadd.xlane.f32.xlu0 %v2294
        %v2296 = vpop.xlane.xlu0 %2295
        %v2297 = vrcp.pop %v2293
        %v2298 = vrcp.pop %v2296
        %v2299 = vmul.f32 %v2288, %v2297
        %v2300 = vmul.f32 %v2290, %v2298
        %v2301 = vpack.c.bf16 %v2299, %v2299
        %v2302 = vpack.c.bf16 %v2300, %v2300
        %v2304 = vsel %vm1004, %v2301, 0
        %2306 = vmatprep.subr.bf16.mxu0 0
        %2307 = vmatpush1.bf16.msra.mxu0 0
        %2308 = vmatprep.subr.bf16.mxu0 0
        %2309 = vmatpush1.bf16.msra.mxu0 0
        %2310 = vmatprep.subr.bf16.mxu0 0
        %2311 = vmatpush1.bf16.msra.mxu0 0
        %2312 = vmatprep.subr.bf16.mxu0 0
        %2313 = vmatpush1.bf16.msra.mxu0 0
        %2314 = vmatprep.subr.bf16.mxu0 0
        %2315 = vmatpush1.bf16.msra.mxu0 0
        %2316 = vmatprep.subr.bf16.mxu0 0
        %2317 = vmatpush1.bf16.msra.mxu0 0
        %2318 = vmatprep.subr.bf16.mxu0 0
        %2319 = vmatpush1.bf16.msra.mxu0 0
        %2320 = vmatprep.subr.bf16.mxu0 0
        %2321 = vmatpush1.bf16.msra.mxu0 %v2185
        %2322 = vmatprep.subr.bf16.mxu0 0
        %2323 = vmatpush2.bf16.msra.mxu0 0
        %2324 = vmatprep.subr.bf16.mxu0 0
        %2325 = vmatpush2.bf16.msra.mxu0 0
        %2326 = vmatprep.subr.bf16.mxu0 0
        %2327 = vmatpush2.bf16.msra.mxu0 0
        %2328 = vmatprep.subr.bf16.mxu0 0
        %2329 = vmatpush2.bf16.msra.mxu0 0
        %2330 = vmatprep.subr.bf16.mxu0 0
        %2331 = vmatpush2.bf16.msra.mxu0 0
        %2332 = vmatprep.subr.bf16.mxu0 0
        %2333 = vmatpush2.bf16.msra.mxu0 0
        %2334 = vmatprep.subr.bf16.mxu0 0
        %2335 = vmatpush2.bf16.msra.mxu0 0
        %2336 = vmatprep.subr.bf16.mxu0 0
        %2337 = vmatpush2.bf16.msra.mxu0 0
        %2338 = vmatprep.mubr.bf16.mxu0 0
        %2339 = vmatmul.mubr.bf16.gmra.mxu0 %v2304
        %v2340 = vpop.f32.mrf.mxu0
        %v2341 = vadd.f32 0.0, %v2340
        %v2342 = vpop.f32.mrf.mxu0
        %v2343 = vpop.f32.mrf.mxu0
        %v2344 = vpop.f32.mrf.mxu0
        %2345 = vdwg.mxu0
        %v2347 = vsel %vm1004, %v2302, 0
        %2349 = vmatprep.subr.bf16.mxu0 0
        %2350 = vmatpush1.bf16.msra.mxu0 0
        %2351 = vmatprep.subr.bf16.mxu0 0
        %2352 = vmatpush1.bf16.msra.mxu0 0
        %2353 = vmatprep.subr.bf16.mxu0 0
        %2354 = vmatpush1.bf16.msra.mxu0 0
        %2355 = vmatprep.subr.bf16.mxu0 0
        %2356 = vmatpush1.bf16.msra.mxu0 0
        %2357 = vmatprep.subr.bf16.mxu0 0
        %2358 = vmatpush1.bf16.msra.mxu0 0
        %2359 = vmatprep.subr.bf16.mxu0 0
        %2360 = vmatpush1.bf16.msra.mxu0 0
        %2361 = vmatprep.subr.bf16.mxu0 0
        %2362 = vmatpush1.bf16.msra.mxu0 0
        %2363 = vmatprep.subr.bf16.mxu0 0
        %2364 = vmatpush1.bf16.msra.mxu0 %v2186
        %2365 = vmatprep.subr.bf16.mxu0 0
        %2366 = vmatpush2.bf16.msra.mxu0 0
        %2367 = vmatprep.subr.bf16.mxu0 0
        %2368 = vmatpush2.bf16.msra.mxu0 0
        %2369 = vmatprep.subr.bf16.mxu0 0
        %2370 = vmatpush2.bf16.msra.mxu0 0
        %2371 = vmatprep.subr.bf16.mxu0 0
        %2372 = vmatpush2.bf16.msra.mxu0 0
        %2373 = vmatprep.subr.bf16.mxu0 0
        %2374 = vmatpush2.bf16.msra.mxu0 0
        %2375 = vmatprep.subr.bf16.mxu0 0
        %2376 = vmatpush2.bf16.msra.mxu0 0
        %2377 = vmatprep.subr.bf16.mxu0 0
        %2378 = vmatpush2.bf16.msra.mxu0 0
        %2379 = vmatprep.subr.bf16.mxu0 0
        %2380 = vmatpush2.bf16.msra.mxu0 0
        %2381 = vmatprep.mubr.bf16.mxu0 0
        %2382 = vmatmul.mubr.bf16.gmra.mxu0 %v2347
        %v2383 = vpop.f32.mrf.mxu0
        %v2384 = vadd.f32 0.0, %v2383
        %v2385 = vpop.f32.mrf.mxu0
        %v2386 = vpop.f32.mrf.mxu0
        %v2387 = vpop.f32.mrf.mxu0
        %2388 = vdwg.mxu0
        %v2389 = vcombine.high %v2341, 0.0
        %v2391 = vunpack.c.l.s4 1983009808
        %v2392 = vunpack.c.0.s8 %v2391
        %v2393 = vlaneseq
        %v2394 = vshrl.u32 %v2393, 7
        %v2395 = vsub.s32 %v2392, %v2394
        %v2396 = vrot.slane %v2341, %v2395
        %v2398 = vunpack.c.l.s4 1983009808
        %v2399 = vunpack.c.0.s8 %v2398
        %v2400 = vlaneseq
        %v2401 = vshrl.u32 %v2400, 7
        %v2402 = vsub.s32 %v2399, %v2401
        %v2403 = vrot.slane %v2389, %v2402
        %v2404 = vcombine.high %v2384, 0.0
        %v2406 = vunpack.c.l.s4 1983009808
        %v2407 = vunpack.c.0.s8 %v2406
        %v2408 = vlaneseq
        %v2409 = vshrl.u32 %v2408, 7
        %v2410 = vsub.s32 %v2407, %v2409
        %v2411 = vrot.slane %v2384, %v2410
        %v2413 = vunpack.c.l.s4 1983009808
        %v2414 = vunpack.c.0.s8 %v2413
        %v2415 = vlaneseq
        %v2416 = vshrl.u32 %v2415, 7
        %v2417 = vsub.s32 %v2414, %v2416
        %v2418 = vrot.slane %v2404, %v2417
        %v2419 = vcombine.low %v2396, %v2411
        %v2420 = vcombine.high %v2396, %v2411
        %v2422 = vunpack.c.l.s4 1934713408
        %v2423 = vunpack.c.0.s8 %v2422
        %v2424 = vlaneseq
        %v2425 = vshrl.u32 %v2424, 7
        %v2426 = vsub.s32 %v2423, %v2425
        %v2427 = vrot.slane %v2419, %v2426
        %v2429 = vunpack.c.l.s4 1934713408
        %v2430 = vunpack.c.0.s8 %v2429
        %v2431 = vlaneseq
        %v2432 = vshrl.u32 %v2431, 7
        %v2433 = vsub.s32 %v2430, %v2432
        %v2434 = vrot.slane %v2420, %v2433
        %v2435 = vcombine.low %v2403, %v2418
        %v2436 = vcombine.high %v2403, %v2418
        %v2438 = vunpack.c.l.s4 1934713408
        %v2439 = vunpack.c.0.s8 %v2438
        %v2440 = vlaneseq
        %v2441 = vshrl.u32 %v2440, 7
        %v2442 = vsub.s32 %v2439, %v2441
        %v2443 = vrot.slane %v2435, %v2442
        %v2445 = vunpack.c.l.s4 1934713408
        %v2446 = vunpack.c.0.s8 %v2445
        %v2447 = vlaneseq
        %v2448 = vshrl.u32 %v2447, 7
        %v2449 = vsub.s32 %v2446, %v2448
        %v2450 = vrot.slane %v2436, %v2449
        %v2451 = vcombine.high %v2427, 0.0
        %v2452 = vcombine.high %v2434, 0.0
        %v2453 = vcombine.high %v2443, 0.0
        %v2454 = vcombine.high %v2450, 0.0
        %v2455 = vcombine.low %v2427, %v2434
        %v2457 = vunpack.c.l.s4 1983009808
        %v2458 = vunpack.c.0.s8 %v2457
        %v2459 = vlaneseq
        %v2460 = vshrl.u32 %v2459, 7
        %v2461 = vsub.s32 %v2458, %v2460
        %v2462 = vrot.slane %v2455, %v2461
        %v2463 = vcombine.low %v2451, %v2452
        %v2465 = vunpack.c.l.s4 1983009808
        %v2466 = vunpack.c.0.s8 %v2465
        %v2467 = vlaneseq
        %v2468 = vshrl.u32 %v2467, 7
        %v2469 = vsub.s32 %v2466, %v2468
        %v2470 = vrot.slane %v2463, %v2469
        %v2471 = vcombine.low %v2443, %v2450
        %v2473 = vunpack.c.l.s4 1983009808
        %v2474 = vunpack.c.0.s8 %v2473
        %v2475 = vlaneseq
        %v2476 = vshrl.u32 %v2475, 7
        %v2477 = vsub.s32 %v2474, %v2476
        %v2478 = vrot.slane %v2471, %v2477
        %v2479 = vcombine.low %v2453, %v2454
        %v2481 = vunpack.c.l.s4 1983009808
        %v2482 = vunpack.c.0.s8 %v2481
        %v2483 = vlaneseq
        %v2484 = vshrl.u32 %v2483, 7
        %v2485 = vsub.s32 %v2482, %v2484
        %v2486 = vrot.slane %v2479, %v2485
        %v2487 = vcombine.low %v2462, %v2470
        %v2489 = vunpack.c.l.s4 1934713408
        %v2490 = vunpack.c.0.s8 %v2489
        %v2491 = vlaneseq
        %v2492 = vshrl.u32 %v2491, 7
        %v2493 = vsub.s32 %v2490, %v2492
        %v2494 = vrot.slane %v2487, %v2493
        %v2495 = vcombine.low %v2478, %v2486
        %v2497 = vunpack.c.l.s4 1934713408
        %v2498 = vunpack.c.0.s8 %v2497
        %v2499 = vlaneseq
        %v2500 = vshrl.u32 %v2499, 7
        %v2501 = vsub.s32 %v2498, %v2500
        %v2502 = vrot.slane %v2495, %v2501
        %v2503 = vcombine.low %v2494, %v2502
        %v2504 = vcombine.high %v2494, %v2502
        %2506 = vrot.lane.b32.xlu0 %v2504, 16
        %v2507 = vpop.permute.xlu0 %2506
        %v2509 = vsel %vm1004, %v2503, %v2507
        %v2510 = vpack.c.bf16 %v2509, %v2509
        %v2511 = vld [vmem:[#allocation8] sm:$0xf]
        %v2512 = vld [vmem:[#allocation8 + $0x4] sm:$0xf]
        %v2513 = vld [vmem:[#allocation8 + $0x8] sm:$0xf]
        %v2514 = vld [vmem:[#allocation8 + $0xc] sm:$0xf]
        %v2515 = vlaneseq
        %v2516 = vshrl.u32 %v2515, 7
        %v2517 = vsub.s32 1, %v2516
        %v2518 = vrot.slane %v525, %v2517
        %v2523 = vunpack.c.l.b16 %v2511
        %v2524 = vunpack.c.l.b16 %v2512
        %v2525 = vunpack.c.l.b16 %v2513
        %v2526 = vunpack.c.l.b16 %v2514
        %v2527 = vpack.c.b16 %v2524, %v2523
        %v2528 = vpack.c.b16 %v2526, %v2525
        %v2532 = vsel %vm561, %v2510, 0
        %2534 = vmatprep.subr.bf16.mxu0 0
        %2535 = vmatpush1.bf16.msra.mxu0 0
        %2536 = vmatprep.subr.bf16.mxu0 0
        %2537 = vmatpush1.bf16.msra.mxu0 0
        %2538 = vmatprep.subr.bf16.mxu0 0
        %2539 = vmatpush1.bf16.msra.mxu0 0
        %2540 = vmatprep.subr.bf16.mxu0 0
        %2541 = vmatpush1.bf16.msra.mxu0 0
        %2542 = vmatprep.subr.bf16.mxu0 0
        %2543 = vmatpush1.bf16.msra.mxu0 0
        %2544 = vmatprep.subr.bf16.mxu0 0
        %2545 = vmatpush1.bf16.msra.mxu0 0
        %2546 = vmatprep.subr.bf16.mxu0 0
        %2547 = vmatpush1.bf16.msra.mxu0 %v2528
        %2548 = vmatprep.subr.bf16.mxu0 0
        %2549 = vmatpush1.bf16.msra.mxu0 %v2527
        %2550 = vmatprep.subr.bf16.mxu0 0
        %2551 = vmatpush2.bf16.msra.mxu0 0
        %2552 = vmatprep.subr.bf16.mxu0 0
        %2553 = vmatpush2.bf16.msra.mxu0 0
        %2554 = vmatprep.subr.bf16.mxu0 0
        %2555 = vmatpush2.bf16.msra.mxu0 0
        %2556 = vmatprep.subr.bf16.mxu0 0
        %2557 = vmatpush2.bf16.msra.mxu0 0
        %2558 = vmatprep.subr.bf16.mxu0 0
        %2559 = vmatpush2.bf16.msra.mxu0 0
        %2560 = vmatprep.subr.bf16.mxu0 0
        %2561 = vmatpush2.bf16.msra.mxu0 0
        %2562 = vmatprep.subr.bf16.mxu0 0
        %2563 = vmatpush2.bf16.msra.mxu0 0
        %2564 = vmatprep.subr.bf16.mxu0 0
        %2565 = vmatpush2.bf16.msra.mxu0 0
        %2566 = vmatprep.mubr.bf16.mxu0 0
        %2567 = vmatmul.mubr.bf16.gmra.mxu0 %v2532
        %v2568 = vpop.f32.mrf.mxu0
        %v2569 = vadd.f32 %v2518, %v2568
        %v2570 = vpop.f32.mrf.mxu0
        %v2571 = vpop.f32.mrf.mxu0
        %v2572 = vpop.f32.mrf.mxu0
        %2573 = vdwg.mxu0
        %v2574 = vadd.f32 %v2569, %v1425
        %v2575 = vsel %vm561, %v2574, 0.0
        %2576 = vadd.xlane.f32.xlu0 %v2575
        %v2577 = vpop.xlane.xlu0 %2576
        %v2578 = vmul.f32 %v2577, %v1404
        %v2579 = vsub.f32 %v2574, %v2578
        %v2580 = vmul.f32 %v2579, %v2579
        %v2581 = vsel %vm561, %v2580, 0.0
        %2582 = vadd.xlane.f32.xlu0 %v2581
        %v2583 = vpop.xlane.xlu0 %2582
        %v2584 = vmul.f32 %v2583, %v1404
        %v2585 = vadd.f32 %v2584, 1e-05
        %v2586 = vrsqrt.pop %v2585
        %v2587 = vmul.f32 %v2579, %v2586
        %v2588 = vlaneseq
        %v2589 = vshrl.u32 %v2588, 7
        %v2590 = vsub.s32 2, %v2589
        %v2591 = vrot.slane %v525, %v2590
        %v2592 = vmul.f32 %v2587, %v2591
        %v2593 = vlaneseq
        %v2594 = vshrl.u32 %v2593, 7
        %v2595 = vsub.s32 3, %v2594
        %v2596 = vrot.slane %v525, %v2595
        %v2597 = vadd.f32 %v2592, %v2596
        %v2598 = vmul.f32 %v2597, %v535
        %v2599 = vpack.c.bf16 %v2598, %v2598
        %v2600 = vld [vmem:[#allocation10] sm:$0xf]
        %v2601 = vld [vmem:[#allocation10 + $0x4] sm:$0xf]
        %v2602 = vld [vmem:[#allocation10 + $0x8] sm:$0xf]
        %v2603 = vld [vmem:[#allocation10 + $0xc] sm:$0xf]
        %v2604 = vlaneseq
        %v2605 = vshrl.u32 %v2604, 7
        %v2606 = vsub.s32 4, %v2605
        %v2607 = vrot.slane %v525, %v2606
        %v2612 = vunpack.c.l.b16 %v2600
        %v2613 = vunpack.c.l.b16 %v2601
        %v2614 = vunpack.c.l.b16 %v2602
        %v2615 = vunpack.c.l.b16 %v2603
        %v2616 = vpack.c.b16 %v2613, %v2612
        %v2617 = vpack.c.b16 %v2615, %v2614
        %v2621 = vsel %vm561, %v2599, 0
        %2623 = vmatprep.subr.bf16.mxu0 0
        %2624 = vmatpush1.bf16.msra.mxu0 0
        %2625 = vmatprep.subr.bf16.mxu0 0
        %2626 = vmatpush1.bf16.msra.mxu0 0
        %2627 = vmatprep.subr.bf16.mxu0 0
        %2628 = vmatpush1.bf16.msra.mxu0 0
        %2629 = vmatprep.subr.bf16.mxu0 0
        %2630 = vmatpush1.bf16.msra.mxu0 0
        %2631 = vmatprep.subr.bf16.mxu0 0
        %2632 = vmatpush1.bf16.msra.mxu0 0
        %2633 = vmatprep.subr.bf16.mxu0 0
        %2634 = vmatpush1.bf16.msra.mxu0 0
        %2635 = vmatprep.subr.bf16.mxu0 0
        %2636 = vmatpush1.bf16.msra.mxu0 %v2617
        %2637 = vmatprep.subr.bf16.mxu0 0
        %2638 = vmatpush1.bf16.msra.mxu0 %v2616
        %2639 = vmatprep.subr.bf16.mxu0 0
        %2640 = vmatpush2.bf16.msra.mxu0 0
        %2641 = vmatprep.subr.bf16.mxu0 0
        %2642 = vmatpush2.bf16.msra.mxu0 0
        %2643 = vmatprep.subr.bf16.mxu0 0
        %2644 = vmatpush2.bf16.msra.mxu0 0
        %2645 = vmatprep.subr.bf16.mxu0 0
        %2646 = vmatpush2.bf16.msra.mxu0 0
        %2647 = vmatprep.subr.bf16.mxu0 0
        %2648 = vmatpush2.bf16.msra.mxu0 0
        %2649 = vmatprep.subr.bf16.mxu0 0
        %2650 = vmatpush2.bf16.msra.mxu0 0
        %2651 = vmatprep.subr.bf16.mxu0 0
        %2652 = vmatpush2.bf16.msra.mxu0 0
        %2653 = vmatprep.subr.bf16.mxu0 0
        %2654 = vmatpush2.bf16.msra.mxu0 0
        %2655 = vmatprep.mubr.bf16.mxu0 0
        %2656 = vmatmul.mubr.bf16.gmra.mxu0 %v2621
        %v2657 = vpop.f32.mrf.mxu0
        %v2658 = vadd.f32 %v2607, %v2657
        %v2659 = vpop.f32.mrf.mxu0
        %v2660 = vpop.f32.mrf.mxu0
        %v2661 = vpop.f32.mrf.mxu0
        %2662 = vdwg.mxu0
        %v2663 = vmax.f32 %v2658, 0.0
        %v2664 = vpack.c.bf16 %v2663, %v2663
        %v2665 = vld [vmem:[%s10] sm:$0xf]
        %v2666 = vld [vmem:[%s10 + $0x4] sm:$0xf]
        %v2667 = vld [vmem:[%s10 + $0x8] sm:$0xf]
        %v2668 = vld [vmem:[%s10 + $0xc] sm:$0xf]
        %v2669 = vld [vmem:[%s10 + $0x10] sm:$0xf]
        %v2670 = vld [vmem:[%s10 + $0x14] sm:$0xf]
        %v2671 = vld [vmem:[%s10 + $0x18] sm:$0xf]
        %v2672 = vld [vmem:[%s10 + $0x1c] sm:$0xf]
        %v2673 = vld [vmem:[%s10 + $0x20] sm:$0xf]
        %v2674 = vld [vmem:[%s10 + $0x24] sm:$0xf]
        %v2675 = vld [vmem:[%s10 + $0x28] sm:$0xf]
        %v2676 = vld [vmem:[%s10 + $0x2c] sm:$0xf]
        %v2677 = vld [vmem:[%s10 + $0x30] sm:$0xf]
        %v2678 = vld [vmem:[%s10 + $0x34] sm:$0xf]
        %v2679 = vld [vmem:[%s10 + $0x38] sm:$0xf]
        %v2680 = vld [vmem:[%s10 + $0x3c] sm:$0xf]
        %v2681 = vlaneseq
        %v2682 = vshrl.u32 %v2681, 7
        %v2683 = vsub.s32 5, %v2682
        %v2684 = vrot.slane %v525, %v2683
        %v2701 = vunpack.c.l.b16 %v2665
        %v2702 = vunpack.c.l.b16 %v2666
        %v2703 = vunpack.c.l.b16 %v2667
        %v2704 = vunpack.c.l.b16 %v2668
        %v2705 = vunpack.c.l.b16 %v2669
        %v2706 = vunpack.c.l.b16 %v2670
        %v2707 = vunpack.c.l.b16 %v2671
        %v2708 = vunpack.c.l.b16 %v2672
        %v2709 = vunpack.c.l.b16 %v2673
        %v2710 = vunpack.c.l.b16 %v2674
        %v2711 = vunpack.c.l.b16 %v2675
        %v2712 = vunpack.c.l.b16 %v2676
        %v2713 = vunpack.c.l.b16 %v2677
        %v2714 = vunpack.c.l.b16 %v2678
        %v2715 = vunpack.c.l.b16 %v2679
        %v2716 = vunpack.c.l.b16 %v2680
        %v2717 = vpack.c.b16 %v2702, %v2701
        %v2718 = vpack.c.b16 %v2704, %v2703
        %v2719 = vpack.c.b16 %v2706, %v2705
        %v2720 = vpack.c.b16 %v2708, %v2707
        %v2721 = vpack.c.b16 %v2710, %v2709
        %v2722 = vpack.c.b16 %v2712, %v2711
        %v2723 = vpack.c.b16 %v2714, %v2713
        %v2724 = vpack.c.b16 %v2716, %v2715
        %2733 = vmatprep.subr.bf16.mxu0 0
        %2734 = vmatpush1.bf16.msra.mxu0 %v2724
        %2735 = vmatprep.subr.bf16.mxu0 0
        %2736 = vmatpush1.bf16.msra.mxu0 %v2723
        %2737 = vmatprep.subr.bf16.mxu0 0
        %2738 = vmatpush1.bf16.msra.mxu0 %v2722
        %2739 = vmatprep.subr.bf16.mxu0 0
        %2740 = vmatpush1.bf16.msra.mxu0 %v2721
        %2741 = vmatprep.subr.bf16.mxu0 0
        %2742 = vmatpush1.bf16.msra.mxu0 %v2720
        %2743 = vmatprep.subr.bf16.mxu0 0
        %2744 = vmatpush1.bf16.msra.mxu0 %v2719
        %2745 = vmatprep.subr.bf16.mxu0 0
        %2746 = vmatpush1.bf16.msra.mxu0 %v2718
        %2747 = vmatprep.subr.bf16.mxu0 0
        %2748 = vmatpush1.bf16.msra.mxu0 %v2717
        %2749 = vmatprep.subr.bf16.mxu0 0
        %2750 = vmatpush2.bf16.msra.mxu0 0
        %2751 = vmatprep.subr.bf16.mxu0 0
        %2752 = vmatpush2.bf16.msra.mxu0 0
        %2753 = vmatprep.subr.bf16.mxu0 0
        %2754 = vmatpush2.bf16.msra.mxu0 0
        %2755 = vmatprep.subr.bf16.mxu0 0
        %2756 = vmatpush2.bf16.msra.mxu0 0
        %2757 = vmatprep.subr.bf16.mxu0 0
        %2758 = vmatpush2.bf16.msra.mxu0 0
        %2759 = vmatprep.subr.bf16.mxu0 0
        %2760 = vmatpush2.bf16.msra.mxu0 0
        %2761 = vmatprep.subr.bf16.mxu0 0
        %2762 = vmatpush2.bf16.msra.mxu0 0
        %2763 = vmatprep.subr.bf16.mxu0 0
        %2764 = vmatpush2.bf16.msra.mxu0 0
        %2765 = vmatprep.mubr.bf16.mxu0 0
        %2766 = vmatmul.mubr.bf16.gmra.mxu0 %v2664
        %v2767 = vpop.f32.mrf.mxu0
        %v2768 = vadd.f32 %v2684, %v2767
        %v2769 = vpop.f32.mrf.mxu0
        %v2770 = vpop.f32.mrf.mxu0
        %v2771 = vpop.f32.mrf.mxu0
        %2772 = vdwg.mxu0
        %v2773 = vadd.f32 %v2768, %v2598
        %v2774 = vsel %vm561, %v2773, 0.0
        %2775 = vadd.xlane.f32.xlu0 %v2774
        %v2776 = vpop.xlane.xlu0 %2775
        %v2777 = vmul.f32 %v2776, %v1404
        %v2778 = vsub.f32 %v2773, %v2777
        %v2779 = vmul.f32 %v2778, %v2778
        %v2780 = vsel %vm561, %v2779, 0.0
        %2781 = vadd.xlane.f32.xlu0 %v2780
        %v2782 = vpop.xlane.xlu0 %2781
        %v2783 = vmul.f32 %v2782, %v1404
        %v2784 = vadd.f32 %v2783, 1e-05
        %v2785 = vrsqrt.pop %v2784
        %v2786 = vmul.f32 %v2778, %v2785
        %v2787 = vlaneseq
        %v2788 = vshrl.u32 %v2787, 7
        %v2789 = vsub.s32 6, %v2788
        %v2790 = vrot.slane %v525, %v2789
        %v2791 = vmul.f32 %v2786, %v2790
        %v2792 = vlaneseq
        %v2793 = vshrl.u32 %v2792, 7
        %v2794 = vsub.s32 7, %v2793
        %v2795 = vrot.slane %v525, %v2794
        %v2796 = vadd.f32 %v2791, %v2795
        %v2797 = vmul.f32 %v2796, %v535
        %2798 = vst.msk [vmem:[%s501] sm:$0xff] %vm561, %v2797
        %vm2799 = vcmask 60416
        %2800 = vst.msk [vmem:[%s508] sm:$0xf] %vm2799, %v1120
        %2801 = vst.msk [vmem:[%s508 + $0x4] sm:$0xf] %vm2799, %v1121
        %vm2802 = vcmask 125952
        %2803 = vst.msk [vmem:[%s515] sm:$0xf] %vm2802, %v2301
        %2804 = vst.msk [vmem:[%s515 + $0x4] sm:$0xf] %vm2802, %v2302
        %s2805 = sand.u32 %s273, 1
        %s2806 = scalar_lea.sflag [#allocation7], %s2805
        %s2807 = sand.u32 %s273, 1
        %s2808 = smul.addr %s2807, 8
        %s2809 = scalar_lea.vmem [#allocation13], %s2808
        %s2810 = sand.u32 %s45, 1
        %s2811 = scalar_lea.sflag [#allocation15], %s2810
        %s2812 = sand.u32 %s299, 1
        %s2813 = smul.addr %s2812, 8
        %s2814 = scalar_lea.vmem [#allocation14], %s2813
        %s2815 = sand.u32 %s45, 1
        %s2816 = scalar_lea.sflag [#allocation15], %s2815
        %s2817 = sand.u32 %s325, 1
        %s2818 = smul.addr %s2817, 8
        %s2819 = scalar_lea.vmem [#allocation16], %s2818
        // Predicated region
        $region77: #{tpu_custom_call.1} parent=59 // pred_check
          %p2820 = pneg %p283
        $region78: #{tpu_custom_call.1} parent=59 // pred_check_branch
          %2822 = sbr.rel (%p2820) target = $region80
        $region79: #{tpu_custom_call.1} parent=59 // pred_region
          %s2824 = ssub.s32 128, 128
          %2825 = vsyncadd %s2806, %s2824
          %s2826 = smul.addr %s45, 128
          %s2827 = scalar_lea.hbm %s12, %s2826
          %s2829 = sshll.u32 %s2809, 4
          %s2830 = int_to_ptr.vmem [resolvable:$true] %s2829
          %2832 = dma.vmem_to_hbm [thread:$0]  %s2830, 128, %s2827, %s2806
        $region80: #{tpu_custom_call.1} parent=59 // pred_fallthru
          _
        // Predicated region
        $region81: #{tpu_custom_call.1} parent=59 // pred_check
          %p2833 = pneg %p309
        $region82: #{tpu_custom_call.1} parent=59 // pred_check_branch
          %2835 = sbr.rel (%p2833) target = $region84
        $region83: #{tpu_custom_call.1} parent=59 // pred_region
          %s2837 = ssub.s32 128, 128
          %2838 = vsyncadd %s2811, %s2837
          %s2839 = smul.addr %s45, 64
          %s2840 = scalar_lea.hbm %s13, %s2839
          %s2841 = sshll.u32 %s2814, 4
          %s2842 = int_to_ptr.vmem [resolvable:$true] %s2841
          %2847 = dma.vmem_to_hbm [thread:$0]  %s2842, 128, %s2840, %s2811, 64, 128, 4
        $region84: #{tpu_custom_call.1} parent=59 // pred_fallthru
          _
        // Predicated region
        $region85: #{tpu_custom_call.1} parent=59 // pred_check
          %p2848 = pneg %p335
        $region86: #{tpu_custom_call.1} parent=59 // pred_check_branch
          %2850 = sbr.rel (%p2848) target = $region88
        $region87: #{tpu_custom_call.1} parent=59 // pred_region
          %s2852 = ssub.s32 128, 128
          %2853 = vsyncadd %s2816, %s2852
          %s2854 = smul.addr %s45, 64
          %s2855 = scalar_lea.hbm %s14, %s2854
          %s2856 = sshll.u32 %s2819, 4
          %s2857 = int_to_ptr.vmem [resolvable:$true] %s2856
          %2862 = dma.vmem_to_hbm [thread:$0]  %s2857, 128, %s2855, %s2816, 64, 128, 4
        $region88: #{tpu_custom_call.1} parent=59 // pred_fallthru
          _
      $region60: #{tpu_custom_call.1} parent=5 // pred_fallthru
        _
      %p2863 = scmp.le.s32.totalorder 2, %s40
      // Predicated region
      $region89: #{tpu_custom_call.1} parent=5 // pred_check
        %p2864 = pneg %p2863
      $region90: #{tpu_custom_call.1} parent=5 // pred_check_branch
        %2866 = sbr.rel (%p2864) target = $region92
      $region91: #{tpu_custom_call.1} parent=5 // pred_region
        %s2867 = ssub.s32 %s40, 2
        // Predicated region
        $region93: #{tpu_custom_call.1} parent=91 // pred_check
          %p2868 = pneg %p289
        $region94: #{tpu_custom_call.1} parent=91 // pred_check_branch
          %2870 = sbr.rel (%p2868) target = $region96
        $region95: #{tpu_custom_call.1} parent=91 // pred_region
          %s2871 = sand.u32 %s274, 1
          %s2872 = scalar_lea.sflag [#allocation7], %s2871
          %s2873 = sand.u32 %s274, 1
          %s2874 = smul.addr %s2873, 8
          %s2875 = scalar_lea.vmem [#allocation13], %s2874
          %2876 = dma.done %s2872, 128
        $region96: #{tpu_custom_call.1} parent=91 // pred_fallthru
          _
        // Predicated region
        $region97: #{tpu_custom_call.1} parent=91 // pred_check
          %p2877 = pneg %p315
        $region98: #{tpu_custom_call.1} parent=91 // pred_check_branch
          %2879 = sbr.rel (%p2877) target = $region100
        $region99: #{tpu_custom_call.1} parent=91 // pred_region
          %s2880 = sand.u32 %s46, 1
          %s2881 = scalar_lea.sflag [#allocation15], %s2880
          %s2882 = sand.u32 %s300, 1
          %s2883 = smul.addr %s2882, 8
          %s2884 = scalar_lea.vmem [#allocation14], %s2883
          %2885 = dma.done %s2881, 128
        $region100: #{tpu_custom_call.1} parent=91 // pred_fallthru
          _
        // Predicated region
        $region101: #{tpu_custom_call.1} parent=91 // pred_check
          %p2886 = pneg %p341
        $region102: #{tpu_custom_call.1} parent=91 // pred_check_branch
          %2888 = sbr.rel (%p2886) target = $region104
        $region103: #{tpu_custom_call.1} parent=91 // pred_region
          %s2889 = sand.u32 %s46, 1
          %s2890 = scalar_lea.sflag [#allocation15], %s2889
          %s2891 = sand.u32 %s326, 1
          %s2892 = smul.addr %s2891, 8
          %s2893 = scalar_lea.vmem [#allocation16], %s2892
          %2894 = dma.done %s2890, 128
        $region104: #{tpu_custom_call.1} parent=91 // pred_fallthru
          _
      $region92: #{tpu_custom_call.1} parent=5 // pred_fallthru
        _
    $region6: #{tpu_custom_call.1} parent=1 // loop_footer
      %s44 = sadd.s32 1, %s40
    $region7: #{tpu_custom_call.1} parent=1 // loop_footer_branch
      %39 = sbr.rel target = $region3
    $region8: #{tpu_custom_call.1} parent=1 // loop_exit
      _
    %2895 = vsyncpa [#allocation6], 1
    %s2896 = scalar_lea.sflag [#allocation6], 1
    %2897 = vsyncpa %s2896, 1
    %2898 = vsyncpa [#allocation9], 1
    %2899 = vsyncpa [#allocation12], 1
    %2900 = vsyncpa [#allocation7], 1
    %s2901 = scalar_lea.sflag [#allocation7], 1
    %2902 = vsyncpa %s2901, 1
    %2903 = vsyncpa [#allocation15], 1
    %s2904 = scalar_lea.sflag [#allocation15], 1
    %2905 = vsyncpa %s2904, 1

</llo_original>
